<compile_context>
chip_gen: v5e
topology: v5e:2x2
jax: 0.10.0
libtpu: 0.0.40
codegen_flags: <defaults>
</compile_context>

<pallas_src>
import math
import numpy as np
import jax
import jax.numpy as jnp
from jax.experimental import pallas as pl
from jax.experimental.pallas import tpu as pltpu

CNN_CHANNELS = 128
TRANS_CHANNELS = 80
POOLING_SIZE = 7
HEADS = 8
HEAD_DIM = TRANS_CHANNELS // HEADS

N_TOKENS = POOLING_SIZE * POOLING_SIZE   # 49 pooled tokens per batch
TP = 128                                  # per-batch token columns (padded, lane-group aligned)


# ----------------------------- exact pooling / upsampling operators -----------------------------

def _adaptive_pool_matrix(in_size, out_size):
    """Exact F.adaptive_avg_pool2d bin-averaging matrix, shape (out, in)."""
    P = np.zeros((out_size, in_size), np.float32)
    for i in range(out_size):
        start = (i * in_size) // out_size
        end = -(-((i + 1) * in_size) // out_size)  # ceil
        P[i, start:end] = 1.0 / (end - start)
    return P


def _bilinear_matrix(in_size, out_size):
    """Exact F.interpolate(mode='bilinear', align_corners=True) matrix, shape (out, in)."""
    A = np.zeros((out_size, in_size), np.float32)
    for y in range(out_size):
        src = 0.0 if out_size == 1 else y * (in_size - 1) / (out_size - 1)
        lo = int(math.floor(src))
        hi = min(lo + 1, in_size - 1)
        w = src - lo
        A[y, lo] += 1.0 - w
        A[y, hi] += w
    return A


# ----------------------------- the Pallas kernel -----------------------------

def linear_sra_kernel(xc_ref, xt_ref, kct_ref, ktt_ref,
                      wqk_ref, bqk_ref, wv_ref, bv_ref,
                      wo_ref, bo_ref, wup_ref, bup_ref,
                      seT_ref, es_ref, uct_ref, utt_ref,
                      cnn_out_ref, trans_out_ref,
                      pc_s, pt_s, qk2_s, v2_s, pair_s, w_s, o_s, attn_s, pre_s):
    f32 = jnp.float32
    bf16 = jnp.bfloat16
    E = TRANS_CHANNELS
    B = xc_ref.shape[0] // CNN_CHANNELS

    # ---- 1. adaptive average pooling; batches land on lane blocks of the slabs ----
    for b in range(B):
        pc_s[:, b * TP:(b + 1) * TP] = jnp.dot(
            xc_ref[b * CNN_CHANNELS:(b + 1) * CNN_CHANNELS, :], kct_ref[...],
            preferred_element_type=f32).astype(bf16)
        pt_s[:, b * TP:(b + 1) * TP] = jnp.dot(
            xt_ref[b * E:(b + 1) * E, :], ktt_ref[...],
            preferred_element_type=f32).astype(bf16)

    # ---- 2. fused projections (to_query/to_key/to_value folded into in_proj) ------
    # wqk is the row-stacked composed [Wq_in@Wq*scale ; Wk_in@Wk]; one matmul gives q2;k2.
    qk2_s[...] = jnp.dot(wqk_ref[...], pc_s[...], preferred_element_type=f32) + bqk_ref[...]
    v2_s[...] = jnp.dot(wv_ref[...], pt_s[...], preferred_element_type=f32) + bv_ref[...]

    # ---- 3. pairwise q*k products (attention over the batch axis, torch seq-first) -
    for b1 in range(B):
        qb = qk2_s[0:E, b1 * TP:(b1 + 1) * TP]
        for b2 in range(B):
            p = b1 * B + b2
            kb = qk2_s[E:2 * E, b2 * TP:(b2 + 1) * TP]
            pair_s[:, p * TP:(p + 1) * TP] = (qb * kb).astype(bf16)

    # per-head reduction for every (b1, b2) pair in a single MXU call
    scores = jnp.dot(seT_ref[...], pair_s[...], preferred_element_type=f32)   # (H, B*B*TP)

    # ---- 4. softmax over b2, per (b1, head, token); written straight to scratch ----
    for b1 in range(B):
        s_list = [scores[:, (b1 * B + b2) * TP:(b1 * B + b2 + 1) * TP] for b2 in range(B)]
        m = s_list[0]
        for s in s_list[1:]:
            m = jnp.maximum(m, s)
        e_list = [jnp.exp(s - m) for s in s_list]
        den = e_list[0]
        for e in e_list[1:]:
            den = den + e
        inv = pl.reciprocal(den, approx=True)   # EUP; flip to approx=False for exact division
        for b2 in range(B):
            w_s[:, (b1 * B + b2) * TP:(b1 * B + b2 + 1) * TP] = (e_list[b2] * inv).astype(bf16)

    # ---- 5. broadcast per-head weights back to channels (reuse pair_s), apply to v --
    pair_s[...] = jnp.dot(es_ref[...], w_s[...], preferred_element_type=f32).astype(bf16)
    for b1 in range(B):
        acc = pair_s[:, (b1 * B) * TP:(b1 * B + 1) * TP].astype(f32) * v2_s[:, 0:TP]
        for b2 in range(1, B):
            p = b1 * B + b2
            acc = acc + pair_s[:, p * TP:(p + 1) * TP].astype(f32) * v2_s[:, b2 * TP:(b2 + 1) * TP]
        o_s[:, b1 * TP:(b1 + 1) * TP] = acc.astype(bf16)

    # ---- 6. MHA out_proj and up_cnn linear -----------------------------------------
    attn_s[...] = (jnp.dot(wo_ref[...], o_s[...], preferred_element_type=f32)
                   + bo_ref[...]).astype(bf16)
    pre_s[...] = (jnp.dot(wup_ref[...], attn_s[...], preferred_element_type=f32)
                  + bup_ref[...]).astype(bf16)

    # ---- 7. bilinear upsample (align_corners=True) straight into NCHW layout --------
    for b in range(B):
        cnn_out_ref[b * CNN_CHANNELS:(b + 1) * CNN_CHANNELS, :] = jnp.dot(
            pre_s[:, b * TP:(b + 1) * TP], uct_ref[...], preferred_element_type=f32)
        trans_out_ref[b * E:(b + 1) * E, :] = jnp.dot(
            attn_s[:, b * TP:(b + 1) * TP], utt_ref[...], preferred_element_type=f32)


# ----------------------------- host-side operator construction (done once) -----------------------------

def _build_operators_np(params, Hc, Wc, Ht, Wt):
    p = {k: np.asarray(v, np.float32) for k, v in params.items()}
    scale = 1.0 / math.sqrt(HEAD_DIM)

    # fold to_query/to_key/to_value into the MHA in_proj; fold the 1/sqrt(head_dim) scale
    Wq = (p["wiq"] @ p["wq"]) * scale                      # (80, 128)
    bq = (p["wiq"] @ p["bq"] + p["biq"]) * scale           # (80,)
    Wk = p["wik"] @ p["wk"]
    bk = p["wik"] @ p["bk"] + p["bik"]
    Wv = p["wiv"] @ p["wv"]                                # (80, 80)
    bv = p["wiv"] @ p["bv"] + p["biv"]

    wqk = np.concatenate([Wq, Wk], axis=0)                 # (160, 128)
    bqk = np.concatenate([bq, bk], axis=0).reshape(-1, 1)  # (160, 1)

    # exact pooling / upsampling operators; token axis zero-padded 49 -> TP per batch
    KcT = np.zeros((Hc * Wc, TP), np.float32)
    KcT[:, :N_TOKENS] = np.kron(_adaptive_pool_matrix(Hc, POOLING_SIZE),
                                _adaptive_pool_matrix(Wc, POOLING_SIZE)).T
    KtT = np.zeros((Ht * Wt, TP), np.float32)
    KtT[:, :N_TOKENS] = np.kron(_adaptive_pool_matrix(Ht, POOLING_SIZE),
                                _adaptive_pool_matrix(Wt, POOLING_SIZE)).T
    UcT = np.zeros((TP, Hc * Wc), np.float32)
    UcT[:N_TOKENS, :] = np.kron(_bilinear_matrix(POOLING_SIZE, Hc),
                                _bilinear_matrix(POOLING_SIZE, Wc)).T
    UtT = np.zeros((TP, Ht * Wt), np.float32)
    UtT[:N_TOKENS, :] = np.kron(_bilinear_matrix(POOLING_SIZE, Ht),
                                _bilinear_matrix(POOLING_SIZE, Wt)).T

    # per-head sum / broadcast operators (natural size, shared by all (b1,b2) pairs)
    seT = np.zeros((HEADS, TRANS_CHANNELS), np.float32)
    for e in range(TRANS_CHANNELS):
        seT[e // HEAD_DIM, e] = 1.0

    return dict(
        kct=KcT, ktt=KtT,
        wqk=wqk, bqk=bqk,
        wv=Wv, bv=bv.reshape(-1, 1),
        wo=p["wo"], bo=p["bo"].reshape(-1, 1),
        wup=p["wup"], bup=p["bup"].reshape(-1, 1),
        seT=seT, es=seT.T,
        uct=UcT, utt=UtT,
    )


def make_linear_sra_forward(params, B, Hc, Wc, Ht, Wt):
    """Precompute/upload all constants once and return a jitted forward fn."""
    ops_np = _build_operators_np(params, Hc, Wc, Ht, Wt)
    bf16_keys = {"kct", "ktt", "wqk", "wv", "wo", "wup", "seT", "es", "uct", "utt"}
    ops = {k: jnp.asarray(v, jnp.bfloat16 if k in bf16_keys else jnp.float32)
           for k, v in ops_np.items()}

    vmem = pl.BlockSpec(memory_space=pltpu.MemorySpace.VMEM)
    n_inputs = 16
    call = pl.pallas_call(
        linear_sra_kernel,
        out_shape=(
            jax.ShapeDtypeStruct((B * CNN_CHANNELS, Hc * Wc), jnp.float32),
            jax.ShapeDtypeStruct((B * TRANS_CHANNELS, Ht * Wt), jnp.float32),
        ),
        in_specs=[vmem] * n_inputs,
        out_specs=(vmem, vmem),
        scratch_shapes=[
            pltpu.VMEM((CNN_CHANNELS, B * TP), jnp.bfloat16),        # pooled cnn
            pltpu.VMEM((TRANS_CHANNELS, B * TP), jnp.bfloat16),      # pooled trans
            pltpu.VMEM((2 * TRANS_CHANNELS, B * TP), jnp.float32),   # q2 ; k2
            pltpu.VMEM((TRANS_CHANNELS, B * TP), jnp.float32),       # v2
            pltpu.VMEM((TRANS_CHANNELS, B * B * TP), jnp.bfloat16),  # q*k pairs / expanded weights
            pltpu.VMEM((HEADS, B * B * TP), jnp.bfloat16),           # softmax weights
            pltpu.VMEM((TRANS_CHANNELS, B * TP), jnp.bfloat16),      # attention output
            pltpu.VMEM((TRANS_CHANNELS, B * TP), jnp.bfloat16),      # after out_proj
            pltpu.VMEM((CNN_CHANNELS, B * TP), jnp.bfloat16),        # after up_cnn
        ],
        compiler_params=pltpu.CompilerParams(vmem_limit_bytes=8 * 1024 * 1024),
    )

    @jax.jit
    def forward(x_cnn, x_trans):
        # NCHW -> (B*C, H*W): pure reshape, no transpose (kernel is channel-major)
        xc = x_cnn.reshape(B * CNN_CHANNELS, Hc * Wc).astype(jnp.bfloat16)
        xt = x_trans.reshape(B * TRANS_CHANNELS, Ht * Wt).astype(jnp.bfloat16)
        cnn_flat, trans_flat = call(
            xc, xt, ops["kct"], ops["ktt"],
            ops["wqk"], ops["bqk"], ops["wv"], ops["bv"],
            ops["wo"], ops["bo"], ops["wup"], ops["bup"],
            ops["seT"], ops["es"], ops["uct"], ops["utt"])
        cnn_result = cnn_flat.reshape(B, CNN_CHANNELS, Hc, Wc)
        trans_result = trans_flat.reshape(B, TRANS_CHANNELS, Ht, Wt)
        return cnn_result, trans_result

    return forward


# ----------------------------- parameter init (mirrors the nn.Module) -----------------------------

def init_params(key):
    def lin(k, out_f, in_f):
        kw, kb = jax.random.split(k)
        bound = 1.0 / math.sqrt(in_f)
        W = jax.random.uniform(kw, (out_f, in_f), jnp.float32, -bound, bound)
        b = jax.random.uniform(kb, (out_f,), jnp.float32, -bound, bound)
        return W, b

    keys = jax.random.split(key, 8)
    p = {}
    p["wq"], p["bq"] = lin(keys[0], TRANS_CHANNELS, CNN_CHANNELS)
    p["wk"], p["bk"] = lin(keys[1], TRANS_CHANNELS, CNN_CHANNELS)
    p["wv"], p["bv"] = lin(keys[2], TRANS_CHANNELS, TRANS_CHANNELS)
    # MultiheadAttention in_proj (split into q/k/v chunks) and out_proj
    p["wiq"], p["biq"] = lin(keys[3], TRANS_CHANNELS, TRANS_CHANNELS)
    p["wik"], p["bik"] = lin(keys[4], TRANS_CHANNELS, TRANS_CHANNELS)
    p["wiv"], p["biv"] = lin(keys[5], TRANS_CHANNELS, TRANS_CHANNELS)
    p["wo"], p["bo"] = lin(keys[6], TRANS_CHANNELS, TRANS_CHANNELS)
    p["wup"], p["bup"] = lin(keys[7], CNN_CHANNELS, TRANS_CHANNELS)
    return p


if __name__ == "__main__":
    key = jax.random.PRNGKey(0)
    kp, kx, ky = jax.random.split(key, 3)
    params = init_params(kp)

    B, Himg, Wimg = 2, 14, 14
    x_cnn = jax.random.normal(kx, (B, CNN_CHANNELS, Himg, Wimg), jnp.float32)
    x_trans = jax.random.normal(ky, (B, TRANS_CHANNELS, Himg, Wimg), jnp.float32)

    forward = make_linear_sra_forward(params, B, Himg, Wimg, Himg, Wimg)
    cnn_out, trans_out = forward(x_cnn, x_trans)
    jax.block_until_ready((cnn_out, trans_out))

    assert cnn_out.shape == (B, CNN_CHANNELS, Himg, Wimg)
    assert trans_out.shape == (B, TRANS_CHANNELS, Himg, Wimg)
    assert bool(jnp.isfinite(cnn_out).all()) and bool(jnp.isfinite(trans_out).all())
    print("KERNEL_OK")
</pallas_src>

<mosaic_0001>
module attributes {stable_mosaic.version = 11 : i64} {
  func.func @linear_sra_kernel(%arg0: memref<256x196xbf16, #tpu.memory_space<vmem>>, %arg1: memref<160x196xbf16, #tpu.memory_space<vmem>>, %arg2: memref<196x128xbf16, #tpu.memory_space<vmem>>, %arg3: memref<196x128xbf16, #tpu.memory_space<vmem>>, %arg4: memref<160x128xbf16, #tpu.memory_space<vmem>>, %arg5: memref<160x1xf32, #tpu.memory_space<vmem>>, %arg6: memref<80x80xbf16, #tpu.memory_space<vmem>>, %arg7: memref<80x1xf32, #tpu.memory_space<vmem>>, %arg8: memref<80x80xbf16, #tpu.memory_space<vmem>>, %arg9: memref<80x1xf32, #tpu.memory_space<vmem>>, %arg10: memref<128x80xbf16, #tpu.memory_space<vmem>>, %arg11: memref<128x1xf32, #tpu.memory_space<vmem>>, %arg12: memref<8x80xbf16, #tpu.memory_space<vmem>>, %arg13: memref<80x8xbf16, #tpu.memory_space<vmem>>, %arg14: memref<128x196xbf16, #tpu.memory_space<vmem>>, %arg15: memref<128x196xbf16, #tpu.memory_space<vmem>>, %arg16: memref<256x196xf32, #tpu.memory_space<vmem>>, %arg17: memref<160x196xf32, #tpu.memory_space<vmem>>, %arg18: memref<128x256xbf16, #tpu.memory_space<vmem>>, %arg19: memref<80x256xbf16, #tpu.memory_space<vmem>>, %arg20: memref<160x256xf32, #tpu.memory_space<vmem>>, %arg21: memref<80x256xf32, #tpu.memory_space<vmem>>, %arg22: memref<80x512xbf16, #tpu.memory_space<vmem>>, %arg23: memref<8x512xbf16, #tpu.memory_space<vmem>>, %arg24: memref<80x256xbf16, #tpu.memory_space<vmem>>, %arg25: memref<80x256xbf16, #tpu.memory_space<vmem>>, %arg26: memref<128x256xbf16, #tpu.memory_space<vmem>>) attributes {dimension_semantics = [], scalar_prefetch = 0 : i64, scratch_operands = 9 : i64, tpu.core_type = #tpu.core_type<tc>} {
    %c0 = arith.constant 0 : index
    %c0_0 = arith.constant 0 : index
    %0 = vector.load %arg0[%c0, %c0_0] : memref<256x196xbf16, #tpu.memory_space<vmem>>, vector<128x196xbf16>
    %c0_1 = arith.constant 0 : index
    %c0_2 = arith.constant 0 : index
    %1 = vector.load %arg2[%c0_1, %c0_2] : memref<196x128xbf16, #tpu.memory_space<vmem>>, vector<196x128xbf16>
    %cst = arith.constant dense<0.000000e+00> : vector<128x128xf32>
    %2 = tpu.matmul %0, %1, %cst {dimension_numbers = #tpu.dot_dimension_numbers<[1], [0], [0], [1], [0, 0, 1, 1], [], []>} : vector<128x196xbf16>, vector<196x128xbf16>, vector<128x128xf32> -> vector<128x128xf32>
    %3 = arith.truncf %2 : vector<128x128xf32> to vector<128x128xbf16>
    %c0_3 = arith.constant 0 : index
    %c0_4 = arith.constant 0 : index
    %4 = vector.load %arg18[%c0_3, %c0_4] : memref<128x256xbf16, #tpu.memory_space<vmem>>, vector<128x128xbf16>
    tpu.vector_store %arg18[%c0_3, %c0_4], %3 {strides = array<i32>} : memref<128x256xbf16, #tpu.memory_space<vmem>>, vector<128x128xbf16>,
    %c0_5 = arith.constant 0 : index
    %c0_6 = arith.constant 0 : index
    %5 = vector.load %arg1[%c0_5, %c0_6] : memref<160x196xbf16, #tpu.memory_space<vmem>>, vector<80x196xbf16>
    %c0_7 = arith.constant 0 : index
    %c0_8 = arith.constant 0 : index
    %6 = vector.load %arg3[%c0_7, %c0_8] : memref<196x128xbf16, #tpu.memory_space<vmem>>, vector<196x128xbf16>
    %cst_9 = arith.constant dense<0.000000e+00> : vector<80x128xf32>
    %7 = tpu.matmul %5, %6, %cst_9 {dimension_numbers = #tpu.dot_dimension_numbers<[1], [0], [0], [1], [0, 0, 1, 1], [], []>} : vector<80x196xbf16>, vector<196x128xbf16>, vector<80x128xf32> -> vector<80x128xf32>
    %8 = arith.truncf %7 : vector<80x128xf32> to vector<80x128xbf16>
    %c0_10 = arith.constant 0 : index
    %c0_11 = arith.constant 0 : index
    %9 = vector.load %arg19[%c0_10, %c0_11] : memref<80x256xbf16, #tpu.memory_space<vmem>>, vector<80x128xbf16>
    tpu.vector_store %arg19[%c0_10, %c0_11], %8 {strides = array<i32>} : memref<80x256xbf16, #tpu.memory_space<vmem>>, vector<80x128xbf16>,
    %c128 = arith.constant 128 : index
    %c0_12 = arith.constant 0 : index
    %10 = vector.load %arg0[%c128, %c0_12] : memref<256x196xbf16, #tpu.memory_space<vmem>>, vector<128x196xbf16>
    %c0_13 = arith.constant 0 : index
    %c0_14 = arith.constant 0 : index
    %11 = vector.load %arg2[%c0_13, %c0_14] : memref<196x128xbf16, #tpu.memory_space<vmem>>, vector<196x128xbf16>
    %cst_15 = arith.constant dense<0.000000e+00> : vector<128x128xf32>
    %12 = tpu.matmul %10, %11, %cst_15 {dimension_numbers = #tpu.dot_dimension_numbers<[1], [0], [0], [1], [0, 0, 1, 1], [], []>} : vector<128x196xbf16>, vector<196x128xbf16>, vector<128x128xf32> -> vector<128x128xf32>
    %13 = arith.truncf %12 : vector<128x128xf32> to vector<128x128xbf16>
    %c0_16 = arith.constant 0 : index
    %c128_17 = arith.constant 128 : index
    %14 = vector.load %arg18[%c0_16, %c128_17] : memref<128x256xbf16, #tpu.memory_space<vmem>>, vector<128x128xbf16>
    tpu.vector_store %arg18[%c0_16, %c128_17], %13 {strides = array<i32>} : memref<128x256xbf16, #tpu.memory_space<vmem>>, vector<128x128xbf16>,
    %c80 = arith.constant 80 : index
    %c0_18 = arith.constant 0 : index
    %15 = vector.load %arg1[%c80, %c0_18] : memref<160x196xbf16, #tpu.memory_space<vmem>>, vector<80x196xbf16>
    %c0_19 = arith.constant 0 : index
    %c0_20 = arith.constant 0 : index
    %16 = vector.load %arg3[%c0_19, %c0_20] : memref<196x128xbf16, #tpu.memory_space<vmem>>, vector<196x128xbf16>
    %cst_21 = arith.constant dense<0.000000e+00> : vector<80x128xf32>
    %17 = tpu.matmul %15, %16, %cst_21 {dimension_numbers = #tpu.dot_dimension_numbers<[1], [0], [0], [1], [0, 0, 1, 1], [], []>} : vector<80x196xbf16>, vector<196x128xbf16>, vector<80x128xf32> -> vector<80x128xf32>
    %18 = arith.truncf %17 : vector<80x128xf32> to vector<80x128xbf16>
    %c0_22 = arith.constant 0 : index
    %c128_23 = arith.constant 128 : index
    %19 = vector.load %arg19[%c0_22, %c128_23] : memref<80x256xbf16, #tpu.memory_space<vmem>>, vector<80x128xbf16>
    tpu.vector_store %arg19[%c0_22, %c128_23], %18 {strides = array<i32>} : memref<80x256xbf16, #tpu.memory_space<vmem>>, vector<80x128xbf16>,
    %c0_24 = arith.constant 0 : index
    %c0_25 = arith.constant 0 : index
    %20 = vector.load %arg4[%c0_24, %c0_25] : memref<160x128xbf16, #tpu.memory_space<vmem>>, vector<160x128xbf16>
    %c0_26 = arith.constant 0 : index
    %c0_27 = arith.constant 0 : index
    %21 = vector.load %arg18[%c0_26, %c0_27] : memref<128x256xbf16, #tpu.memory_space<vmem>>, vector<128x256xbf16>
    %cst_28 = arith.constant dense<0.000000e+00> : vector<160x256xf32>
    %22 = tpu.matmul %20, %21, %cst_28 {dimension_numbers = #tpu.dot_dimension_numbers<[1], [0], [0], [1], [0, 0, 1, 1], [], []>} : vector<160x128xbf16>, vector<128x256xbf16>, vector<160x256xf32> -> vector<160x256xf32>
    %c0_29 = arith.constant 0 : index
    %c0_30 = arith.constant 0 : index
    %23 = vector.load %arg5[%c0_29, %c0_30] : memref<160x1xf32, #tpu.memory_space<vmem>>, vector<160x1xf32>
    %24 = vector.broadcast %23 : vector<160x1xf32> to vector<160x256xf32>
    %25 = arith.addf %22, %24 : vector<160x256xf32>
    %c0_31 = arith.constant 0 : index
    %c0_32 = arith.constant 0 : index
    %26 = vector.load %arg20[%c0_31, %c0_32] : memref<160x256xf32, #tpu.memory_space<vmem>>, vector<160x256xf32>
    tpu.vector_store %arg20[%c0_31, %c0_32], %25 {strides = array<i32>} : memref<160x256xf32, #tpu.memory_space<vmem>>, vector<160x256xf32>,
    %c0_33 = arith.constant 0 : index
    %c0_34 = arith.constant 0 : index
    %27 = vector.load %arg6[%c0_33, %c0_34] : memref<80x80xbf16, #tpu.memory_space<vmem>>, vector<80x80xbf16>
    %c0_35 = arith.constant 0 : index
    %c0_36 = arith.constant 0 : index
    %28 = vector.load %arg19[%c0_35, %c0_36] : memref<80x256xbf16, #tpu.memory_space<vmem>>, vector<80x256xbf16>
    %cst_37 = arith.constant dense<0.000000e+00> : vector<80x256xf32>
    %29 = tpu.matmul %27, %28, %cst_37 {dimension_numbers = #tpu.dot_dimension_numbers<[1], [0], [0], [1], [0, 0, 1, 1], [], []>} : vector<80x80xbf16>, vector<80x256xbf16>, vector<80x256xf32> -> vector<80x256xf32>
    %c0_38 = arith.constant 0 : index
    %c0_39 = arith.constant 0 : index
    %30 = vector.load %arg7[%c0_38, %c0_39] : memref<80x1xf32, #tpu.memory_space<vmem>>, vector<80x1xf32>
    %31 = vector.broadcast %30 : vector<80x1xf32> to vector<80x256xf32>
    %32 = arith.addf %29, %31 : vector<80x256xf32>
    %c0_40 = arith.constant 0 : index
    %c0_41 = arith.constant 0 : index
    %33 = vector.load %arg21[%c0_40, %c0_41] : memref<80x256xf32, #tpu.memory_space<vmem>>, vector<80x256xf32>
    tpu.vector_store %arg21[%c0_40, %c0_41], %32 {strides = array<i32>} : memref<80x256xf32, #tpu.memory_space<vmem>>, vector<80x256xf32>,
    %c0_42 = arith.constant 0 : index
    %c0_43 = arith.constant 0 : index
    %34 = vector.load %arg20[%c0_42, %c0_43] : memref<160x256xf32, #tpu.memory_space<vmem>>, vector<80x128xf32>
    %c80_44 = arith.constant 80 : index
    %c0_45 = arith.constant 0 : index
    %35 = vector.load %arg20[%c80_44, %c0_45] : memref<160x256xf32, #tpu.memory_space<vmem>>, vector<80x128xf32>
    %36 = arith.mulf %34, %35 : vector<80x128xf32>
    %37 = arith.truncf %36 : vector<80x128xf32> to vector<80x128xbf16>
    %c0_46 = arith.constant 0 : index
    %c0_47 = arith.constant 0 : index
    %38 = vector.load %arg22[%c0_46, %c0_47] : memref<80x512xbf16, #tpu.memory_space<vmem>>, vector<80x128xbf16>
    tpu.vector_store %arg22[%c0_46, %c0_47], %37 {strides = array<i32>} : memref<80x512xbf16, #tpu.memory_space<vmem>>, vector<80x128xbf16>,
    %c80_48 = arith.constant 80 : index
    %c128_49 = arith.constant 128 : index
    %39 = vector.load %arg20[%c80_48, %c128_49] : memref<160x256xf32, #tpu.memory_space<vmem>>, vector<80x128xf32>
    %40 = arith.mulf %34, %39 : vector<80x128xf32>
    %41 = arith.truncf %40 : vector<80x128xf32> to vector<80x128xbf16>
    %c0_50 = arith.constant 0 : index
    %c128_51 = arith.constant 128 : index
    %42 = vector.load %arg22[%c0_50, %c128_51] : memref<80x512xbf16, #tpu.memory_space<vmem>>, vector<80x128xbf16>
    tpu.vector_store %arg22[%c0_50, %c128_51], %41 {strides = array<i32>} : memref<80x512xbf16, #tpu.memory_space<vmem>>, vector<80x128xbf16>,
    %c0_52 = arith.constant 0 : index
    %c128_53 = arith.constant 128 : index
    %43 = vector.load %arg20[%c0_52, %c128_53] : memref<160x256xf32, #tpu.memory_space<vmem>>, vector<80x128xf32>
    %c80_54 = arith.constant 80 : index
    %c0_55 = arith.constant 0 : index
    %44 = vector.load %arg20[%c80_54, %c0_55] : memref<160x256xf32, #tpu.memory_space<vmem>>, vector<80x128xf32>
    %45 = arith.mulf %43, %44 : vector<80x128xf32>
    %46 = arith.truncf %45 : vector<80x128xf32> to vector<80x128xbf16>
    %c0_56 = arith.constant 0 : index
    %c256 = arith.constant 256 : index
    %47 = vector.load %arg22[%c0_56, %c256] : memref<80x512xbf16, #tpu.memory_space<vmem>>, vector<80x128xbf16>
    tpu.vector_store %arg22[%c0_56, %c256], %46 {strides = array<i32>} : memref<80x512xbf16, #tpu.memory_space<vmem>>, vector<80x128xbf16>,
    %c80_57 = arith.constant 80 : index
    %c128_58 = arith.constant 128 : index
    %48 = vector.load %arg20[%c80_57, %c128_58] : memref<160x256xf32, #tpu.memory_space<vmem>>, vector<80x128xf32>
    %49 = arith.mulf %43, %48 : vector<80x128xf32>
    %50 = arith.truncf %49 : vector<80x128xf32> to vector<80x128xbf16>
    %c0_59 = arith.constant 0 : index
    %c384 = arith.constant 384 : index
    %51 = vector.load %arg22[%c0_59, %c384] : memref<80x512xbf16, #tpu.memory_space<vmem>>, vector<80x128xbf16>
    tpu.vector_store %arg22[%c0_59, %c384], %50 {strides = array<i32>} : memref<80x512xbf16, #tpu.memory_space<vmem>>, vector<80x128xbf16>,
    %c0_60 = arith.constant 0 : index
    %c0_61 = arith.constant 0 : index
    %52 = vector.load %arg12[%c0_60, %c0_61] : memref<8x80xbf16, #tpu.memory_space<vmem>>, vector<8x80xbf16>
    %c0_62 = arith.constant 0 : index
    %c0_63 = arith.constant 0 : index
    %53 = vector.load %arg22[%c0_62, %c0_63] : memref<80x512xbf16, #tpu.memory_space<vmem>>, vector<80x512xbf16>
    %cst_64 = arith.constant dense<0.000000e+00> : vector<8x512xf32>
    %54 = tpu.matmul %52, %53, %cst_64 {dimension_numbers = #tpu.dot_dimension_numbers<[1], [0], [0], [1], [0, 0, 1, 1], [], []>} : vector<8x80xbf16>, vector<80x512xbf16>, vector<8x512xf32> -> vector<8x512xf32>
    %55 = vector.extract_strided_slice %54 {offsets = [0, 0], sizes = [8, 128], strides = [1, 1]} : vector<8x512xf32> to vector<8x128xf32>
    %56 = vector.extract_strided_slice %54 {offsets = [0, 128], sizes = [8, 128], strides = [1, 1]} : vector<8x512xf32> to vector<8x128xf32>
    %57 = arith.maximumf %55, %56 : vector<8x128xf32>
    %58 = arith.subf %55, %57 : vector<8x128xf32>
    %59 = math.exp %58 : vector<8x128xf32>
    %60 = arith.subf %56, %57 : vector<8x128xf32>
    %61 = math.exp %60 : vector<8x128xf32>
    %62 = arith.addf %59, %61 : vector<8x128xf32>
    %63 = tpu.reciprocal %62 {approx = true} : vector<8x128xf32> -> vector<8x128xf32>
    %64 = arith.mulf %59, %63 : vector<8x128xf32>
    %65 = arith.truncf %64 : vector<8x128xf32> to vector<8x128xbf16>
    %c0_65 = arith.constant 0 : index
    %c0_66 = arith.constant 0 : index
    %66 = vector.load %arg23[%c0_65, %c0_66] : memref<8x512xbf16, #tpu.memory_space<vmem>>, vector<8x128xbf16>
    tpu.vector_store %arg23[%c0_65, %c0_66], %65 {strides = array<i32>} : memref<8x512xbf16, #tpu.memory_space<vmem>>, vector<8x128xbf16>,
    %67 = arith.mulf %61, %63 : vector<8x128xf32>
    %68 = arith.truncf %67 : vector<8x128xf32> to vector<8x128xbf16>
    %c0_67 = arith.constant 0 : index
    %c128_68 = arith.constant 128 : index
    %69 = vector.load %arg23[%c0_67, %c128_68] : memref<8x512xbf16, #tpu.memory_space<vmem>>, vector<8x128xbf16>
    tpu.vector_store %arg23[%c0_67, %c128_68], %68 {strides = array<i32>} : memref<8x512xbf16, #tpu.memory_space<vmem>>, vector<8x128xbf16>,
    %70 = vector.extract_strided_slice %54 {offsets = [0, 256], sizes = [8, 128], strides = [1, 1]} : vector<8x512xf32> to vector<8x128xf32>
    %71 = vector.extract_strided_slice %54 {offsets = [0, 384], sizes = [8, 128], strides = [1, 1]} : vector<8x512xf32> to vector<8x128xf32>
    %72 = arith.maximumf %70, %71 : vector<8x128xf32>
    %73 = arith.subf %70, %72 : vector<8x128xf32>
    %74 = math.exp %73 : vector<8x128xf32>
    %75 = arith.subf %71, %72 : vector<8x128xf32>
    %76 = math.exp %75 : vector<8x128xf32>
    %77 = arith.addf %74, %76 : vector<8x128xf32>
    %78 = tpu.reciprocal %77 {approx = true} : vector<8x128xf32> -> vector<8x128xf32>
    %79 = arith.mulf %74, %78 : vector<8x128xf32>
    %80 = arith.truncf %79 : vector<8x128xf32> to vector<8x128xbf16>
    %c0_69 = arith.constant 0 : index
    %c256_70 = arith.constant 256 : index
    %81 = vector.load %arg23[%c0_69, %c256_70] : memref<8x512xbf16, #tpu.memory_space<vmem>>, vector<8x128xbf16>
    tpu.vector_store %arg23[%c0_69, %c256_70], %80 {strides = array<i32>} : memref<8x512xbf16, #tpu.memory_space<vmem>>, vector<8x128xbf16>,
    %82 = arith.mulf %76, %78 : vector<8x128xf32>
    %83 = arith.truncf %82 : vector<8x128xf32> to vector<8x128xbf16>
    %c0_71 = arith.constant 0 : index
    %c384_72 = arith.constant 384 : index
    %84 = vector.load %arg23[%c0_71, %c384_72] : memref<8x512xbf16, #tpu.memory_space<vmem>>, vector<8x128xbf16>
    tpu.vector_store %arg23[%c0_71, %c384_72], %83 {strides = array<i32>} : memref<8x512xbf16, #tpu.memory_space<vmem>>, vector<8x128xbf16>,
    %c0_73 = arith.constant 0 : index
    %c0_74 = arith.constant 0 : index
    %85 = vector.load %arg13[%c0_73, %c0_74] : memref<80x8xbf16, #tpu.memory_space<vmem>>, vector<80x8xbf16>
    %c0_75 = arith.constant 0 : index
    %c0_76 = arith.constant 0 : index
    %86 = vector.load %arg23[%c0_75, %c0_76] : memref<8x512xbf16, #tpu.memory_space<vmem>>, vector<8x512xbf16>
    %cst_77 = arith.constant dense<0.000000e+00> : vector<80x512xf32>
    %87 = tpu.matmul %85, %86, %cst_77 {dimension_numbers = #tpu.dot_dimension_numbers<[1], [0], [0], [1], [0, 0, 1, 1], [], []>} : vector<80x8xbf16>, vector<8x512xbf16>, vector<80x512xf32> -> vector<80x512xf32>
    %88 = arith.truncf %87 : vector<80x512xf32> to vector<80x512xbf16>
    %c0_78 = arith.constant 0 : index
    %c0_79 = arith.constant 0 : index
    %89 = vector.load %arg22[%c0_78, %c0_79] : memref<80x512xbf16, #tpu.memory_space<vmem>>, vector<80x512xbf16>
    tpu.vector_store %arg22[%c0_78, %c0_79], %88 {strides = array<i32>} : memref<80x512xbf16, #tpu.memory_space<vmem>>, vector<80x512xbf16>,
    %c0_80 = arith.constant 0 : index
    %c0_81 = arith.constant 0 : index
    %90 = vector.load %arg22[%c0_80, %c0_81] : memref<80x512xbf16, #tpu.memory_space<vmem>>, vector<80x128xbf16>
    %91 = arith.extf %90 : vector<80x128xbf16> to vector<80x128xf32>
    %c0_82 = arith.constant 0 : index
    %c0_83 = arith.constant 0 : index
    %92 = vector.load %arg21[%c0_82, %c0_83] : memref<80x256xf32, #tpu.memory_space<vmem>>, vector<80x128xf32>
    %93 = arith.mulf %91, %92 : vector<80x128xf32>
    %c0_84 = arith.constant 0 : index
    %c128_85 = arith.constant 128 : index
    %94 = vector.load %arg22[%c0_84, %c128_85] : memref<80x512xbf16, #tpu.memory_space<vmem>>, vector<80x128xbf16>
    %95 = arith.extf %94 : vector<80x128xbf16> to vector<80x128xf32>
    %c0_86 = arith.constant 0 : index
    %c128_87 = arith.constant 128 : index
    %96 = vector.load %arg21[%c0_86, %c128_87] : memref<80x256xf32, #tpu.memory_space<vmem>>, vector<80x128xf32>
    %97 = arith.mulf %95, %96 : vector<80x128xf32>
    %98 = arith.addf %93, %97 : vector<80x128xf32>
    %99 = arith.truncf %98 : vector<80x128xf32> to vector<80x128xbf16>
    %c0_88 = arith.constant 0 : index
    %c0_89 = arith.constant 0 : index
    %100 = vector.load %arg24[%c0_88, %c0_89] : memref<80x256xbf16, #tpu.memory_space<vmem>>, vector<80x128xbf16>
    tpu.vector_store %arg24[%c0_88, %c0_89], %99 {strides = array<i32>} : memref<80x256xbf16, #tpu.memory_space<vmem>>, vector<80x128xbf16>,
    %c0_90 = arith.constant 0 : index
    %c256_91 = arith.constant 256 : index
    %101 = vector.load %arg22[%c0_90, %c256_91] : memref<80x512xbf16, #tpu.memory_space<vmem>>, vector<80x128xbf16>
    %102 = arith.extf %101 : vector<80x128xbf16> to vector<80x128xf32>
    %c0_92 = arith.constant 0 : index
    %c0_93 = arith.constant 0 : index
    %103 = vector.load %arg21[%c0_92, %c0_93] : memref<80x256xf32, #tpu.memory_space<vmem>>, vector<80x128xf32>
    %104 = arith.mulf %102, %103 : vector<80x128xf32>
    %c0_94 = arith.constant 0 : index
    %c384_95 = arith.constant 384 : index
    %105 = vector.load %arg22[%c0_94, %c384_95] : memref<80x512xbf16, #tpu.memory_space<vmem>>, vector<80x128xbf16>
    %106 = arith.extf %105 : vector<80x128xbf16> to vector<80x128xf32>
    %c0_96 = arith.constant 0 : index
    %c128_97 = arith.constant 128 : index
    %107 = vector.load %arg21[%c0_96, %c128_97] : memref<80x256xf32, #tpu.memory_space<vmem>>, vector<80x128xf32>
    %108 = arith.mulf %106, %107 : vector<80x128xf32>
    %109 = arith.addf %104, %108 : vector<80x128xf32>
    %110 = arith.truncf %109 : vector<80x128xf32> to vector<80x128xbf16>
    %c0_98 = arith.constant 0 : index
    %c128_99 = arith.constant 128 : index
    %111 = vector.load %arg24[%c0_98, %c128_99] : memref<80x256xbf16, #tpu.memory_space<vmem>>, vector<80x128xbf16>
    tpu.vector_store %arg24[%c0_98, %c128_99], %110 {strides = array<i32>} : memref<80x256xbf16, #tpu.memory_space<vmem>>, vector<80x128xbf16>,
    %c0_100 = arith.constant 0 : index
    %c0_101 = arith.constant 0 : index
    %112 = vector.load %arg8[%c0_100, %c0_101] : memref<80x80xbf16, #tpu.memory_space<vmem>>, vector<80x80xbf16>
    %c0_102 = arith.constant 0 : index
    %c0_103 = arith.constant 0 : index
    %113 = vector.load %arg24[%c0_102, %c0_103] : memref<80x256xbf16, #tpu.memory_space<vmem>>, vector<80x256xbf16>
    %cst_104 = arith.constant dense<0.000000e+00> : vector<80x256xf32>
    %114 = tpu.matmul %112, %113, %cst_104 {dimension_numbers = #tpu.dot_dimension_numbers<[1], [0], [0], [1], [0, 0, 1, 1], [], []>} : vector<80x80xbf16>, vector<80x256xbf16>, vector<80x256xf32> -> vector<80x256xf32>
    %c0_105 = arith.constant 0 : index
    %c0_106 = arith.constant 0 : index
    %115 = vector.load %arg9[%c0_105, %c0_106] : memref<80x1xf32, #tpu.memory_space<vmem>>, vector<80x1xf32>
    %116 = vector.broadcast %115 : vector<80x1xf32> to vector<80x256xf32>
    %117 = arith.addf %114, %116 : vector<80x256xf32>
    %118 = arith.truncf %117 : vector<80x256xf32> to vector<80x256xbf16>
    %c0_107 = arith.constant 0 : index
    %c0_108 = arith.constant 0 : index
    %119 = vector.load %arg25[%c0_107, %c0_108] : memref<80x256xbf16, #tpu.memory_space<vmem>>, vector<80x256xbf16>
    tpu.vector_store %arg25[%c0_107, %c0_108], %118 {strides = array<i32>} : memref<80x256xbf16, #tpu.memory_space<vmem>>, vector<80x256xbf16>,
    %c0_109 = arith.constant 0 : index
    %c0_110 = arith.constant 0 : index
    %120 = vector.load %arg10[%c0_109, %c0_110] : memref<128x80xbf16, #tpu.memory_space<vmem>>, vector<128x80xbf16>
    %c0_111 = arith.constant 0 : index
    %c0_112 = arith.constant 0 : index
    %121 = vector.load %arg25[%c0_111, %c0_112] : memref<80x256xbf16, #tpu.memory_space<vmem>>, vector<80x256xbf16>
    %cst_113 = arith.constant dense<0.000000e+00> : vector<128x256xf32>
    %122 = tpu.matmul %120, %121, %cst_113 {dimension_numbers = #tpu.dot_dimension_numbers<[1], [0], [0], [1], [0, 0, 1, 1], [], []>} : vector<128x80xbf16>, vector<80x256xbf16>, vector<128x256xf32> -> vector<128x256xf32>
    %c0_114 = arith.constant 0 : index
    %c0_115 = arith.constant 0 : index
    %123 = vector.load %arg11[%c0_114, %c0_115] : memref<128x1xf32, #tpu.memory_space<vmem>>, vector<128x1xf32>
    %124 = vector.broadcast %123 : vector<128x1xf32> to vector<128x256xf32>
    %125 = arith.addf %122, %124 : vector<128x256xf32>
    %126 = arith.truncf %125 : vector<128x256xf32> to vector<128x256xbf16>
    %c0_116 = arith.constant 0 : index
    %c0_117 = arith.constant 0 : index
    %127 = vector.load %arg26[%c0_116, %c0_117] : memref<128x256xbf16, #tpu.memory_space<vmem>>, vector<128x256xbf16>
    tpu.vector_store %arg26[%c0_116, %c0_117], %126 {strides = array<i32>} : memref<128x256xbf16, #tpu.memory_space<vmem>>, vector<128x256xbf16>,
    %c0_118 = arith.constant 0 : index
    %c0_119 = arith.constant 0 : index
    %128 = vector.load %arg26[%c0_118, %c0_119] : memref<128x256xbf16, #tpu.memory_space<vmem>>, vector<128x128xbf16>
    %c0_120 = arith.constant 0 : index
    %c0_121 = arith.constant 0 : index
    %129 = vector.load %arg14[%c0_120, %c0_121] : memref<128x196xbf16, #tpu.memory_space<vmem>>, vector<128x196xbf16>
    %cst_122 = arith.constant dense<0.000000e+00> : vector<128x196xf32>
    %130 = tpu.matmul %128, %129, %cst_122 {dimension_numbers = #tpu.dot_dimension_numbers<[1], [0], [0], [1], [0, 0, 1, 1], [], []>} : vector<128x128xbf16>, vector<128x196xbf16>, vector<128x196xf32> -> vector<128x196xf32>
    %c0_123 = arith.constant 0 : index
    %c0_124 = arith.constant 0 : index
    %131 = vector.load %arg16[%c0_123, %c0_124] : memref<256x196xf32, #tpu.memory_space<vmem>>, vector<128x196xf32>
    tpu.vector_store %arg16[%c0_123, %c0_124], %130 {strides = array<i32>} : memref<256x196xf32, #tpu.memory_space<vmem>>, vector<128x196xf32>,
    %c0_125 = arith.constant 0 : index
    %c0_126 = arith.constant 0 : index
    %132 = vector.load %arg25[%c0_125, %c0_126] : memref<80x256xbf16, #tpu.memory_space<vmem>>, vector<80x128xbf16>
    %c0_127 = arith.constant 0 : index
    %c0_128 = arith.constant 0 : index
    %133 = vector.load %arg15[%c0_127, %c0_128] : memref<128x196xbf16, #tpu.memory_space<vmem>>, vector<128x196xbf16>
    %cst_129 = arith.constant dense<0.000000e+00> : vector<80x196xf32>
    %134 = tpu.matmul %132, %133, %cst_129 {dimension_numbers = #tpu.dot_dimension_numbers<[1], [0], [0], [1], [0, 0, 1, 1], [], []>} : vector<80x128xbf16>, vector<128x196xbf16>, vector<80x196xf32> -> vector<80x196xf32>
    %c0_130 = arith.constant 0 : index
    %c0_131 = arith.constant 0 : index
    %135 = vector.load %arg17[%c0_130, %c0_131] : memref<160x196xf32, #tpu.memory_space<vmem>>, vector<80x196xf32>
    tpu.vector_store %arg17[%c0_130, %c0_131], %134 {strides = array<i32>} : memref<160x196xf32, #tpu.memory_space<vmem>>, vector<80x196xf32>,
    %c0_132 = arith.constant 0 : index
    %c128_133 = arith.constant 128 : index
    %136 = vector.load %arg26[%c0_132, %c128_133] : memref<128x256xbf16, #tpu.memory_space<vmem>>, vector<128x128xbf16>
    %c0_134 = arith.constant 0 : index
    %c0_135 = arith.constant 0 : index
    %137 = vector.load %arg14[%c0_134, %c0_135] : memref<128x196xbf16, #tpu.memory_space<vmem>>, vector<128x196xbf16>
    %cst_136 = arith.constant dense<0.000000e+00> : vector<128x196xf32>
    %138 = tpu.matmul %136, %137, %cst_136 {dimension_numbers = #tpu.dot_dimension_numbers<[1], [0], [0], [1], [0, 0, 1, 1], [], []>} : vector<128x128xbf16>, vector<128x196xbf16>, vector<128x196xf32> -> vector<128x196xf32>
    %c128_137 = arith.constant 128 : index
    %c0_138 = arith.constant 0 : index
    %139 = vector.load %arg16[%c128_137, %c0_138] : memref<256x196xf32, #tpu.memory_space<vmem>>, vector<128x196xf32>
    tpu.vector_store %arg16[%c128_137, %c0_138], %138 {strides = array<i32>} : memref<256x196xf32, #tpu.memory_space<vmem>>, vector<128x196xf32>,
    %c0_139 = arith.constant 0 : index
    %c128_140 = arith.constant 128 : index
    %140 = vector.load %arg25[%c0_139, %c128_140] : memref<80x256xbf16, #tpu.memory_space<vmem>>, vector<80x128xbf16>
    %c0_141 = arith.constant 0 : index
    %c0_142 = arith.constant 0 : index
    %141 = vector.load %arg15[%c0_141, %c0_142] : memref<128x196xbf16, #tpu.memory_space<vmem>>, vector<128x196xbf16>
    %cst_143 = arith.constant dense<0.000000e+00> : vector<80x196xf32>
    %142 = tpu.matmul %140, %141, %cst_143 {dimension_numbers = #tpu.dot_dimension_numbers<[1], [0], [0], [1], [0, 0, 1, 1], [], []>} : vector<80x128xbf16>, vector<128x196xbf16>, vector<80x196xf32> -> vector<80x196xf32>
    %c80_144 = arith.constant 80 : index
    %c0_145 = arith.constant 0 : index
    %143 = vector.load %arg17[%c80_144, %c0_145] : memref<160x196xf32, #tpu.memory_space<vmem>>, vector<80x196xf32>
    tpu.vector_store %arg17[%c80_144, %c0_145], %142 {strides = array<i32>} : memref<160x196xf32, #tpu.memory_space<vmem>>, vector<80x196xf32>,
    return
  }
}

</mosaic_0001>

<llo_original>
// kernel: forward.1
$region0: #{forward.1}
  #allocation0 [shape = 'u32[]', space=smem, size = 0x4, offset = 0x4, fixed_abs, tag = 'smem constant byte address 0x4 - core index']
  #allocation1 [shape = 'u32[72,128]{1,0:T(1,128)}', space=vmem, size = 0x9000, scoped, tag = 'internal scratch']
  #allocation2 [shape = 'bf16[128,256]{1,0:T(8,128)(2,1)}', space=vmem, size = 0x10000, scoped, tag = 'scratch operand']
  #allocation3 [shape = 'bf16[80,256]{1,0:T(8,128)(2,1)}', space=vmem, size = 0xa000, scoped, tag = 'scratch operand']
  #allocation4 [shape = 'f32[160,256]{1,0:T(8,128)}', space=vmem, size = 0x28000, scoped, tag = 'scratch operand']
  #allocation5 [shape = 'f32[80,256]{1,0:T(8,128)}', space=vmem, size = 0x14000, scoped, tag = 'scratch operand']
  #allocation6 [shape = 'bf16[80,512]{1,0:T(8,128)(2,1)}', space=vmem, size = 0x14000, scoped, tag = 'scratch operand']
  #allocation7 [shape = 'bf16[8,512]{1,0:T(8,128)(2,1)}', space=vmem, size = 0x2000, scoped, tag = 'scratch operand']
  #allocation8 [shape = 'bf16[80,256]{1,0:T(8,128)(2,1)}', space=vmem, size = 0xa000, scoped, tag = 'scratch operand']
  #allocation9 [shape = 'bf16[80,256]{1,0:T(8,128)(2,1)}', space=vmem, size = 0xa000, scoped, tag = 'scratch operand']
  #allocation10 [shape = 'bf16[128,256]{1,0:T(8,128)(2,1)}', space=vmem, size = 0x10000, scoped, tag = 'scratch operand']
  %s0 = inlined_call_operand.vmem [shape: bf16[256,196], index: 0, kind: input, shape index: {}]
  %s1 = inlined_call_operand.vmem [shape: bf16[160,196], index: 1, kind: input, shape index: {}]
  %s2 = inlined_call_operand.vmem [shape: bf16[196,128], index: 2, kind: input, shape index: {}, may-alias: {2,3}]
  %s3 = inlined_call_operand.vmem [shape: bf16[196,128], index: 3, kind: input, shape index: {}, may-alias: {2,3}]
  %s4 = inlined_call_operand.vmem [shape: bf16[160,128], index: 4, kind: input, shape index: {}]
  %s5 = inlined_call_operand.vmem [shape: f32[160,1], index: 5, kind: input, shape index: {}]
  %s6 = inlined_call_operand.vmem [shape: bf16[80,80], index: 6, kind: input, shape index: {}]
  %s7 = inlined_call_operand.vmem [shape: f32[80,1], index: 7, kind: input, shape index: {}]
  %s8 = inlined_call_operand.vmem [shape: bf16[80,80], index: 8, kind: input, shape index: {}]
  %s9 = inlined_call_operand.vmem [shape: f32[80,1], index: 9, kind: input, shape index: {}]
  %s10 = inlined_call_operand.vmem [shape: bf16[128,80], index: 10, kind: input, shape index: {}]
  %s11 = inlined_call_operand.vmem [shape: f32[128,1], index: 11, kind: input, shape index: {}]
  %s12 = inlined_call_operand.vmem [shape: bf16[8,80], index: 12, kind: input, shape index: {}]
  %s13 = inlined_call_operand.vmem [shape: bf16[80,8], index: 13, kind: input, shape index: {}]
  %s14 = inlined_call_operand.vmem [shape: bf16[128,196], index: 14, kind: input, shape index: {}, may-alias: {14,15}]
  %s15 = inlined_call_operand.vmem [shape: bf16[128,196], index: 15, kind: input, shape index: {}, may-alias: {14,15}]
  %s16 = inlined_call_operand.vmem [shape: f32[256,196], index: 16, kind: output, shape index: {0}]
  %s17 = inlined_call_operand.vmem [shape: f32[160,196], index: 17, kind: output, shape index: {1}]
  %18 = xla_tuple %s16, %s17
  %s19 = sld [smem:[#allocation0]]
  $region82: #{forward.1} parent=0
    _
  %s21 = ssub.s32 1, %s19
  %s22 = scalar_select 0, %s21, %s19
  // Predicated region
  $region2: #{forward.1} parent=0 // pred_check
    _
  $region3: #{forward.1} parent=0 // pred_check_branch
    %24 = sbr.rel (0) target = $region5
  $region4: #{forward.1} parent=0 // pred_region
    _
  $region5: #{forward.1} parent=0 // pred_fallthru
    _
  // Predicated region
  $region6: #{forward.1} parent=0 // pred_check
    _
  $region7: #{forward.1} parent=0 // pred_check_branch
    %26 = sbr.rel (0) target = $region9
  $region8: #{forward.1} parent=0 // pred_region
    _
  $region9: #{forward.1} parent=0 // pred_fallthru
    _
  // Predicated region
  $region10: #{forward.1} parent=0 // pred_check
    _
  $region11: #{forward.1} parent=0 // pred_check_branch
    %28 = sbr.rel (0) target = $region13
  $region12: #{forward.1} parent=0 // pred_region
    _
  $region13: #{forward.1} parent=0 // pred_fallthru
    _
  // Predicated region
  $region14: #{forward.1} parent=0 // pred_check
    _
  $region15: #{forward.1} parent=0 // pred_check_branch
    %30 = sbr.rel (0) target = $region17
  $region16: #{forward.1} parent=0 // pred_region
    _
  $region17: #{forward.1} parent=0 // pred_fallthru
    _
  // Predicated region
  $region18: #{forward.1} parent=0 // pred_check
    _
  $region19: #{forward.1} parent=0 // pred_check_branch
    %32 = sbr.rel (0) target = $region21
  $region20: #{forward.1} parent=0 // pred_region
    _
  $region21: #{forward.1} parent=0 // pred_fallthru
    _
  // Predicated region
  $region22: #{forward.1} parent=0 // pred_check
    _
  $region23: #{forward.1} parent=0 // pred_check_branch
    %34 = sbr.rel (0) target = $region25
  $region24: #{forward.1} parent=0 // pred_region
    _
  $region25: #{forward.1} parent=0 // pred_fallthru
    _
  // Predicated region
  $region26: #{forward.1} parent=0 // pred_check
    _
  $region27: #{forward.1} parent=0 // pred_check_branch
    %36 = sbr.rel (0) target = $region29
  $region28: #{forward.1} parent=0 // pred_region
    _
  $region29: #{forward.1} parent=0 // pred_fallthru
    _
  // Predicated region
  $region30: #{forward.1} parent=0 // pred_check
    _
  $region31: #{forward.1} parent=0 // pred_check_branch
    %38 = sbr.rel (0) target = $region33
  $region32: #{forward.1} parent=0 // pred_region
    _
  $region33: #{forward.1} parent=0 // pred_fallthru
    _
  // Predicated region
  $region34: #{forward.1} parent=0 // pred_check
    _
  $region35: #{forward.1} parent=0 // pred_check_branch
    %40 = sbr.rel (0) target = $region37
  $region36: #{forward.1} parent=0 // pred_region
    _
  $region37: #{forward.1} parent=0 // pred_fallthru
    _
  // Predicated region
  $region38: #{forward.1} parent=0 // pred_check
    _
  $region39: #{forward.1} parent=0 // pred_check_branch
    %42 = sbr.rel (0) target = $region41
  $region40: #{forward.1} parent=0 // pred_region
    _
  $region41: #{forward.1} parent=0 // pred_fallthru
    _
  // Predicated region
  $region42: #{forward.1} parent=0 // pred_check
    _
  $region43: #{forward.1} parent=0 // pred_check_branch
    %44 = sbr.rel (0) target = $region45
  $region44: #{forward.1} parent=0 // pred_region
    _
  $region45: #{forward.1} parent=0 // pred_fallthru
    _
  // Predicated region
  $region46: #{forward.1} parent=0 // pred_check
    _
  $region47: #{forward.1} parent=0 // pred_check_branch
    %46 = sbr.rel (0) target = $region49
  $region48: #{forward.1} parent=0 // pred_region
    _
  $region49: #{forward.1} parent=0 // pred_fallthru
    _
  // Predicated region
  $region50: #{forward.1} parent=0 // pred_check
    _
  $region51: #{forward.1} parent=0 // pred_check_branch
    %48 = sbr.rel (0) target = $region53
  $region52: #{forward.1} parent=0 // pred_region
    _
  $region53: #{forward.1} parent=0 // pred_fallthru
    _
  // Predicated region
  $region54: #{forward.1} parent=0 // pred_check
    _
  $region55: #{forward.1} parent=0 // pred_check_branch
    %50 = sbr.rel (0) target = $region57
  $region56: #{forward.1} parent=0 // pred_region
    _
  $region57: #{forward.1} parent=0 // pred_fallthru
    _
  // Predicated region
  $region58: #{forward.1} parent=0 // pred_check
    _
  $region59: #{forward.1} parent=0 // pred_check_branch
    %52 = sbr.rel (0) target = $region61
  $region60: #{forward.1} parent=0 // pred_region
    _
  $region61: #{forward.1} parent=0 // pred_fallthru
    _
  // Predicated region
  $region62: #{forward.1} parent=0 // pred_check
    _
  $region63: #{forward.1} parent=0 // pred_check_branch
    %54 = sbr.rel (0) target = $region65
  $region64: #{forward.1} parent=0 // pred_region
    _
  $region65: #{forward.1} parent=0 // pred_fallthru
    _
  %v56 = vld [vmem:[%s0] sm:$0xff]
  %v57 = vld [vmem:[%s0 + $0x8] sm:$0xff]
  %v58 = vld [vmem:[%s0 + $0x10] sm:$0xff]
  %v59 = vld [vmem:[%s0 + $0x18] sm:$0xff]
  %v60 = vld [vmem:[%s0 + $0x20] sm:$0xff]
  %v61 = vld [vmem:[%s0 + $0x28] sm:$0xff]
  %v62 = vld [vmem:[%s0 + $0x30] sm:$0xff]
  %v63 = vld [vmem:[%s0 + $0x38] sm:$0xff]
  %v64 = vld [vmem:[%s0 + $0x40] sm:$0xff]
  %v65 = vld [vmem:[%s0 + $0x48] sm:$0xff]
  %v66 = vld [vmem:[%s0 + $0x50] sm:$0xff]
  %v67 = vld [vmem:[%s0 + $0x58] sm:$0xff]
  %v68 = vld [vmem:[%s0 + $0x60] sm:$0xff]
  %v69 = vld [vmem:[%s0 + $0x68] sm:$0xff]
  %v70 = vld [vmem:[%s0 + $0x70] sm:$0xff]
  %v71 = vld [vmem:[%s0 + $0x78] sm:$0xff]
  %v72 = vld [vmem:[%s2] sm:$0xf]
  %v73 = vld [vmem:[%s2 + $0x4] sm:$0xf]
  %v74 = vld [vmem:[%s2 + $0x8] sm:$0xf]
  %v75 = vld [vmem:[%s2 + $0xc] sm:$0xf]
  %v76 = vld [vmem:[%s2 + $0x10] sm:$0xf]
  %v77 = vld [vmem:[%s2 + $0x14] sm:$0xf]
  %v78 = vld [vmem:[%s2 + $0x18] sm:$0xf]
  %v79 = vld [vmem:[%s2 + $0x1c] sm:$0xf]
  %v80 = vld [vmem:[%s2 + $0x20] sm:$0xf]
  %v81 = vld [vmem:[%s2 + $0x24] sm:$0xf]
  %v82 = vld [vmem:[%s2 + $0x28] sm:$0xf]
  %v83 = vld [vmem:[%s2 + $0x2c] sm:$0xf]
  %v84 = vld [vmem:[%s2 + $0x30] sm:$0xf]
  %v85 = vld [vmem:[%s2 + $0x34] sm:$0xf]
  %v86 = vld [vmem:[%s2 + $0x38] sm:$0xf]
  %v87 = vld [vmem:[%s2 + $0x3c] sm:$0xf]
  %v88 = vld [vmem:[%s2 + $0x40] sm:$0xf]
  %v89 = vld [vmem:[%s2 + $0x44] sm:$0xf]
  %v90 = vld [vmem:[%s2 + $0x48] sm:$0xf]
  %v91 = vld [vmem:[%s2 + $0x4c] sm:$0xf]
  %v92 = vld [vmem:[%s2 + $0x50] sm:$0xf]
  %v93 = vld [vmem:[%s2 + $0x54] sm:$0xf]
  %v94 = vld [vmem:[%s2 + $0x58] sm:$0xf]
  %v95 = vld [vmem:[%s2 + $0x5c] sm:$0xf]
  %v96 = vld [vmem:[%s2 + $0x60] sm:$0x3]
  %v113 = vunpack.c.l.b16 %v56
  %v114 = vunpack.c.h.b16 %v56
  %v115 = vunpack.c.l.b16 %v57
  %v116 = vunpack.c.h.b16 %v57
  %v117 = vunpack.c.l.b16 %v58
  %v118 = vunpack.c.h.b16 %v58
  %v119 = vunpack.c.l.b16 %v59
  %v120 = vunpack.c.h.b16 %v59
  %v121 = vunpack.c.l.b16 %v60
  %v122 = vunpack.c.h.b16 %v60
  %v123 = vunpack.c.l.b16 %v61
  %v124 = vunpack.c.h.b16 %v61
  %v125 = vunpack.c.l.b16 %v62
  %v126 = vunpack.c.h.b16 %v62
  %v127 = vunpack.c.l.b16 %v63
  %v128 = vunpack.c.h.b16 %v63
  %v129 = vunpack.c.l.b16 %v64
  %v130 = vunpack.c.h.b16 %v64
  %v131 = vunpack.c.l.b16 %v65
  %v132 = vunpack.c.h.b16 %v65
  %v133 = vunpack.c.l.b16 %v66
  %v134 = vunpack.c.h.b16 %v66
  %v135 = vunpack.c.l.b16 %v67
  %v136 = vunpack.c.h.b16 %v67
  %v137 = vunpack.c.l.b16 %v68
  %v138 = vunpack.c.h.b16 %v68
  %v139 = vunpack.c.l.b16 %v69
  %v140 = vunpack.c.h.b16 %v69
  %v141 = vunpack.c.l.b16 %v70
  %v142 = vunpack.c.h.b16 %v70
  %v143 = vunpack.c.l.b16 %v71
  %v144 = vunpack.c.h.b16 %v71
  %v145 = vpack.c.b16 %v115, %v113
  %v146 = vpack.c.b16 %v116, %v114
  %v147 = vpack.c.b16 %v119, %v117
  %v148 = vpack.c.b16 %v120, %v118
  %v149 = vpack.c.b16 %v123, %v121
  %v150 = vpack.c.b16 %v124, %v122
  %v151 = vpack.c.b16 %v127, %v125
  %v152 = vpack.c.b16 %v128, %v126
  %v153 = vpack.c.b16 %v131, %v129
  %v154 = vpack.c.b16 %v132, %v130
  %v155 = vpack.c.b16 %v135, %v133
  %v156 = vpack.c.b16 %v136, %v134
  %v157 = vpack.c.b16 %v139, %v137
  %v158 = vpack.c.b16 %v140, %v138
  %v159 = vpack.c.b16 %v143, %v141
  %v160 = vpack.c.b16 %v144, %v142
  %v194 = vunpack.c.l.b16 %v72
  %v195 = vunpack.c.l.b16 %v73
  %v196 = vunpack.c.l.b16 %v74
  %v197 = vunpack.c.l.b16 %v75
  %v198 = vunpack.c.l.b16 %v76
  %v199 = vunpack.c.l.b16 %v77
  %v200 = vunpack.c.l.b16 %v78
  %v201 = vunpack.c.l.b16 %v79
  %v202 = vunpack.c.l.b16 %v80
  %v203 = vunpack.c.l.b16 %v81
  %v204 = vunpack.c.l.b16 %v82
  %v205 = vunpack.c.l.b16 %v83
  %v206 = vunpack.c.l.b16 %v84
  %v207 = vunpack.c.l.b16 %v85
  %v208 = vunpack.c.l.b16 %v86
  %v209 = vunpack.c.l.b16 %v87
  %v210 = vunpack.c.l.b16 %v88
  %v211 = vunpack.c.l.b16 %v89
  %v212 = vunpack.c.l.b16 %v90
  %v213 = vunpack.c.l.b16 %v91
  %v214 = vunpack.c.l.b16 %v92
  %v215 = vunpack.c.l.b16 %v93
  %v216 = vunpack.c.l.b16 %v94
  %v217 = vunpack.c.l.b16 %v95
  %v218 = vunpack.c.l.b16 %v96
  %v219 = vpack.c.b16 %v195, %v194
  %v220 = vpack.c.b16 %v197, %v196
  %v221 = vpack.c.b16 %v199, %v198
  %v222 = vpack.c.b16 %v201, %v200
  %v223 = vpack.c.b16 %v203, %v202
  %v224 = vpack.c.b16 %v205, %v204
  %v225 = vpack.c.b16 %v207, %v206
  %v226 = vpack.c.b16 %v209, %v208
  %v227 = vpack.c.b16 %v211, %v210
  %v228 = vpack.c.b16 %v213, %v212
  %v229 = vpack.c.b16 %v215, %v214
  %v230 = vpack.c.b16 %v217, %v216
  %v231 = vpack.c.b16 %v218, %v218
  %vm244 = vcmask 556032
  %v246 = vsel %vm244, %v146, 0
  %v249 = vsel %vm244, %v148, 0
  %v252 = vsel %vm244, %v150, 0
  %v255 = vsel %vm244, %v152, 0
  %v258 = vsel %vm244, %v154, 0
  %v261 = vsel %vm244, %v156, 0
  %v264 = vsel %vm244, %v158, 0
  %v267 = vsel %vm244, %v160, 0
  %vm269 = vcmask 1041408
  %v271 = vsel %vm269, %v231, 0
  %273 = vmatpush.bf16.msra.mxu0 %v226
  %274 = vmatpush.bf16.msra.mxu0 %v225
  %275 = vmatpush.bf16.msra.mxu0 %v224
  %276 = vmatpush.bf16.msra.mxu0 %v223
  %277 = vmatpush.bf16.msra.mxu0 %v222
  %278 = vmatpush.bf16.msra.mxu0 %v221
  %279 = vmatpush.bf16.msra.mxu0 %v220
  %280 = vmatpush.bf16.msra.mxu0 %v219
  %281 = vmatmul.bf16.gmra.mxu0 %v145
  %v282 = vpop.f32.mrf.mxu0
  %v283 = vadd.f32 0.0, %v282
  %v284 = vpop.f32.mrf.mxu0
  %v285 = vadd.f32 0.0, %v284
  %286 = vmatmul.bf16.gmra.mxu0 %v147
  %v287 = vpop.f32.mrf.mxu0
  %v288 = vadd.f32 0.0, %v287
  %v289 = vpop.f32.mrf.mxu0
  %v290 = vadd.f32 0.0, %v289
  %291 = vmatmul.bf16.gmra.mxu0 %v149
  %v292 = vpop.f32.mrf.mxu0
  %v293 = vadd.f32 0.0, %v292
  %v294 = vpop.f32.mrf.mxu0
  %v295 = vadd.f32 0.0, %v294
  %296 = vmatmul.bf16.gmra.mxu0 %v151
  %v297 = vpop.f32.mrf.mxu0
  %v298 = vadd.f32 0.0, %v297
  %v299 = vpop.f32.mrf.mxu0
  %v300 = vadd.f32 0.0, %v299
  %301 = vmatmul.bf16.gmra.mxu0 %v153
  %v302 = vpop.f32.mrf.mxu0
  %v303 = vadd.f32 0.0, %v302
  %v304 = vpop.f32.mrf.mxu0
  %v305 = vadd.f32 0.0, %v304
  %306 = vmatmul.bf16.gmra.mxu0 %v155
  %v307 = vpop.f32.mrf.mxu0
  %v308 = vadd.f32 0.0, %v307
  %v309 = vpop.f32.mrf.mxu0
  %v310 = vadd.f32 0.0, %v309
  %311 = vmatmul.bf16.gmra.mxu0 %v157
  %v312 = vpop.f32.mrf.mxu0
  %v313 = vadd.f32 0.0, %v312
  %v314 = vpop.f32.mrf.mxu0
  %v315 = vadd.f32 0.0, %v314
  %316 = vmatmul.bf16.gmra.mxu0 %v159
  %v317 = vpop.f32.mrf.mxu0
  %v318 = vadd.f32 0.0, %v317
  %v319 = vpop.f32.mrf.mxu0
  %v320 = vadd.f32 0.0, %v319
  %321 = vdwg.mxu0
  %322 = vmatpush.bf16.msra.mxu0 0
  %323 = vmatpush.bf16.msra.mxu0 0
  %324 = vmatpush.bf16.msra.mxu0 0
  %325 = vmatpush.bf16.msra.mxu0 %v271
  %326 = vmatpush.bf16.msra.mxu0 %v230
  %327 = vmatpush.bf16.msra.mxu0 %v229
  %328 = vmatpush.bf16.msra.mxu0 %v228
  %329 = vmatpush.bf16.msra.mxu0 %v227
  %330 = vmatmul.bf16.gmra.mxu0 %v246
  %v331 = vpop.f32.mrf.mxu0
  %v332 = vadd.f32 %v283, %v331
  %v333 = vpop.f32.mrf.mxu0
  %v334 = vadd.f32 %v285, %v333
  %335 = vmatmul.bf16.gmra.mxu0 %v249
  %v336 = vpop.f32.mrf.mxu0
  %v337 = vadd.f32 %v288, %v336
  %v338 = vpop.f32.mrf.mxu0
  %v339 = vadd.f32 %v290, %v338
  %340 = vmatmul.bf16.gmra.mxu0 %v252
  %v341 = vpop.f32.mrf.mxu0
  %v342 = vadd.f32 %v293, %v341
  %v343 = vpop.f32.mrf.mxu0
  %v344 = vadd.f32 %v295, %v343
  %345 = vmatmul.bf16.gmra.mxu0 %v255
  %v346 = vpop.f32.mrf.mxu0
  %v347 = vadd.f32 %v298, %v346
  %v348 = vpop.f32.mrf.mxu0
  %v349 = vadd.f32 %v300, %v348
  %350 = vmatmul.bf16.gmra.mxu0 %v258
  %v351 = vpop.f32.mrf.mxu0
  %v352 = vadd.f32 %v303, %v351
  %v353 = vpop.f32.mrf.mxu0
  %v354 = vadd.f32 %v305, %v353
  %355 = vmatmul.bf16.gmra.mxu0 %v261
  %v356 = vpop.f32.mrf.mxu0
  %v357 = vadd.f32 %v308, %v356
  %v358 = vpop.f32.mrf.mxu0
  %v359 = vadd.f32 %v310, %v358
  %360 = vmatmul.bf16.gmra.mxu0 %v264
  %v361 = vpop.f32.mrf.mxu0
  %v362 = vadd.f32 %v313, %v361
  %v363 = vpop.f32.mrf.mxu0
  %v364 = vadd.f32 %v315, %v363
  %365 = vmatmul.bf16.gmra.mxu0 %v267
  %v366 = vpop.f32.mrf.mxu0
  %v367 = vadd.f32 %v318, %v366
  %v368 = vpop.f32.mrf.mxu0
  %v369 = vadd.f32 %v320, %v368
  %370 = vdwg.mxu0
  %v371 = vpack.c.bf16 %v332, %v332
  %v372 = vpack.c.bf16 %v334, %v334
  %v373 = vpack.c.bf16 %v337, %v337
  %v374 = vpack.c.bf16 %v339, %v339
  %v375 = vpack.c.bf16 %v342, %v342
  %v376 = vpack.c.bf16 %v344, %v344
  %v377 = vpack.c.bf16 %v347, %v347
  %v378 = vpack.c.bf16 %v349, %v349
  %v379 = vpack.c.bf16 %v352, %v352
  %v380 = vpack.c.bf16 %v354, %v354
  %v381 = vpack.c.bf16 %v357, %v357
  %v382 = vpack.c.bf16 %v359, %v359
  %v383 = vpack.c.bf16 %v362, %v362
  %v384 = vpack.c.bf16 %v364, %v364
  %v385 = vpack.c.bf16 %v367, %v367
  %v386 = vpack.c.bf16 %v369, %v369
  %387 = vst [vmem:[#allocation2] sm:$0xf] %v371
  %388 = vst [vmem:[#allocation2 + $0x8] sm:$0xf] %v372
  %389 = vst [vmem:[#allocation2 + $0x10] sm:$0xf] %v373
  %390 = vst [vmem:[#allocation2 + $0x18] sm:$0xf] %v374
  %391 = vst [vmem:[#allocation2 + $0x20] sm:$0xf] %v375
  %392 = vst [vmem:[#allocation2 + $0x28] sm:$0xf] %v376
  %393 = vst [vmem:[#allocation2 + $0x30] sm:$0xf] %v377
  %394 = vst [vmem:[#allocation2 + $0x38] sm:$0xf] %v378
  %395 = vst [vmem:[#allocation2 + $0x40] sm:$0xf] %v379
  %396 = vst [vmem:[#allocation2 + $0x48] sm:$0xf] %v380
  %397 = vst [vmem:[#allocation2 + $0x50] sm:$0xf] %v381
  %398 = vst [vmem:[#allocation2 + $0x58] sm:$0xf] %v382
  %399 = vst [vmem:[#allocation2 + $0x60] sm:$0xf] %v383
  %400 = vst [vmem:[#allocation2 + $0x68] sm:$0xf] %v384
  %401 = vst [vmem:[#allocation2 + $0x70] sm:$0xf] %v385
  %402 = vst [vmem:[#allocation2 + $0x78] sm:$0xf] %v386
  %v403 = vld [vmem:[%s1] sm:$0xff]
  %v404 = vld [vmem:[%s1 + $0x8] sm:$0xff]
  %v405 = vld [vmem:[%s1 + $0x10] sm:$0xff]
  %v406 = vld [vmem:[%s1 + $0x18] sm:$0xff]
  %v407 = vld [vmem:[%s1 + $0x20] sm:$0xff]
  %v408 = vld [vmem:[%s1 + $0x28] sm:$0xff]
  %v409 = vld [vmem:[%s1 + $0x30] sm:$0xff]
  %v410 = vld [vmem:[%s1 + $0x38] sm:$0xff]
  %v411 = vld [vmem:[%s1 + $0x40] sm:$0xff]
  %v412 = vld [vmem:[%s1 + $0x48] sm:$0xff]
  %v413 = vld [vmem:[%s3] sm:$0xf]
  %v414 = vld [vmem:[%s3 + $0x4] sm:$0xf]
  %v415 = vld [vmem:[%s3 + $0x8] sm:$0xf]
  %v416 = vld [vmem:[%s3 + $0xc] sm:$0xf]
  %v417 = vld [vmem:[%s3 + $0x10] sm:$0xf]
  %v418 = vld [vmem:[%s3 + $0x14] sm:$0xf]
  %v419 = vld [vmem:[%s3 + $0x18] sm:$0xf]
  %v420 = vld [vmem:[%s3 + $0x1c] sm:$0xf]
  %v421 = vld [vmem:[%s3 + $0x20] sm:$0xf]
  %v422 = vld [vmem:[%s3 + $0x24] sm:$0xf]
  %v423 = vld [vmem:[%s3 + $0x28] sm:$0xf]
  %v424 = vld [vmem:[%s3 + $0x2c] sm:$0xf]
  %v425 = vld [vmem:[%s3 + $0x30] sm:$0xf]
  %v426 = vld [vmem:[%s3 + $0x34] sm:$0xf]
  %v427 = vld [vmem:[%s3 + $0x38] sm:$0xf]
  %v428 = vld [vmem:[%s3 + $0x3c] sm:$0xf]
  %v429 = vld [vmem:[%s3 + $0x40] sm:$0xf]
  %v430 = vld [vmem:[%s3 + $0x44] sm:$0xf]
  %v431 = vld [vmem:[%s3 + $0x48] sm:$0xf]
  %v432 = vld [vmem:[%s3 + $0x4c] sm:$0xf]
  %v433 = vld [vmem:[%s3 + $0x50] sm:$0xf]
  %v434 = vld [vmem:[%s3 + $0x54] sm:$0xf]
  %v435 = vld [vmem:[%s3 + $0x58] sm:$0xf]
  %v436 = vld [vmem:[%s3 + $0x5c] sm:$0xf]
  %v437 = vld [vmem:[%s3 + $0x60] sm:$0x3]
  %v448 = vunpack.c.l.b16 %v403
  %v449 = vunpack.c.h.b16 %v403
  %v450 = vunpack.c.l.b16 %v404
  %v451 = vunpack.c.h.b16 %v404
  %v452 = vunpack.c.l.b16 %v405
  %v453 = vunpack.c.h.b16 %v405
  %v454 = vunpack.c.l.b16 %v406
  %v455 = vunpack.c.h.b16 %v406
  %v456 = vunpack.c.l.b16 %v407
  %v457 = vunpack.c.h.b16 %v407
  %v458 = vunpack.c.l.b16 %v408
  %v459 = vunpack.c.h.b16 %v408
  %v460 = vunpack.c.l.b16 %v409
  %v461 = vunpack.c.h.b16 %v409
  %v462 = vunpack.c.l.b16 %v410
  %v463 = vunpack.c.h.b16 %v410
  %v464 = vunpack.c.l.b16 %v411
  %v465 = vunpack.c.h.b16 %v411
  %v466 = vunpack.c.l.b16 %v412
  %v467 = vunpack.c.h.b16 %v412
  %v468 = vpack.c.b16 %v450, %v448
  %v469 = vpack.c.b16 %v451, %v449
  %v470 = vpack.c.b16 %v454, %v452
  %v471 = vpack.c.b16 %v455, %v453
  %v472 = vpack.c.b16 %v458, %v456
  %v473 = vpack.c.b16 %v459, %v457
  %v474 = vpack.c.b16 %v462, %v460
  %v475 = vpack.c.b16 %v463, %v461
  %v476 = vpack.c.b16 %v466, %v464
  %v477 = vpack.c.b16 %v467, %v465
  %v508 = vunpack.c.l.b16 %v413
  %v509 = vunpack.c.l.b16 %v414
  %v510 = vunpack.c.l.b16 %v415
  %v511 = vunpack.c.l.b16 %v416
  %v512 = vunpack.c.l.b16 %v417
  %v513 = vunpack.c.l.b16 %v418
  %v514 = vunpack.c.l.b16 %v419
  %v515 = vunpack.c.l.b16 %v420
  %v516 = vunpack.c.l.b16 %v421
  %v517 = vunpack.c.l.b16 %v422
  %v518 = vunpack.c.l.b16 %v423
  %v519 = vunpack.c.l.b16 %v424
  %v520 = vunpack.c.l.b16 %v425
  %v521 = vunpack.c.l.b16 %v426
  %v522 = vunpack.c.l.b16 %v427
  %v523 = vunpack.c.l.b16 %v428
  %v524 = vunpack.c.l.b16 %v429
  %v525 = vunpack.c.l.b16 %v430
  %v526 = vunpack.c.l.b16 %v431
  %v527 = vunpack.c.l.b16 %v432
  %v528 = vunpack.c.l.b16 %v433
  %v529 = vunpack.c.l.b16 %v434
  %v530 = vunpack.c.l.b16 %v435
  %v531 = vunpack.c.l.b16 %v436
  %v532 = vunpack.c.l.b16 %v437
  %v533 = vpack.c.b16 %v509, %v508
  %v534 = vpack.c.b16 %v511, %v510
  %v535 = vpack.c.b16 %v513, %v512
  %v536 = vpack.c.b16 %v515, %v514
  %v537 = vpack.c.b16 %v517, %v516
  %v538 = vpack.c.b16 %v519, %v518
  %v539 = vpack.c.b16 %v521, %v520
  %v540 = vpack.c.b16 %v523, %v522
  %v541 = vpack.c.b16 %v525, %v524
  %v542 = vpack.c.b16 %v527, %v526
  %v543 = vpack.c.b16 %v529, %v528
  %v544 = vpack.c.b16 %v531, %v530
  %v545 = vpack.c.b16 %v532, %v532
  %v559 = vsel %vm244, %v469, 0
  %v562 = vsel %vm244, %v471, 0
  %v565 = vsel %vm244, %v473, 0
  %v568 = vsel %vm244, %v475, 0
  %v571 = vsel %vm244, %v477, 0
  %v574 = vsel %vm269, %v545, 0
  %576 = vmatpush.bf16.msra.mxu0 %v540
  %577 = vmatpush.bf16.msra.mxu0 %v539
  %578 = vmatpush.bf16.msra.mxu0 %v538
  %579 = vmatpush.bf16.msra.mxu0 %v537
  %580 = vmatpush.bf16.msra.mxu0 %v536
  %581 = vmatpush.bf16.msra.mxu0 %v535
  %582 = vmatpush.bf16.msra.mxu0 %v534
  %583 = vmatpush.bf16.msra.mxu0 %v533
  %584 = vmatmul.bf16.gmra.mxu0 %v468
  %v585 = vpop.f32.mrf.mxu0
  %v586 = vadd.f32 0.0, %v585
  %v587 = vpop.f32.mrf.mxu0
  %v588 = vadd.f32 0.0, %v587
  %589 = vmatmul.bf16.gmra.mxu0 %v470
  %v590 = vpop.f32.mrf.mxu0
  %v591 = vadd.f32 0.0, %v590
  %v592 = vpop.f32.mrf.mxu0
  %v593 = vadd.f32 0.0, %v592
  %594 = vmatmul.bf16.gmra.mxu0 %v472
  %v595 = vpop.f32.mrf.mxu0
  %v596 = vadd.f32 0.0, %v595
  %v597 = vpop.f32.mrf.mxu0
  %v598 = vadd.f32 0.0, %v597
  %599 = vmatmul.bf16.gmra.mxu0 %v474
  %v600 = vpop.f32.mrf.mxu0
  %v601 = vadd.f32 0.0, %v600
  %v602 = vpop.f32.mrf.mxu0
  %v603 = vadd.f32 0.0, %v602
  %604 = vmatmul.bf16.gmra.mxu0 %v476
  %v605 = vpop.f32.mrf.mxu0
  %v606 = vadd.f32 0.0, %v605
  %v607 = vpop.f32.mrf.mxu0
  %v608 = vadd.f32 0.0, %v607
  %609 = vdwg.mxu0
  %610 = vmatpush.bf16.msra.mxu0 0
  %611 = vmatpush.bf16.msra.mxu0 0
  %612 = vmatpush.bf16.msra.mxu0 0
  %613 = vmatpush.bf16.msra.mxu0 %v574
  %614 = vmatpush.bf16.msra.mxu0 %v544
  %615 = vmatpush.bf16.msra.mxu0 %v543
  %616 = vmatpush.bf16.msra.mxu0 %v542
  %617 = vmatpush.bf16.msra.mxu0 %v541
  %618 = vmatmul.bf16.gmra.mxu0 %v559
  %v619 = vpop.f32.mrf.mxu0
  %v620 = vadd.f32 %v586, %v619
  %v621 = vpop.f32.mrf.mxu0
  %v622 = vadd.f32 %v588, %v621
  %623 = vmatmul.bf16.gmra.mxu0 %v562
  %v624 = vpop.f32.mrf.mxu0
  %v625 = vadd.f32 %v591, %v624
  %v626 = vpop.f32.mrf.mxu0
  %v627 = vadd.f32 %v593, %v626
  %628 = vmatmul.bf16.gmra.mxu0 %v565
  %v629 = vpop.f32.mrf.mxu0
  %v630 = vadd.f32 %v596, %v629
  %v631 = vpop.f32.mrf.mxu0
  %v632 = vadd.f32 %v598, %v631
  %633 = vmatmul.bf16.gmra.mxu0 %v568
  %v634 = vpop.f32.mrf.mxu0
  %v635 = vadd.f32 %v601, %v634
  %v636 = vpop.f32.mrf.mxu0
  %v637 = vadd.f32 %v603, %v636
  %638 = vmatmul.bf16.gmra.mxu0 %v571
  %v639 = vpop.f32.mrf.mxu0
  %v640 = vadd.f32 %v606, %v639
  %v641 = vpop.f32.mrf.mxu0
  %v642 = vadd.f32 %v608, %v641
  %643 = vdwg.mxu0
  %v644 = vpack.c.bf16 %v620, %v620
  %v645 = vpack.c.bf16 %v622, %v622
  %v646 = vpack.c.bf16 %v625, %v625
  %v647 = vpack.c.bf16 %v627, %v627
  %v648 = vpack.c.bf16 %v630, %v630
  %v649 = vpack.c.bf16 %v632, %v632
  %v650 = vpack.c.bf16 %v635, %v635
  %v651 = vpack.c.bf16 %v637, %v637
  %v652 = vpack.c.bf16 %v640, %v640
  %v653 = vpack.c.bf16 %v642, %v642
  %654 = vst [vmem:[#allocation3] sm:$0xf] %v644
  %655 = vst [vmem:[#allocation3 + $0x8] sm:$0xf] %v645
  %656 = vst [vmem:[#allocation3 + $0x10] sm:$0xf] %v646
  %657 = vst [vmem:[#allocation3 + $0x18] sm:$0xf] %v647
  %658 = vst [vmem:[#allocation3 + $0x20] sm:$0xf] %v648
  %659 = vst [vmem:[#allocation3 + $0x28] sm:$0xf] %v649
  %660 = vst [vmem:[#allocation3 + $0x30] sm:$0xf] %v650
  %661 = vst [vmem:[#allocation3 + $0x38] sm:$0xf] %v651
  %662 = vst [vmem:[#allocation3 + $0x40] sm:$0xf] %v652
  %663 = vst [vmem:[#allocation3 + $0x48] sm:$0xf] %v653
  %v664 = vld [vmem:[%s0 + $0x80] sm:$0xff]
  %v665 = vld [vmem:[%s0 + $0x88] sm:$0xff]
  %v666 = vld [vmem:[%s0 + $0x90] sm:$0xff]
  %v667 = vld [vmem:[%s0 + $0x98] sm:$0xff]
  %v668 = vld [vmem:[%s0 + $0xa0] sm:$0xff]
  %v669 = vld [vmem:[%s0 + $0xa8] sm:$0xff]
  %v670 = vld [vmem:[%s0 + $0xb0] sm:$0xff]
  %v671 = vld [vmem:[%s0 + $0xb8] sm:$0xff]
  %v672 = vld [vmem:[%s0 + $0xc0] sm:$0xff]
  %v673 = vld [vmem:[%s0 + $0xc8] sm:$0xff]
  %v674 = vld [vmem:[%s0 + $0xd0] sm:$0xff]
  %v675 = vld [vmem:[%s0 + $0xd8] sm:$0xff]
  %v676 = vld [vmem:[%s0 + $0xe0] sm:$0xff]
  %v677 = vld [vmem:[%s0 + $0xe8] sm:$0xff]
  %v678 = vld [vmem:[%s0 + $0xf0] sm:$0xff]
  %v679 = vld [vmem:[%s0 + $0xf8] sm:$0xff]
  %v680 = vld [vmem:[%s2] sm:$0xf]
  %v681 = vld [vmem:[%s2 + $0x4] sm:$0xf]
  %v682 = vld [vmem:[%s2 + $0x8] sm:$0xf]
  %v683 = vld [vmem:[%s2 + $0xc] sm:$0xf]
  %v684 = vld [vmem:[%s2 + $0x10] sm:$0xf]
  %v685 = vld [vmem:[%s2 + $0x14] sm:$0xf]
  %v686 = vld [vmem:[%s2 + $0x18] sm:$0xf]
  %v687 = vld [vmem:[%s2 + $0x1c] sm:$0xf]
  %v688 = vld [vmem:[%s2 + $0x20] sm:$0xf]
  %v689 = vld [vmem:[%s2 + $0x24] sm:$0xf]
  %v690 = vld [vmem:[%s2 + $0x28] sm:$0xf]
  %v691 = vld [vmem:[%s2 + $0x2c] sm:$0xf]
  %v692 = vld [vmem:[%s2 + $0x30] sm:$0xf]
  %v693 = vld [vmem:[%s2 + $0x34] sm:$0xf]
  %v694 = vld [vmem:[%s2 + $0x38] sm:$0xf]
  %v695 = vld [vmem:[%s2 + $0x3c] sm:$0xf]
  %v696 = vld [vmem:[%s2 + $0x40] sm:$0xf]
  %v697 = vld [vmem:[%s2 + $0x44] sm:$0xf]
  %v698 = vld [vmem:[%s2 + $0x48] sm:$0xf]
  %v699 = vld [vmem:[%s2 + $0x4c] sm:$0xf]
  %v700 = vld [vmem:[%s2 + $0x50] sm:$0xf]
  %v701 = vld [vmem:[%s2 + $0x54] sm:$0xf]
  %v702 = vld [vmem:[%s2 + $0x58] sm:$0xf]
  %v703 = vld [vmem:[%s2 + $0x5c] sm:$0xf]
  %v704 = vld [vmem:[%s2 + $0x60] sm:$0x3]
  %v721 = vunpack.c.l.b16 %v664
  %v722 = vunpack.c.h.b16 %v664
  %v723 = vunpack.c.l.b16 %v665
  %v724 = vunpack.c.h.b16 %v665
  %v725 = vunpack.c.l.b16 %v666
  %v726 = vunpack.c.h.b16 %v666
  %v727 = vunpack.c.l.b16 %v667
  %v728 = vunpack.c.h.b16 %v667
  %v729 = vunpack.c.l.b16 %v668
  %v730 = vunpack.c.h.b16 %v668
  %v731 = vunpack.c.l.b16 %v669
  %v732 = vunpack.c.h.b16 %v669
  %v733 = vunpack.c.l.b16 %v670
  %v734 = vunpack.c.h.b16 %v670
  %v735 = vunpack.c.l.b16 %v671
  %v736 = vunpack.c.h.b16 %v671
  %v737 = vunpack.c.l.b16 %v672
  %v738 = vunpack.c.h.b16 %v672
  %v739 = vunpack.c.l.b16 %v673
  %v740 = vunpack.c.h.b16 %v673
  %v741 = vunpack.c.l.b16 %v674
  %v742 = vunpack.c.h.b16 %v674
  %v743 = vunpack.c.l.b16 %v675
  %v744 = vunpack.c.h.b16 %v675
  %v745 = vunpack.c.l.b16 %v676
  %v746 = vunpack.c.h.b16 %v676
  %v747 = vunpack.c.l.b16 %v677
  %v748 = vunpack.c.h.b16 %v677
  %v749 = vunpack.c.l.b16 %v678
  %v750 = vunpack.c.h.b16 %v678
  %v751 = vunpack.c.l.b16 %v679
  %v752 = vunpack.c.h.b16 %v679
  %v753 = vpack.c.b16 %v723, %v721
  %v754 = vpack.c.b16 %v724, %v722
  %v755 = vpack.c.b16 %v727, %v725
  %v756 = vpack.c.b16 %v728, %v726
  %v757 = vpack.c.b16 %v731, %v729
  %v758 = vpack.c.b16 %v732, %v730
  %v759 = vpack.c.b16 %v735, %v733
  %v760 = vpack.c.b16 %v736, %v734
  %v761 = vpack.c.b16 %v739, %v737
  %v762 = vpack.c.b16 %v740, %v738
  %v763 = vpack.c.b16 %v743, %v741
  %v764 = vpack.c.b16 %v744, %v742
  %v765 = vpack.c.b16 %v747, %v745
  %v766 = vpack.c.b16 %v748, %v746
  %v767 = vpack.c.b16 %v751, %v749
  %v768 = vpack.c.b16 %v752, %v750
  %v802 = vunpack.c.l.b16 %v680
  %v803 = vunpack.c.l.b16 %v681
  %v804 = vunpack.c.l.b16 %v682
  %v805 = vunpack.c.l.b16 %v683
  %v806 = vunpack.c.l.b16 %v684
  %v807 = vunpack.c.l.b16 %v685
  %v808 = vunpack.c.l.b16 %v686
  %v809 = vunpack.c.l.b16 %v687
  %v810 = vunpack.c.l.b16 %v688
  %v811 = vunpack.c.l.b16 %v689
  %v812 = vunpack.c.l.b16 %v690
  %v813 = vunpack.c.l.b16 %v691
  %v814 = vunpack.c.l.b16 %v692
  %v815 = vunpack.c.l.b16 %v693
  %v816 = vunpack.c.l.b16 %v694
  %v817 = vunpack.c.l.b16 %v695
  %v818 = vunpack.c.l.b16 %v696
  %v819 = vunpack.c.l.b16 %v697
  %v820 = vunpack.c.l.b16 %v698
  %v821 = vunpack.c.l.b16 %v699
  %v822 = vunpack.c.l.b16 %v700
  %v823 = vunpack.c.l.b16 %v701
  %v824 = vunpack.c.l.b16 %v702
  %v825 = vunpack.c.l.b16 %v703
  %v826 = vunpack.c.l.b16 %v704
  %v827 = vpack.c.b16 %v803, %v802
  %v828 = vpack.c.b16 %v805, %v804
  %v829 = vpack.c.b16 %v807, %v806
  %v830 = vpack.c.b16 %v809, %v808
  %v831 = vpack.c.b16 %v811, %v810
  %v832 = vpack.c.b16 %v813, %v812
  %v833 = vpack.c.b16 %v815, %v814
  %v834 = vpack.c.b16 %v817, %v816
  %v835 = vpack.c.b16 %v819, %v818
  %v836 = vpack.c.b16 %v821, %v820
  %v837 = vpack.c.b16 %v823, %v822
  %v838 = vpack.c.b16 %v825, %v824
  %v839 = vpack.c.b16 %v826, %v826
  %v853 = vsel %vm244, %v754, 0
  %v856 = vsel %vm244, %v756, 0
  %v859 = vsel %vm244, %v758, 0
  %v862 = vsel %vm244, %v760, 0
  %v865 = vsel %vm244, %v762, 0
  %v868 = vsel %vm244, %v764, 0
  %v871 = vsel %vm244, %v766, 0
  %v874 = vsel %vm244, %v768, 0
  %v877 = vsel %vm269, %v839, 0
  %879 = vmatpush.bf16.msra.mxu0 %v834
  %880 = vmatpush.bf16.msra.mxu0 %v833
  %881 = vmatpush.bf16.msra.mxu0 %v832
  %882 = vmatpush.bf16.msra.mxu0 %v831
  %883 = vmatpush.bf16.msra.mxu0 %v830
  %884 = vmatpush.bf16.msra.mxu0 %v829
  %885 = vmatpush.bf16.msra.mxu0 %v828
  %886 = vmatpush.bf16.msra.mxu0 %v827
  %887 = vmatmul.bf16.gmra.mxu0 %v753
  %v888 = vpop.f32.mrf.mxu0
  %v889 = vadd.f32 0.0, %v888
  %v890 = vpop.f32.mrf.mxu0
  %v891 = vadd.f32 0.0, %v890
  %892 = vmatmul.bf16.gmra.mxu0 %v755
  %v893 = vpop.f32.mrf.mxu0
  %v894 = vadd.f32 0.0, %v893
  %v895 = vpop.f32.mrf.mxu0
  %v896 = vadd.f32 0.0, %v895
  %897 = vmatmul.bf16.gmra.mxu0 %v757
  %v898 = vpop.f32.mrf.mxu0
  %v899 = vadd.f32 0.0, %v898
  %v900 = vpop.f32.mrf.mxu0
  %v901 = vadd.f32 0.0, %v900
  %902 = vmatmul.bf16.gmra.mxu0 %v759
  %v903 = vpop.f32.mrf.mxu0
  %v904 = vadd.f32 0.0, %v903
  %v905 = vpop.f32.mrf.mxu0
  %v906 = vadd.f32 0.0, %v905
  %907 = vmatmul.bf16.gmra.mxu0 %v761
  %v908 = vpop.f32.mrf.mxu0
  %v909 = vadd.f32 0.0, %v908
  %v910 = vpop.f32.mrf.mxu0
  %v911 = vadd.f32 0.0, %v910
  %912 = vmatmul.bf16.gmra.mxu0 %v763
  %v913 = vpop.f32.mrf.mxu0
  %v914 = vadd.f32 0.0, %v913
  %v915 = vpop.f32.mrf.mxu0
  %v916 = vadd.f32 0.0, %v915
  %917 = vmatmul.bf16.gmra.mxu0 %v765
  %v918 = vpop.f32.mrf.mxu0
  %v919 = vadd.f32 0.0, %v918
  %v920 = vpop.f32.mrf.mxu0
  %v921 = vadd.f32 0.0, %v920
  %922 = vmatmul.bf16.gmra.mxu0 %v767
  %v923 = vpop.f32.mrf.mxu0
  %v924 = vadd.f32 0.0, %v923
  %v925 = vpop.f32.mrf.mxu0
  %v926 = vadd.f32 0.0, %v925
  %927 = vdwg.mxu0
  %928 = vmatpush.bf16.msra.mxu0 0
  %929 = vmatpush.bf16.msra.mxu0 0
  %930 = vmatpush.bf16.msra.mxu0 0
  %931 = vmatpush.bf16.msra.mxu0 %v877
  %932 = vmatpush.bf16.msra.mxu0 %v838
  %933 = vmatpush.bf16.msra.mxu0 %v837
  %934 = vmatpush.bf16.msra.mxu0 %v836
  %935 = vmatpush.bf16.msra.mxu0 %v835
  %936 = vmatmul.bf16.gmra.mxu0 %v853
  %v937 = vpop.f32.mrf.mxu0
  %v938 = vadd.f32 %v889, %v937
  %v939 = vpop.f32.mrf.mxu0
  %v940 = vadd.f32 %v891, %v939
  %941 = vmatmul.bf16.gmra.mxu0 %v856
  %v942 = vpop.f32.mrf.mxu0
  %v943 = vadd.f32 %v894, %v942
  %v944 = vpop.f32.mrf.mxu0
  %v945 = vadd.f32 %v896, %v944
  %946 = vmatmul.bf16.gmra.mxu0 %v859
  %v947 = vpop.f32.mrf.mxu0
  %v948 = vadd.f32 %v899, %v947
  %v949 = vpop.f32.mrf.mxu0
  %v950 = vadd.f32 %v901, %v949
  %951 = vmatmul.bf16.gmra.mxu0 %v862
  %v952 = vpop.f32.mrf.mxu0
  %v953 = vadd.f32 %v904, %v952
  %v954 = vpop.f32.mrf.mxu0
  %v955 = vadd.f32 %v906, %v954
  %956 = vmatmul.bf16.gmra.mxu0 %v865
  %v957 = vpop.f32.mrf.mxu0
  %v958 = vadd.f32 %v909, %v957
  %v959 = vpop.f32.mrf.mxu0
  %v960 = vadd.f32 %v911, %v959
  %961 = vmatmul.bf16.gmra.mxu0 %v868
  %v962 = vpop.f32.mrf.mxu0
  %v963 = vadd.f32 %v914, %v962
  %v964 = vpop.f32.mrf.mxu0
  %v965 = vadd.f32 %v916, %v964
  %966 = vmatmul.bf16.gmra.mxu0 %v871
  %v967 = vpop.f32.mrf.mxu0
  %v968 = vadd.f32 %v919, %v967
  %v969 = vpop.f32.mrf.mxu0
  %v970 = vadd.f32 %v921, %v969
  %971 = vmatmul.bf16.gmra.mxu0 %v874
  %v972 = vpop.f32.mrf.mxu0
  %v973 = vadd.f32 %v924, %v972
  %v974 = vpop.f32.mrf.mxu0
  %v975 = vadd.f32 %v926, %v974
  %976 = vdwg.mxu0
  %v977 = vpack.c.bf16 %v938, %v938
  %v978 = vpack.c.bf16 %v940, %v940
  %v979 = vpack.c.bf16 %v943, %v943
  %v980 = vpack.c.bf16 %v945, %v945
  %v981 = vpack.c.bf16 %v948, %v948
  %v982 = vpack.c.bf16 %v950, %v950
  %v983 = vpack.c.bf16 %v953, %v953
  %v984 = vpack.c.bf16 %v955, %v955
  %v985 = vpack.c.bf16 %v958, %v958
  %v986 = vpack.c.bf16 %v960, %v960
  %v987 = vpack.c.bf16 %v963, %v963
  %v988 = vpack.c.bf16 %v965, %v965
  %v989 = vpack.c.bf16 %v968, %v968
  %v990 = vpack.c.bf16 %v970, %v970
  %v991 = vpack.c.bf16 %v973, %v973
  %v992 = vpack.c.bf16 %v975, %v975
  %993 = vst [vmem:[#allocation2 + $0x4] sm:$0xf] %v977
  %994 = vst [vmem:[#allocation2 + $0xc] sm:$0xf] %v978
  %995 = vst [vmem:[#allocation2 + $0x14] sm:$0xf] %v979
  %996 = vst [vmem:[#allocation2 + $0x1c] sm:$0xf] %v980
  %997 = vst [vmem:[#allocation2 + $0x24] sm:$0xf] %v981
  %998 = vst [vmem:[#allocation2 + $0x2c] sm:$0xf] %v982
  %999 = vst [vmem:[#allocation2 + $0x34] sm:$0xf] %v983
  %1000 = vst [vmem:[#allocation2 + $0x3c] sm:$0xf] %v984
  %1001 = vst [vmem:[#allocation2 + $0x44] sm:$0xf] %v985
  %1002 = vst [vmem:[#allocation2 + $0x4c] sm:$0xf] %v986
  %1003 = vst [vmem:[#allocation2 + $0x54] sm:$0xf] %v987
  %1004 = vst [vmem:[#allocation2 + $0x5c] sm:$0xf] %v988
  %1005 = vst [vmem:[#allocation2 + $0x64] sm:$0xf] %v989
  %1006 = vst [vmem:[#allocation2 + $0x6c] sm:$0xf] %v990
  %1007 = vst [vmem:[#allocation2 + $0x74] sm:$0xf] %v991
  %1008 = vst [vmem:[#allocation2 + $0x7c] sm:$0xf] %v992
  %v1009 = vld [vmem:[%s1 + $0x50] sm:$0xff]
  %v1010 = vld [vmem:[%s1 + $0x58] sm:$0xff]
  %v1011 = vld [vmem:[%s1 + $0x60] sm:$0xff]
  %v1012 = vld [vmem:[%s1 + $0x68] sm:$0xff]
  %v1013 = vld [vmem:[%s1 + $0x70] sm:$0xff]
  %v1014 = vld [vmem:[%s1 + $0x78] sm:$0xff]
  %v1015 = vld [vmem:[%s1 + $0x80] sm:$0xff]
  %v1016 = vld [vmem:[%s1 + $0x88] sm:$0xff]
  %v1017 = vld [vmem:[%s1 + $0x90] sm:$0xff]
  %v1018 = vld [vmem:[%s1 + $0x98] sm:$0xff]
  %v1019 = vld [vmem:[%s3] sm:$0xf]
  %v1020 = vld [vmem:[%s3 + $0x4] sm:$0xf]
  %v1021 = vld [vmem:[%s3 + $0x8] sm:$0xf]
  %v1022 = vld [vmem:[%s3 + $0xc] sm:$0xf]
  %v1023 = vld [vmem:[%s3 + $0x10] sm:$0xf]
  %v1024 = vld [vmem:[%s3 + $0x14] sm:$0xf]
  %v1025 = vld [vmem:[%s3 + $0x18] sm:$0xf]
  %v1026 = vld [vmem:[%s3 + $0x1c] sm:$0xf]
  %v1027 = vld [vmem:[%s3 + $0x20] sm:$0xf]
  %v1028 = vld [vmem:[%s3 + $0x24] sm:$0xf]
  %v1029 = vld [vmem:[%s3 + $0x28] sm:$0xf]
  %v1030 = vld [vmem:[%s3 + $0x2c] sm:$0xf]
  %v1031 = vld [vmem:[%s3 + $0x30] sm:$0xf]
  %v1032 = vld [vmem:[%s3 + $0x34] sm:$0xf]
  %v1033 = vld [vmem:[%s3 + $0x38] sm:$0xf]
  %v1034 = vld [vmem:[%s3 + $0x3c] sm:$0xf]
  %v1035 = vld [vmem:[%s3 + $0x40] sm:$0xf]
  %v1036 = vld [vmem:[%s3 + $0x44] sm:$0xf]
  %v1037 = vld [vmem:[%s3 + $0x48] sm:$0xf]
  %v1038 = vld [vmem:[%s3 + $0x4c] sm:$0xf]
  %v1039 = vld [vmem:[%s3 + $0x50] sm:$0xf]
  %v1040 = vld [vmem:[%s3 + $0x54] sm:$0xf]
  %v1041 = vld [vmem:[%s3 + $0x58] sm:$0xf]
  %v1042 = vld [vmem:[%s3 + $0x5c] sm:$0xf]
  %v1043 = vld [vmem:[%s3 + $0x60] sm:$0x3]
  %v1054 = vunpack.c.l.b16 %v1009
  %v1055 = vunpack.c.h.b16 %v1009
  %v1056 = vunpack.c.l.b16 %v1010
  %v1057 = vunpack.c.h.b16 %v1010
  %v1058 = vunpack.c.l.b16 %v1011
  %v1059 = vunpack.c.h.b16 %v1011
  %v1060 = vunpack.c.l.b16 %v1012
  %v1061 = vunpack.c.h.b16 %v1012
  %v1062 = vunpack.c.l.b16 %v1013
  %v1063 = vunpack.c.h.b16 %v1013
  %v1064 = vunpack.c.l.b16 %v1014
  %v1065 = vunpack.c.h.b16 %v1014
  %v1066 = vunpack.c.l.b16 %v1015
  %v1067 = vunpack.c.h.b16 %v1015
  %v1068 = vunpack.c.l.b16 %v1016
  %v1069 = vunpack.c.h.b16 %v1016
  %v1070 = vunpack.c.l.b16 %v1017
  %v1071 = vunpack.c.h.b16 %v1017
  %v1072 = vunpack.c.l.b16 %v1018
  %v1073 = vunpack.c.h.b16 %v1018
  %v1074 = vpack.c.b16 %v1056, %v1054
  %v1075 = vpack.c.b16 %v1057, %v1055
  %v1076 = vpack.c.b16 %v1060, %v1058
  %v1077 = vpack.c.b16 %v1061, %v1059
  %v1078 = vpack.c.b16 %v1064, %v1062
  %v1079 = vpack.c.b16 %v1065, %v1063
  %v1080 = vpack.c.b16 %v1068, %v1066
  %v1081 = vpack.c.b16 %v1069, %v1067
  %v1082 = vpack.c.b16 %v1072, %v1070
  %v1083 = vpack.c.b16 %v1073, %v1071
  %v1114 = vunpack.c.l.b16 %v1019
  %v1115 = vunpack.c.l.b16 %v1020
  %v1116 = vunpack.c.l.b16 %v1021
  %v1117 = vunpack.c.l.b16 %v1022
  %v1118 = vunpack.c.l.b16 %v1023
  %v1119 = vunpack.c.l.b16 %v1024
  %v1120 = vunpack.c.l.b16 %v1025
  %v1121 = vunpack.c.l.b16 %v1026
  %v1122 = vunpack.c.l.b16 %v1027
  %v1123 = vunpack.c.l.b16 %v1028
  %v1124 = vunpack.c.l.b16 %v1029
  %v1125 = vunpack.c.l.b16 %v1030
  %v1126 = vunpack.c.l.b16 %v1031
  %v1127 = vunpack.c.l.b16 %v1032
  %v1128 = vunpack.c.l.b16 %v1033
  %v1129 = vunpack.c.l.b16 %v1034
  %v1130 = vunpack.c.l.b16 %v1035
  %v1131 = vunpack.c.l.b16 %v1036
  %v1132 = vunpack.c.l.b16 %v1037
  %v1133 = vunpack.c.l.b16 %v1038
  %v1134 = vunpack.c.l.b16 %v1039
  %v1135 = vunpack.c.l.b16 %v1040
  %v1136 = vunpack.c.l.b16 %v1041
  %v1137 = vunpack.c.l.b16 %v1042
  %v1138 = vunpack.c.l.b16 %v1043
  %v1139 = vpack.c.b16 %v1115, %v1114
  %v1140 = vpack.c.b16 %v1117, %v1116
  %v1141 = vpack.c.b16 %v1119, %v1118
  %v1142 = vpack.c.b16 %v1121, %v1120
  %v1143 = vpack.c.b16 %v1123, %v1122
  %v1144 = vpack.c.b16 %v1125, %v1124
  %v1145 = vpack.c.b16 %v1127, %v1126
  %v1146 = vpack.c.b16 %v1129, %v1128
  %v1147 = vpack.c.b16 %v1131, %v1130
  %v1148 = vpack.c.b16 %v1133, %v1132
  %v1149 = vpack.c.b16 %v1135, %v1134
  %v1150 = vpack.c.b16 %v1137, %v1136
  %v1151 = vpack.c.b16 %v1138, %v1138
  %v1165 = vsel %vm244, %v1075, 0
  %v1168 = vsel %vm244, %v1077, 0
  %v1171 = vsel %vm244, %v1079, 0
  %v1174 = vsel %vm244, %v1081, 0
  %v1177 = vsel %vm244, %v1083, 0
  %v1180 = vsel %vm269, %v1151, 0
  %1182 = vmatpush.bf16.msra.mxu0 %v1146
  %1183 = vmatpush.bf16.msra.mxu0 %v1145
  %1184 = vmatpush.bf16.msra.mxu0 %v1144
  %1185 = vmatpush.bf16.msra.mxu0 %v1143
  %1186 = vmatpush.bf16.msra.mxu0 %v1142
  %1187 = vmatpush.bf16.msra.mxu0 %v1141
  %1188 = vmatpush.bf16.msra.mxu0 %v1140
  %1189 = vmatpush.bf16.msra.mxu0 %v1139
  %1190 = vmatmul.bf16.gmra.mxu0 %v1074
  %v1191 = vpop.f32.mrf.mxu0
  %v1192 = vadd.f32 0.0, %v1191
  %v1193 = vpop.f32.mrf.mxu0
  %v1194 = vadd.f32 0.0, %v1193
  %1195 = vmatmul.bf16.gmra.mxu0 %v1076
  %v1196 = vpop.f32.mrf.mxu0
  %v1197 = vadd.f32 0.0, %v1196
  %v1198 = vpop.f32.mrf.mxu0
  %v1199 = vadd.f32 0.0, %v1198
  %1200 = vmatmul.bf16.gmra.mxu0 %v1078
  %v1201 = vpop.f32.mrf.mxu0
  %v1202 = vadd.f32 0.0, %v1201
  %v1203 = vpop.f32.mrf.mxu0
  %v1204 = vadd.f32 0.0, %v1203
  %1205 = vmatmul.bf16.gmra.mxu0 %v1080
  %v1206 = vpop.f32.mrf.mxu0
  %v1207 = vadd.f32 0.0, %v1206
  %v1208 = vpop.f32.mrf.mxu0
  %v1209 = vadd.f32 0.0, %v1208
  %1210 = vmatmul.bf16.gmra.mxu0 %v1082
  %v1211 = vpop.f32.mrf.mxu0
  %v1212 = vadd.f32 0.0, %v1211
  %v1213 = vpop.f32.mrf.mxu0
  %v1214 = vadd.f32 0.0, %v1213
  %1215 = vdwg.mxu0
  %1216 = vmatpush.bf16.msra.mxu0 0
  %1217 = vmatpush.bf16.msra.mxu0 0
  %1218 = vmatpush.bf16.msra.mxu0 0
  %1219 = vmatpush.bf16.msra.mxu0 %v1180
  %1220 = vmatpush.bf16.msra.mxu0 %v1150
  %1221 = vmatpush.bf16.msra.mxu0 %v1149
  %1222 = vmatpush.bf16.msra.mxu0 %v1148
  %1223 = vmatpush.bf16.msra.mxu0 %v1147
  %1224 = vmatmul.bf16.gmra.mxu0 %v1165
  %v1225 = vpop.f32.mrf.mxu0
  %v1226 = vadd.f32 %v1192, %v1225
  %v1227 = vpop.f32.mrf.mxu0
  %v1228 = vadd.f32 %v1194, %v1227
  %1229 = vmatmul.bf16.gmra.mxu0 %v1168
  %v1230 = vpop.f32.mrf.mxu0
  %v1231 = vadd.f32 %v1197, %v1230
  %v1232 = vpop.f32.mrf.mxu0
  %v1233 = vadd.f32 %v1199, %v1232
  %1234 = vmatmul.bf16.gmra.mxu0 %v1171
  %v1235 = vpop.f32.mrf.mxu0
  %v1236 = vadd.f32 %v1202, %v1235
  %v1237 = vpop.f32.mrf.mxu0
  %v1238 = vadd.f32 %v1204, %v1237
  %1239 = vmatmul.bf16.gmra.mxu0 %v1174
  %v1240 = vpop.f32.mrf.mxu0
  %v1241 = vadd.f32 %v1207, %v1240
  %v1242 = vpop.f32.mrf.mxu0
  %v1243 = vadd.f32 %v1209, %v1242
  %1244 = vmatmul.bf16.gmra.mxu0 %v1177
  %v1245 = vpop.f32.mrf.mxu0
  %v1246 = vadd.f32 %v1212, %v1245
  %v1247 = vpop.f32.mrf.mxu0
  %v1248 = vadd.f32 %v1214, %v1247
  %1249 = vdwg.mxu0
  %v1250 = vpack.c.bf16 %v1226, %v1226
  %v1251 = vpack.c.bf16 %v1228, %v1228
  %v1252 = vpack.c.bf16 %v1231, %v1231
  %v1253 = vpack.c.bf16 %v1233, %v1233
  %v1254 = vpack.c.bf16 %v1236, %v1236
  %v1255 = vpack.c.bf16 %v1238, %v1238
  %v1256 = vpack.c.bf16 %v1241, %v1241
  %v1257 = vpack.c.bf16 %v1243, %v1243
  %v1258 = vpack.c.bf16 %v1246, %v1246
  %v1259 = vpack.c.bf16 %v1248, %v1248
  %1260 = vst [vmem:[#allocation3 + $0x4] sm:$0xf] %v1250
  %1261 = vst [vmem:[#allocation3 + $0xc] sm:$0xf] %v1251
  %1262 = vst [vmem:[#allocation3 + $0x14] sm:$0xf] %v1252
  %1263 = vst [vmem:[#allocation3 + $0x1c] sm:$0xf] %v1253
  %1264 = vst [vmem:[#allocation3 + $0x24] sm:$0xf] %v1254
  %1265 = vst [vmem:[#allocation3 + $0x2c] sm:$0xf] %v1255
  %1266 = vst [vmem:[#allocation3 + $0x34] sm:$0xf] %v1256
  %1267 = vst [vmem:[#allocation3 + $0x3c] sm:$0xf] %v1257
  %1268 = vst [vmem:[#allocation3 + $0x44] sm:$0xf] %v1258
  %1269 = vst [vmem:[#allocation3 + $0x4c] sm:$0xf] %v1259
  %v1270 = vld [vmem:[%s4] sm:$0xf]
  %v1271 = vld [vmem:[%s4 + $0x4] sm:$0xf]
  %v1272 = vld [vmem:[%s4 + $0x8] sm:$0xf]
  %v1273 = vld [vmem:[%s4 + $0xc] sm:$0xf]
  %v1274 = vld [vmem:[%s4 + $0x10] sm:$0xf]
  %v1275 = vld [vmem:[%s4 + $0x14] sm:$0xf]
  %v1276 = vld [vmem:[%s4 + $0x18] sm:$0xf]
  %v1277 = vld [vmem:[%s4 + $0x1c] sm:$0xf]
  %v1278 = vld [vmem:[%s4 + $0x20] sm:$0xf]
  %v1279 = vld [vmem:[%s4 + $0x24] sm:$0xf]
  %v1280 = vld [vmem:[%s4 + $0x28] sm:$0xf]
  %v1281 = vld [vmem:[%s4 + $0x2c] sm:$0xf]
  %v1282 = vld [vmem:[%s4 + $0x30] sm:$0xf]
  %v1283 = vld [vmem:[%s4 + $0x34] sm:$0xf]
  %v1284 = vld [vmem:[%s4 + $0x38] sm:$0xf]
  %v1285 = vld [vmem:[%s4 + $0x3c] sm:$0xf]
  %v1286 = vld [vmem:[%s4 + $0x40] sm:$0xf]
  %v1287 = vld [vmem:[%s4 + $0x44] sm:$0xf]
  %v1288 = vld [vmem:[%s4 + $0x48] sm:$0xf]
  %v1289 = vld [vmem:[%s4 + $0x4c] sm:$0xf]
  %v1290 = vld [vmem:[#allocation2] sm:$0xff]
  %v1291 = vld [vmem:[#allocation2 + $0x8] sm:$0xff]
  %v1292 = vld [vmem:[#allocation2 + $0x10] sm:$0xff]
  %v1293 = vld [vmem:[#allocation2 + $0x18] sm:$0xff]
  %v1294 = vld [vmem:[#allocation2 + $0x20] sm:$0xff]
  %v1295 = vld [vmem:[#allocation2 + $0x28] sm:$0xff]
  %v1296 = vld [vmem:[#allocation2 + $0x30] sm:$0xff]
  %v1297 = vld [vmem:[#allocation2 + $0x38] sm:$0xff]
  %v1298 = vld [vmem:[#allocation2 + $0x40] sm:$0xff]
  %v1299 = vld [vmem:[#allocation2 + $0x48] sm:$0xff]
  %v1300 = vld [vmem:[#allocation2 + $0x50] sm:$0xff]
  %v1301 = vld [vmem:[#allocation2 + $0x58] sm:$0xff]
  %v1302 = vld [vmem:[#allocation2 + $0x60] sm:$0xff]
  %v1303 = vld [vmem:[#allocation2 + $0x68] sm:$0xff]
  %v1304 = vld [vmem:[#allocation2 + $0x70] sm:$0xff]
  %v1305 = vld [vmem:[#allocation2 + $0x78] sm:$0xff]
  %v1306 = vld [vmem:[%s5] sm:$0xff]
  %v1307 = vld [vmem:[%s5 + $0x8] sm:$0xff]
  %v1308 = vld [vmem:[%s5 + $0x10] sm:$0xff]
  %v1309 = vld [vmem:[%s5 + $0x18] sm:$0xff]
  %v1310 = vld [vmem:[%s5 + $0x20] sm:$0xff]
  %v1311 = vld [vmem:[%s5 + $0x28] sm:$0xff]
  %v1312 = vld [vmem:[%s5 + $0x30] sm:$0xff]
  %v1313 = vld [vmem:[%s5 + $0x38] sm:$0xff]
  %v1314 = vld [vmem:[%s5 + $0x40] sm:$0xff]
  %v1315 = vld [vmem:[%s5 + $0x48] sm:$0xff]
  %v1316 = vld [vmem:[%s5 + $0x50] sm:$0xff]
  %v1317 = vld [vmem:[%s5 + $0x58] sm:$0xff]
  %v1318 = vld [vmem:[%s5 + $0x60] sm:$0xff]
  %v1319 = vld [vmem:[%s5 + $0x68] sm:$0xff]
  %v1320 = vld [vmem:[%s5 + $0x70] sm:$0xff]
  %v1321 = vld [vmem:[%s5 + $0x78] sm:$0xff]
  %v1322 = vld [vmem:[%s5 + $0x80] sm:$0xff]
  %v1323 = vld [vmem:[%s5 + $0x88] sm:$0xff]
  %v1324 = vld [vmem:[%s5 + $0x90] sm:$0xff]
  %v1325 = vld [vmem:[%s5 + $0x98] sm:$0xff]
  %1327 = vset.pattern.permute.xlu0 0
  %1328 = vperm.xlu0 %1327, %v1306
  %v1329 = vpop.permute.xlu0 %1328
  %1332 = vset.pattern.permute.xlu0 0
  %1333 = vperm.xlu0 %1332, %v1307
  %v1334 = vpop.permute.xlu0 %1333
  %1337 = vset.pattern.permute.xlu0 0
  %1338 = vperm.xlu0 %1337, %v1308
  %v1339 = vpop.permute.xlu0 %1338
  %1342 = vset.pattern.permute.xlu0 0
  %1343 = vperm.xlu0 %1342, %v1309
  %v1344 = vpop.permute.xlu0 %1343
  %1347 = vset.pattern.permute.xlu0 0
  %1348 = vperm.xlu0 %1347, %v1310
  %v1349 = vpop.permute.xlu0 %1348
  %1352 = vset.pattern.permute.xlu0 0
  %1353 = vperm.xlu0 %1352, %v1311
  %v1354 = vpop.permute.xlu0 %1353
  %1357 = vset.pattern.permute.xlu0 0
  %1358 = vperm.xlu0 %1357, %v1312
  %v1359 = vpop.permute.xlu0 %1358
  %1362 = vset.pattern.permute.xlu0 0
  %1363 = vperm.xlu0 %1362, %v1313
  %v1364 = vpop.permute.xlu0 %1363
  %1367 = vset.pattern.permute.xlu0 0
  %1368 = vperm.xlu0 %1367, %v1314
  %v1369 = vpop.permute.xlu0 %1368
  %1372 = vset.pattern.permute.xlu0 0
  %1373 = vperm.xlu0 %1372, %v1315
  %v1374 = vpop.permute.xlu0 %1373
  %1377 = vset.pattern.permute.xlu0 0
  %1378 = vperm.xlu0 %1377, %v1316
  %v1379 = vpop.permute.xlu0 %1378
  %1382 = vset.pattern.permute.xlu0 0
  %1383 = vperm.xlu0 %1382, %v1317
  %v1384 = vpop.permute.xlu0 %1383
  %1387 = vset.pattern.permute.xlu0 0
  %1388 = vperm.xlu0 %1387, %v1318
  %v1389 = vpop.permute.xlu0 %1388
  %1392 = vset.pattern.permute.xlu0 0
  %1393 = vperm.xlu0 %1392, %v1319
  %v1394 = vpop.permute.xlu0 %1393
  %1397 = vset.pattern.permute.xlu0 0
  %1398 = vperm.xlu0 %1397, %v1320
  %v1399 = vpop.permute.xlu0 %1398
  %1402 = vset.pattern.permute.xlu0 0
  %1403 = vperm.xlu0 %1402, %v1321
  %v1404 = vpop.permute.xlu0 %1403
  %1407 = vset.pattern.permute.xlu0 0
  %1408 = vperm.xlu0 %1407, %v1322
  %v1409 = vpop.permute.xlu0 %1408
  %1412 = vset.pattern.permute.xlu0 0
  %1413 = vperm.xlu0 %1412, %v1323
  %v1414 = vpop.permute.xlu0 %1413
  %1417 = vset.pattern.permute.xlu0 0
  %1418 = vperm.xlu0 %1417, %v1324
  %v1419 = vpop.permute.xlu0 %1418
  %1422 = vset.pattern.permute.xlu0 0
  %1423 = vperm.xlu0 %1422, %v1325
  %v1424 = vpop.permute.xlu0 %1423
  %v1446 = vunpack.c.l.b16 %v1270
  %v1447 = vunpack.c.l.b16 %v1271
  %v1448 = vunpack.c.l.b16 %v1272
  %v1449 = vunpack.c.l.b16 %v1273
  %v1450 = vunpack.c.l.b16 %v1274
  %v1451 = vunpack.c.l.b16 %v1275
  %v1452 = vunpack.c.l.b16 %v1276
  %v1453 = vunpack.c.l.b16 %v1277
  %v1454 = vunpack.c.l.b16 %v1278
  %v1455 = vunpack.c.l.b16 %v1279
  %v1456 = vunpack.c.l.b16 %v1280
  %v1457 = vunpack.c.l.b16 %v1281
  %v1458 = vunpack.c.l.b16 %v1282
  %v1459 = vunpack.c.l.b16 %v1283
  %v1460 = vunpack.c.l.b16 %v1284
  %v1461 = vunpack.c.l.b16 %v1285
  %v1462 = vunpack.c.l.b16 %v1286
  %v1463 = vunpack.c.l.b16 %v1287
  %v1464 = vunpack.c.l.b16 %v1288
  %v1465 = vunpack.c.l.b16 %v1289
  %v1466 = vpack.c.b16 %v1447, %v1446
  %v1467 = vpack.c.b16 %v1449, %v1448
  %v1468 = vpack.c.b16 %v1451, %v1450
  %v1469 = vpack.c.b16 %v1453, %v1452
  %v1470 = vpack.c.b16 %v1455, %v1454
  %v1471 = vpack.c.b16 %v1457, %v1456
  %v1472 = vpack.c.b16 %v1459, %v1458
  %v1473 = vpack.c.b16 %v1461, %v1460
  %v1474 = vpack.c.b16 %v1463, %v1462
  %v1475 = vpack.c.b16 %v1465, %v1464
  %v1502 = vunpack.c.l.b16 %v1290
  %v1503 = vunpack.c.h.b16 %v1290
  %v1504 = vunpack.c.l.b16 %v1291
  %v1505 = vunpack.c.h.b16 %v1291
  %v1506 = vunpack.c.l.b16 %v1292
  %v1507 = vunpack.c.h.b16 %v1292
  %v1508 = vunpack.c.l.b16 %v1293
  %v1509 = vunpack.c.h.b16 %v1293
  %v1510 = vunpack.c.l.b16 %v1294
  %v1511 = vunpack.c.h.b16 %v1294
  %v1512 = vunpack.c.l.b16 %v1295
  %v1513 = vunpack.c.h.b16 %v1295
  %v1514 = vunpack.c.l.b16 %v1296
  %v1515 = vunpack.c.h.b16 %v1296
  %v1516 = vunpack.c.l.b16 %v1297
  %v1517 = vunpack.c.h.b16 %v1297
  %v1518 = vunpack.c.l.b16 %v1298
  %v1519 = vunpack.c.h.b16 %v1298
  %v1520 = vunpack.c.l.b16 %v1299
  %v1521 = vunpack.c.h.b16 %v1299
  %v1522 = vunpack.c.l.b16 %v1300
  %v1523 = vunpack.c.h.b16 %v1300
  %v1524 = vunpack.c.l.b16 %v1301
  %v1525 = vunpack.c.h.b16 %v1301
  %v1526 = vunpack.c.l.b16 %v1302
  %v1527 = vunpack.c.h.b16 %v1302
  %v1528 = vunpack.c.l.b16 %v1303
  %v1529 = vunpack.c.h.b16 %v1303
  %v1530 = vunpack.c.l.b16 %v1304
  %v1531 = vunpack.c.h.b16 %v1304
  %v1532 = vunpack.c.l.b16 %v1305
  %v1533 = vunpack.c.h.b16 %v1305
  %v1534 = vpack.c.b16 %v1504, %v1502
  %v1535 = vpack.c.b16 %v1505, %v1503
  %v1536 = vpack.c.b16 %v1508, %v1506
  %v1537 = vpack.c.b16 %v1509, %v1507
  %v1538 = vpack.c.b16 %v1512, %v1510
  %v1539 = vpack.c.b16 %v1513, %v1511
  %v1540 = vpack.c.b16 %v1516, %v1514
  %v1541 = vpack.c.b16 %v1517, %v1515
  %v1542 = vpack.c.b16 %v1520, %v1518
  %v1543 = vpack.c.b16 %v1521, %v1519
  %v1544 = vpack.c.b16 %v1524, %v1522
  %v1545 = vpack.c.b16 %v1525, %v1523
  %v1546 = vpack.c.b16 %v1528, %v1526
  %v1547 = vpack.c.b16 %v1529, %v1527
  %v1548 = vpack.c.b16 %v1532, %v1530
  %v1549 = vpack.c.b16 %v1533, %v1531
  %1566 = vmatpush.bf16.msra.mxu0 %v1548
  %1567 = vmatpush.bf16.msra.mxu0 %v1546
  %1568 = vmatpush.bf16.msra.mxu0 %v1544
  %1569 = vmatpush.bf16.msra.mxu0 %v1542
  %1570 = vmatpush.bf16.msra.mxu0 %v1540
  %1571 = vmatpush.bf16.msra.mxu0 %v1538
  %1572 = vmatpush.bf16.msra.mxu0 %v1536
  %1573 = vmatpush.bf16.msra.mxu0 %v1534
  %1574 = vmatmul.bf16.gmra.mxu0 %v1466
  %v1575 = vpop.f32.mrf.mxu0
  %v1576 = vadd.f32 %v1329, %v1575
  %v1577 = vpop.f32.mrf.mxu0
  %v1578 = vadd.f32 %v1334, %v1577
  %1579 = vmatmul.bf16.gmra.mxu0 %v1467
  %v1580 = vpop.f32.mrf.mxu0
  %v1581 = vadd.f32 %v1339, %v1580
  %v1582 = vpop.f32.mrf.mxu0
  %v1583 = vadd.f32 %v1344, %v1582
  %1584 = vmatmul.bf16.gmra.mxu0 %v1468
  %v1585 = vpop.f32.mrf.mxu0
  %v1586 = vadd.f32 %v1349, %v1585
  %v1587 = vpop.f32.mrf.mxu0
  %v1588 = vadd.f32 %v1354, %v1587
  %1589 = vmatmul.bf16.gmra.mxu0 %v1469
  %v1590 = vpop.f32.mrf.mxu0
  %v1591 = vadd.f32 %v1359, %v1590
  %v1592 = vpop.f32.mrf.mxu0
  %v1593 = vadd.f32 %v1364, %v1592
  %1594 = vmatmul.bf16.gmra.mxu0 %v1470
  %v1595 = vpop.f32.mrf.mxu0
  %v1596 = vadd.f32 %v1369, %v1595
  %v1597 = vpop.f32.mrf.mxu0
  %v1598 = vadd.f32 %v1374, %v1597
  %1599 = vmatmul.bf16.gmra.mxu0 %v1471
  %v1600 = vpop.f32.mrf.mxu0
  %v1601 = vadd.f32 %v1379, %v1600
  %v1602 = vpop.f32.mrf.mxu0
  %v1603 = vadd.f32 %v1384, %v1602
  %1604 = vmatmul.bf16.gmra.mxu0 %v1472
  %v1605 = vpop.f32.mrf.mxu0
  %v1606 = vadd.f32 %v1389, %v1605
  %v1607 = vpop.f32.mrf.mxu0
  %v1608 = vadd.f32 %v1394, %v1607
  %1609 = vmatmul.bf16.gmra.mxu0 %v1473
  %v1610 = vpop.f32.mrf.mxu0
  %v1611 = vadd.f32 %v1399, %v1610
  %v1612 = vpop.f32.mrf.mxu0
  %v1613 = vadd.f32 %v1404, %v1612
  %1614 = vmatmul.bf16.gmra.mxu0 %v1474
  %v1615 = vpop.f32.mrf.mxu0
  %v1616 = vadd.f32 %v1409, %v1615
  %v1617 = vpop.f32.mrf.mxu0
  %v1618 = vadd.f32 %v1414, %v1617
  %1619 = vmatmul.bf16.gmra.mxu0 %v1475
  %v1620 = vpop.f32.mrf.mxu0
  %v1621 = vadd.f32 %v1419, %v1620
  %v1622 = vpop.f32.mrf.mxu0
  %v1623 = vadd.f32 %v1424, %v1622
  %1624 = vdwg.mxu0
  %1625 = vmatpush.bf16.msra.mxu0 %v1549
  %1626 = vmatpush.bf16.msra.mxu0 %v1547
  %1627 = vmatpush.bf16.msra.mxu0 %v1545
  %1628 = vmatpush.bf16.msra.mxu0 %v1543
  %1629 = vmatpush.bf16.msra.mxu0 %v1541
  %1630 = vmatpush.bf16.msra.mxu0 %v1539
  %1631 = vmatpush.bf16.msra.mxu0 %v1537
  %1632 = vmatpush.bf16.msra.mxu0 %v1535
  %1633 = vmatmul.bf16.gmra.mxu0 %v1466
  %v1634 = vpop.f32.mrf.mxu0
  %v1635 = vadd.f32 %v1329, %v1634
  %v1636 = vpop.f32.mrf.mxu0
  %v1637 = vadd.f32 %v1334, %v1636
  %1638 = vmatmul.bf16.gmra.mxu0 %v1467
  %v1639 = vpop.f32.mrf.mxu0
  %v1640 = vadd.f32 %v1339, %v1639
  %v1641 = vpop.f32.mrf.mxu0
  %v1642 = vadd.f32 %v1344, %v1641
  %1643 = vmatmul.bf16.gmra.mxu0 %v1468
  %v1644 = vpop.f32.mrf.mxu0
  %v1645 = vadd.f32 %v1349, %v1644
  %v1646 = vpop.f32.mrf.mxu0
  %v1647 = vadd.f32 %v1354, %v1646
  %1648 = vmatmul.bf16.gmra.mxu0 %v1469
  %v1649 = vpop.f32.mrf.mxu0
  %v1650 = vadd.f32 %v1359, %v1649
  %v1651 = vpop.f32.mrf.mxu0
  %v1652 = vadd.f32 %v1364, %v1651
  %1653 = vmatmul.bf16.gmra.mxu0 %v1470
  %v1654 = vpop.f32.mrf.mxu0
  %v1655 = vadd.f32 %v1369, %v1654
  %v1656 = vpop.f32.mrf.mxu0
  %v1657 = vadd.f32 %v1374, %v1656
  %1658 = vmatmul.bf16.gmra.mxu0 %v1471
  %v1659 = vpop.f32.mrf.mxu0
  %v1660 = vadd.f32 %v1379, %v1659
  %v1661 = vpop.f32.mrf.mxu0
  %v1662 = vadd.f32 %v1384, %v1661
  %1663 = vmatmul.bf16.gmra.mxu0 %v1472
  %v1664 = vpop.f32.mrf.mxu0
  %v1665 = vadd.f32 %v1389, %v1664
  %v1666 = vpop.f32.mrf.mxu0
  %v1667 = vadd.f32 %v1394, %v1666
  %1668 = vmatmul.bf16.gmra.mxu0 %v1473
  %v1669 = vpop.f32.mrf.mxu0
  %v1670 = vadd.f32 %v1399, %v1669
  %v1671 = vpop.f32.mrf.mxu0
  %v1672 = vadd.f32 %v1404, %v1671
  %1673 = vmatmul.bf16.gmra.mxu0 %v1474
  %v1674 = vpop.f32.mrf.mxu0
  %v1675 = vadd.f32 %v1409, %v1674
  %v1676 = vpop.f32.mrf.mxu0
  %v1677 = vadd.f32 %v1414, %v1676
  %1678 = vmatmul.bf16.gmra.mxu0 %v1475
  %v1679 = vpop.f32.mrf.mxu0
  %v1680 = vadd.f32 %v1419, %v1679
  %v1681 = vpop.f32.mrf.mxu0
  %v1682 = vadd.f32 %v1424, %v1681
  %1683 = vdwg.mxu0
  %1684 = vst [vmem:[#allocation4] sm:$0xff] %v1576
  %1685 = vst [vmem:[#allocation4 + $0x8] sm:$0xff] %v1635
  %1686 = vst [vmem:[#allocation4 + $0x10] sm:$0xff] %v1578
  %1687 = vst [vmem:[#allocation4 + $0x18] sm:$0xff] %v1637
  %1688 = vst [vmem:[#allocation4 + $0x20] sm:$0xff] %v1581
  %1689 = vst [vmem:[#allocation4 + $0x28] sm:$0xff] %v1640
  %1690 = vst [vmem:[#allocation4 + $0x30] sm:$0xff] %v1583
  %1691 = vst [vmem:[#allocation4 + $0x38] sm:$0xff] %v1642
  %1692 = vst [vmem:[#allocation4 + $0x40] sm:$0xff] %v1586
  %1693 = vst [vmem:[#allocation4 + $0x48] sm:$0xff] %v1645
  %1694 = vst [vmem:[#allocation4 + $0x50] sm:$0xff] %v1588
  %1695 = vst [vmem:[#allocation4 + $0x58] sm:$0xff] %v1647
  %1696 = vst [vmem:[#allocation4 + $0x60] sm:$0xff] %v1591
  %1697 = vst [vmem:[#allocation4 + $0x68] sm:$0xff] %v1650
  %1698 = vst [vmem:[#allocation4 + $0x70] sm:$0xff] %v1593
  %1699 = vst [vmem:[#allocation4 + $0x78] sm:$0xff] %v1652
  %1700 = vst [vmem:[#allocation4 + $0x80] sm:$0xff] %v1596
  %1701 = vst [vmem:[#allocation4 + $0x88] sm:$0xff] %v1655
  %1702 = vst [vmem:[#allocation4 + $0x90] sm:$0xff] %v1598
  %1703 = vst [vmem:[#allocation4 + $0x98] sm:$0xff] %v1657
  %1704 = vst [vmem:[#allocation4 + $0xa0] sm:$0xff] %v1601
  %1705 = vst [vmem:[#allocation4 + $0xa8] sm:$0xff] %v1660
  %1706 = vst [vmem:[#allocation4 + $0xb0] sm:$0xff] %v1603
  %1707 = vst [vmem:[#allocation4 + $0xb8] sm:$0xff] %v1662
  %1708 = vst [vmem:[#allocation4 + $0xc0] sm:$0xff] %v1606
  %1709 = vst [vmem:[#allocation4 + $0xc8] sm:$0xff] %v1665
  %1710 = vst [vmem:[#allocation4 + $0xd0] sm:$0xff] %v1608
  %1711 = vst [vmem:[#allocation4 + $0xd8] sm:$0xff] %v1667
  %1712 = vst [vmem:[#allocation4 + $0xe0] sm:$0xff] %v1611
  %1713 = vst [vmem:[#allocation4 + $0xe8] sm:$0xff] %v1670
  %1714 = vst [vmem:[#allocation4 + $0xf0] sm:$0xff] %v1613
  %1715 = vst [vmem:[#allocation4 + $0xf8] sm:$0xff] %v1672
  %1716 = vst [vmem:[#allocation4 + $0x100] sm:$0xff] %v1616
  %1717 = vst [vmem:[#allocation4 + $0x108] sm:$0xff] %v1675
  %1718 = vst [vmem:[#allocation4 + $0x110] sm:$0xff] %v1618
  %1719 = vst [vmem:[#allocation4 + $0x118] sm:$0xff] %v1677
  %1720 = vst [vmem:[#allocation4 + $0x120] sm:$0xff] %v1621
  %1721 = vst [vmem:[#allocation4 + $0x128] sm:$0xff] %v1680
  %1722 = vst [vmem:[#allocation4 + $0x130] sm:$0xff] %v1623
  %1723 = vst [vmem:[#allocation4 + $0x138] sm:$0xff] %v1682
  %v1724 = vld [vmem:[%s6] sm:$0xf]
  %v1725 = vld [vmem:[%s6 + $0x4] sm:$0xf]
  %v1726 = vld [vmem:[%s6 + $0x8] sm:$0xf]
  %v1727 = vld [vmem:[%s6 + $0xc] sm:$0xf]
  %v1728 = vld [vmem:[%s6 + $0x10] sm:$0xf]
  %v1729 = vld [vmem:[%s6 + $0x14] sm:$0xf]
  %v1730 = vld [vmem:[%s6 + $0x18] sm:$0xf]
  %v1731 = vld [vmem:[%s6 + $0x1c] sm:$0xf]
  %v1732 = vld [vmem:[%s6 + $0x20] sm:$0xf]
  %v1733 = vld [vmem:[%s6 + $0x24] sm:$0xf]
  %v1734 = vld [vmem:[#allocation3] sm:$0xff]
  %v1735 = vld [vmem:[#allocation3 + $0x8] sm:$0xff]
  %v1736 = vld [vmem:[#allocation3 + $0x10] sm:$0xff]
  %v1737 = vld [vmem:[#allocation3 + $0x18] sm:$0xff]
  %v1738 = vld [vmem:[#allocation3 + $0x20] sm:$0xff]
  %v1739 = vld [vmem:[#allocation3 + $0x28] sm:$0xff]
  %v1740 = vld [vmem:[#allocation3 + $0x30] sm:$0xff]
  %v1741 = vld [vmem:[#allocation3 + $0x38] sm:$0xff]
  %v1742 = vld [vmem:[#allocation3 + $0x40] sm:$0xff]
  %v1743 = vld [vmem:[#allocation3 + $0x48] sm:$0xff]
  %v1744 = vld [vmem:[%s7] sm:$0xff]
  %v1745 = vld [vmem:[%s7 + $0x8] sm:$0xff]
  %v1746 = vld [vmem:[%s7 + $0x10] sm:$0xff]
  %v1747 = vld [vmem:[%s7 + $0x18] sm:$0xff]
  %v1748 = vld [vmem:[%s7 + $0x20] sm:$0xff]
  %v1749 = vld [vmem:[%s7 + $0x28] sm:$0xff]
  %v1750 = vld [vmem:[%s7 + $0x30] sm:$0xff]
  %v1751 = vld [vmem:[%s7 + $0x38] sm:$0xff]
  %v1752 = vld [vmem:[%s7 + $0x40] sm:$0xff]
  %v1753 = vld [vmem:[%s7 + $0x48] sm:$0xff]
  %1755 = vset.pattern.permute.xlu0 0
  %1756 = vperm.xlu0 %1755, %v1744
  %v1757 = vpop.permute.xlu0 %1756
  %1760 = vset.pattern.permute.xlu0 0
  %1761 = vperm.xlu0 %1760, %v1745
  %v1762 = vpop.permute.xlu0 %1761
  %1765 = vset.pattern.permute.xlu0 0
  %1766 = vperm.xlu0 %1765, %v1746
  %v1767 = vpop.permute.xlu0 %1766
  %1770 = vset.pattern.permute.xlu0 0
  %1771 = vperm.xlu0 %1770, %v1747
  %v1772 = vpop.permute.xlu0 %1771
  %1775 = vset.pattern.permute.xlu0 0
  %1776 = vperm.xlu0 %1775, %v1748
  %v1777 = vpop.permute.xlu0 %1776
  %1780 = vset.pattern.permute.xlu0 0
  %1781 = vperm.xlu0 %1780, %v1749
  %v1782 = vpop.permute.xlu0 %1781
  %1785 = vset.pattern.permute.xlu0 0
  %1786 = vperm.xlu0 %1785, %v1750
  %v1787 = vpop.permute.xlu0 %1786
  %1790 = vset.pattern.permute.xlu0 0
  %1791 = vperm.xlu0 %1790, %v1751
  %v1792 = vpop.permute.xlu0 %1791
  %1795 = vset.pattern.permute.xlu0 0
  %1796 = vperm.xlu0 %1795, %v1752
  %v1797 = vpop.permute.xlu0 %1796
  %1800 = vset.pattern.permute.xlu0 0
  %1801 = vperm.xlu0 %1800, %v1753
  %v1802 = vpop.permute.xlu0 %1801
  %v1814 = vunpack.c.l.b16 %v1724
  %v1815 = vunpack.c.l.b16 %v1725
  %v1816 = vunpack.c.l.b16 %v1726
  %v1817 = vunpack.c.l.b16 %v1727
  %v1818 = vunpack.c.l.b16 %v1728
  %v1819 = vunpack.c.l.b16 %v1729
  %v1820 = vunpack.c.l.b16 %v1730
  %v1821 = vunpack.c.l.b16 %v1731
  %v1822 = vunpack.c.l.b16 %v1732
  %v1823 = vunpack.c.l.b16 %v1733
  %v1824 = vpack.c.b16 %v1815, %v1814
  %v1825 = vpack.c.b16 %v1817, %v1816
  %v1826 = vpack.c.b16 %v1819, %v1818
  %v1827 = vpack.c.b16 %v1821, %v1820
  %v1828 = vpack.c.b16 %v1823, %v1822
  %v1839 = vunpack.c.l.b16 %v1734
  %v1840 = vunpack.c.h.b16 %v1734
  %v1841 = vunpack.c.l.b16 %v1735
  %v1842 = vunpack.c.h.b16 %v1735
  %v1843 = vunpack.c.l.b16 %v1736
  %v1844 = vunpack.c.h.b16 %v1736
  %v1845 = vunpack.c.l.b16 %v1737
  %v1846 = vunpack.c.h.b16 %v1737
  %v1847 = vunpack.c.l.b16 %v1738
  %v1848 = vunpack.c.h.b16 %v1738
  %v1849 = vunpack.c.l.b16 %v1739
  %v1850 = vunpack.c.h.b16 %v1739
  %v1851 = vunpack.c.l.b16 %v1740
  %v1852 = vunpack.c.h.b16 %v1740
  %v1853 = vunpack.c.l.b16 %v1741
  %v1854 = vunpack.c.h.b16 %v1741
  %v1855 = vunpack.c.l.b16 %v1742
  %v1856 = vunpack.c.h.b16 %v1742
  %v1857 = vunpack.c.l.b16 %v1743
  %v1858 = vunpack.c.h.b16 %v1743
  %v1859 = vpack.c.b16 %v1841, %v1839
  %v1860 = vpack.c.b16 %v1842, %v1840
  %v1861 = vpack.c.b16 %v1845, %v1843
  %v1862 = vpack.c.b16 %v1846, %v1844
  %v1863 = vpack.c.b16 %v1849, %v1847
  %v1864 = vpack.c.b16 %v1850, %v1848
  %v1865 = vpack.c.b16 %v1853, %v1851
  %v1866 = vpack.c.b16 %v1854, %v1852
  %v1867 = vpack.c.b16 %v1857, %v1855
  %v1868 = vpack.c.b16 %v1858, %v1856
  %vm1879 = vcmask 654336
  %v1881 = vsel %vm1879, %v1824, 0
  %v1884 = vsel %vm1879, %v1825, 0
  %v1887 = vsel %vm1879, %v1826, 0
  %v1890 = vsel %vm1879, %v1827, 0
  %v1893 = vsel %vm1879, %v1828, 0
  %1895 = vmatpush.bf16.msra.mxu0 0
  %1896 = vmatpush.bf16.msra.mxu0 0
  %1897 = vmatpush.bf16.msra.mxu0 0
  %1898 = vmatpush.bf16.msra.mxu0 %v1867
  %1899 = vmatpush.bf16.msra.mxu0 %v1865
  %1900 = vmatpush.bf16.msra.mxu0 %v1863
  %1901 = vmatpush.bf16.msra.mxu0 %v1861
  %1902 = vmatpush.bf16.msra.mxu0 %v1859
  %1903 = vmatmul.bf16.gmra.mxu0 %v1881
  %v1904 = vpop.f32.mrf.mxu0
  %v1905 = vadd.f32 %v1757, %v1904
  %v1906 = vpop.f32.mrf.mxu0
  %v1907 = vadd.f32 %v1762, %v1906
  %1908 = vmatmul.bf16.gmra.mxu0 %v1884
  %v1909 = vpop.f32.mrf.mxu0
  %v1910 = vadd.f32 %v1767, %v1909
  %v1911 = vpop.f32.mrf.mxu0
  %v1912 = vadd.f32 %v1772, %v1911
  %1913 = vmatmul.bf16.gmra.mxu0 %v1887
  %v1914 = vpop.f32.mrf.mxu0
  %v1915 = vadd.f32 %v1777, %v1914
  %v1916 = vpop.f32.mrf.mxu0
  %v1917 = vadd.f32 %v1782, %v1916
  %1918 = vmatmul.bf16.gmra.mxu0 %v1890
  %v1919 = vpop.f32.mrf.mxu0
  %v1920 = vadd.f32 %v1787, %v1919
  %v1921 = vpop.f32.mrf.mxu0
  %v1922 = vadd.f32 %v1792, %v1921
  %1923 = vmatmul.bf16.gmra.mxu0 %v1893
  %v1924 = vpop.f32.mrf.mxu0
  %v1925 = vadd.f32 %v1797, %v1924
  %v1926 = vpop.f32.mrf.mxu0
  %v1927 = vadd.f32 %v1802, %v1926
  %1928 = vdwg.mxu0
  %1929 = vmatpush.bf16.msra.mxu0 0
  %1930 = vmatpush.bf16.msra.mxu0 0
  %1931 = vmatpush.bf16.msra.mxu0 0
  %1932 = vmatpush.bf16.msra.mxu0 %v1868
  %1933 = vmatpush.bf16.msra.mxu0 %v1866
  %1934 = vmatpush.bf16.msra.mxu0 %v1864
  %1935 = vmatpush.bf16.msra.mxu0 %v1862
  %1936 = vmatpush.bf16.msra.mxu0 %v1860
  %1937 = vmatmul.bf16.gmra.mxu0 %v1881
  %v1938 = vpop.f32.mrf.mxu0
  %v1939 = vadd.f32 %v1757, %v1938
  %v1940 = vpop.f32.mrf.mxu0
  %v1941 = vadd.f32 %v1762, %v1940
  %1942 = vmatmul.bf16.gmra.mxu0 %v1884
  %v1943 = vpop.f32.mrf.mxu0
  %v1944 = vadd.f32 %v1767, %v1943
  %v1945 = vpop.f32.mrf.mxu0
  %v1946 = vadd.f32 %v1772, %v1945
  %1947 = vmatmul.bf16.gmra.mxu0 %v1887
  %v1948 = vpop.f32.mrf.mxu0
  %v1949 = vadd.f32 %v1777, %v1948
  %v1950 = vpop.f32.mrf.mxu0
  %v1951 = vadd.f32 %v1782, %v1950
  %1952 = vmatmul.bf16.gmra.mxu0 %v1890
  %v1953 = vpop.f32.mrf.mxu0
  %v1954 = vadd.f32 %v1787, %v1953
  %v1955 = vpop.f32.mrf.mxu0
  %v1956 = vadd.f32 %v1792, %v1955
  %1957 = vmatmul.bf16.gmra.mxu0 %v1893
  %v1958 = vpop.f32.mrf.mxu0
  %v1959 = vadd.f32 %v1797, %v1958
  %v1960 = vpop.f32.mrf.mxu0
  %v1961 = vadd.f32 %v1802, %v1960
  %1962 = vdwg.mxu0
  %1963 = vst [vmem:[#allocation5] sm:$0xff] %v1905
  %1964 = vst [vmem:[#allocation5 + $0x8] sm:$0xff] %v1939
  %1965 = vst [vmem:[#allocation5 + $0x10] sm:$0xff] %v1907
  %1966 = vst [vmem:[#allocation5 + $0x18] sm:$0xff] %v1941
  %1967 = vst [vmem:[#allocation5 + $0x20] sm:$0xff] %v1910
  %1968 = vst [vmem:[#allocation5 + $0x28] sm:$0xff] %v1944
  %1969 = vst [vmem:[#allocation5 + $0x30] sm:$0xff] %v1912
  %1970 = vst [vmem:[#allocation5 + $0x38] sm:$0xff] %v1946
  %1971 = vst [vmem:[#allocation5 + $0x40] sm:$0xff] %v1915
  %1972 = vst [vmem:[#allocation5 + $0x48] sm:$0xff] %v1949
  %1973 = vst [vmem:[#allocation5 + $0x50] sm:$0xff] %v1917
  %1974 = vst [vmem:[#allocation5 + $0x58] sm:$0xff] %v1951
  %1975 = vst [vmem:[#allocation5 + $0x60] sm:$0xff] %v1920
  %1976 = vst [vmem:[#allocation5 + $0x68] sm:$0xff] %v1954
  %1977 = vst [vmem:[#allocation5 + $0x70] sm:$0xff] %v1922
  %1978 = vst [vmem:[#allocation5 + $0x78] sm:$0xff] %v1956
  %1979 = vst [vmem:[#allocation5 + $0x80] sm:$0xff] %v1925
  %1980 = vst [vmem:[#allocation5 + $0x88] sm:$0xff] %v1959
  %1981 = vst [vmem:[#allocation5 + $0x90] sm:$0xff] %v1927
  %1982 = vst [vmem:[#allocation5 + $0x98] sm:$0xff] %v1961
  %v1983 = vld [vmem:[#allocation4] sm:$0xff]
  %v1984 = vld [vmem:[#allocation4 + $0x10] sm:$0xff]
  %v1985 = vld [vmem:[#allocation4 + $0x20] sm:$0xff]
  %v1986 = vld [vmem:[#allocation4 + $0x30] sm:$0xff]
  %v1987 = vld [vmem:[#allocation4 + $0x40] sm:$0xff]
  %v1988 = vld [vmem:[#allocation4 + $0x50] sm:$0xff]
  %v1989 = vld [vmem:[#allocation4 + $0x60] sm:$0xff]
  %v1990 = vld [vmem:[#allocation4 + $0x70] sm:$0xff]
  %v1991 = vld [vmem:[#allocation4 + $0x80] sm:$0xff]
  %v1992 = vld [vmem:[#allocation4 + $0x90] sm:$0xff]
  %v1993 = vld [vmem:[#allocation4 + $0xa0] sm:$0xff]
  %v1994 = vld [vmem:[#allocation4 + $0xb0] sm:$0xff]
  %v1995 = vld [vmem:[#allocation4 + $0xc0] sm:$0xff]
  %v1996 = vld [vmem:[#allocation4 + $0xd0] sm:$0xff]
  %v1997 = vld [vmem:[#allocation4 + $0xe0] sm:$0xff]
  %v1998 = vld [vmem:[#allocation4 + $0xf0] sm:$0xff]
  %v1999 = vld [vmem:[#allocation4 + $0x100] sm:$0xff]
  %v2000 = vld [vmem:[#allocation4 + $0x110] sm:$0xff]
  %v2001 = vld [vmem:[#allocation4 + $0x120] sm:$0xff]
  %v2002 = vld [vmem:[#allocation4 + $0x130] sm:$0xff]
  %v2003 = vmul.f32 %v1983, %v1993
  %v2004 = vmul.f32 %v1984, %v1994
  %v2005 = vmul.f32 %v1985, %v1995
  %v2006 = vmul.f32 %v1986, %v1996
  %v2007 = vmul.f32 %v1987, %v1997
  %v2008 = vmul.f32 %v1988, %v1998
  %v2009 = vmul.f32 %v1989, %v1999
  %v2010 = vmul.f32 %v1990, %v2000
  %v2011 = vmul.f32 %v1991, %v2001
  %v2012 = vmul.f32 %v1992, %v2002
  %v2013 = vpack.c.bf16 %v2003, %v2003
  %v2014 = vpack.c.bf16 %v2004, %v2004
  %v2015 = vpack.c.bf16 %v2005, %v2005
  %v2016 = vpack.c.bf16 %v2006, %v2006
  %v2017 = vpack.c.bf16 %v2007, %v2007
  %v2018 = vpack.c.bf16 %v2008, %v2008
  %v2019 = vpack.c.bf16 %v2009, %v2009
  %v2020 = vpack.c.bf16 %v2010, %v2010
  %v2021 = vpack.c.bf16 %v2011, %v2011
  %v2022 = vpack.c.bf16 %v2012, %v2012
  %2023 = vst [vmem:[#allocation6] sm:$0xf] %v2013
  %2024 = vst [vmem:[#allocation6 + $0x10] sm:$0xf] %v2014
  %2025 = vst [vmem:[#allocation6 + $0x20] sm:$0xf] %v2015
  %2026 = vst [vmem:[#allocation6 + $0x30] sm:$0xf] %v2016
  %2027 = vst [vmem:[#allocation6 + $0x40] sm:$0xf] %v2017
  %2028 = vst [vmem:[#allocation6 + $0x50] sm:$0xf] %v2018
  %2029 = vst [vmem:[#allocation6 + $0x60] sm:$0xf] %v2019
  %2030 = vst [vmem:[#allocation6 + $0x70] sm:$0xf] %v2020
  %2031 = vst [vmem:[#allocation6 + $0x80] sm:$0xf] %v2021
  %2032 = vst [vmem:[#allocation6 + $0x90] sm:$0xf] %v2022
  %v2033 = vld [vmem:[#allocation4 + $0xa8] sm:$0xff]
  %v2034 = vld [vmem:[#allocation4 + $0xb8] sm:$0xff]
  %v2035 = vld [vmem:[#allocation4 + $0xc8] sm:$0xff]
  %v2036 = vld [vmem:[#allocation4 + $0xd8] sm:$0xff]
  %v2037 = vld [vmem:[#allocation4 + $0xe8] sm:$0xff]
  %v2038 = vld [vmem:[#allocation4 + $0xf8] sm:$0xff]
  %v2039 = vld [vmem:[#allocation4 + $0x108] sm:$0xff]
  %v2040 = vld [vmem:[#allocation4 + $0x118] sm:$0xff]
  %v2041 = vld [vmem:[#allocation4 + $0x128] sm:$0xff]
  %v2042 = vld [vmem:[#allocation4 + $0x138] sm:$0xff]
  %v2043 = vmul.f32 %v1983, %v2033
  %v2044 = vmul.f32 %v1984, %v2034
  %v2045 = vmul.f32 %v1985, %v2035
  %v2046 = vmul.f32 %v1986, %v2036
  %v2047 = vmul.f32 %v1987, %v2037
  %v2048 = vmul.f32 %v1988, %v2038
  %v2049 = vmul.f32 %v1989, %v2039
  %v2050 = vmul.f32 %v1990, %v2040
  %v2051 = vmul.f32 %v1991, %v2041
  %v2052 = vmul.f32 %v1992, %v2042
  %v2053 = vpack.c.bf16 %v2043, %v2043
  %v2054 = vpack.c.bf16 %v2044, %v2044
  %v2055 = vpack.c.bf16 %v2045, %v2045
  %v2056 = vpack.c.bf16 %v2046, %v2046
  %v2057 = vpack.c.bf16 %v2047, %v2047
  %v2058 = vpack.c.bf16 %v2048, %v2048
  %v2059 = vpack.c.bf16 %v2049, %v2049
  %v2060 = vpack.c.bf16 %v2050, %v2050
  %v2061 = vpack.c.bf16 %v2051, %v2051
  %v2062 = vpack.c.bf16 %v2052, %v2052
  %2063 = vst [vmem:[#allocation6 + $0x4] sm:$0xf] %v2053
  %2064 = vst [vmem:[#allocation6 + $0x14] sm:$0xf] %v2054
  %2065 = vst [vmem:[#allocation6 + $0x24] sm:$0xf] %v2055
  %2066 = vst [vmem:[#allocation6 + $0x34] sm:$0xf] %v2056
  %2067 = vst [vmem:[#allocation6 + $0x44] sm:$0xf] %v2057
  %2068 = vst [vmem:[#allocation6 + $0x54] sm:$0xf] %v2058
  %2069 = vst [vmem:[#allocation6 + $0x64] sm:$0xf] %v2059
  %2070 = vst [vmem:[#allocation6 + $0x74] sm:$0xf] %v2060
  %2071 = vst [vmem:[#allocation6 + $0x84] sm:$0xf] %v2061
  %2072 = vst [vmem:[#allocation6 + $0x94] sm:$0xf] %v2062
  %v2073 = vld [vmem:[#allocation4 + $0x8] sm:$0xff]
  %v2074 = vld [vmem:[#allocation4 + $0x18] sm:$0xff]
  %v2075 = vld [vmem:[#allocation4 + $0x28] sm:$0xff]
  %v2076 = vld [vmem:[#allocation4 + $0x38] sm:$0xff]
  %v2077 = vld [vmem:[#allocation4 + $0x48] sm:$0xff]
  %v2078 = vld [vmem:[#allocation4 + $0x58] sm:$0xff]
  %v2079 = vld [vmem:[#allocation4 + $0x68] sm:$0xff]
  %v2080 = vld [vmem:[#allocation4 + $0x78] sm:$0xff]
  %v2081 = vld [vmem:[#allocation4 + $0x88] sm:$0xff]
  %v2082 = vld [vmem:[#allocation4 + $0x98] sm:$0xff]
  %v2083 = vld [vmem:[#allocation4 + $0xa0] sm:$0xff]
  %v2084 = vld [vmem:[#allocation4 + $0xb0] sm:$0xff]
  %v2085 = vld [vmem:[#allocation4 + $0xc0] sm:$0xff]
  %v2086 = vld [vmem:[#allocation4 + $0xd0] sm:$0xff]
  %v2087 = vld [vmem:[#allocation4 + $0xe0] sm:$0xff]
  %v2088 = vld [vmem:[#allocation4 + $0xf0] sm:$0xff]
  %v2089 = vld [vmem:[#allocation4 + $0x100] sm:$0xff]
  %v2090 = vld [vmem:[#allocation4 + $0x110] sm:$0xff]
  %v2091 = vld [vmem:[#allocation4 + $0x120] sm:$0xff]
  %v2092 = vld [vmem:[#allocation4 + $0x130] sm:$0xff]
  %v2093 = vmul.f32 %v2073, %v2083
  %v2094 = vmul.f32 %v2074, %v2084
  %v2095 = vmul.f32 %v2075, %v2085
  %v2096 = vmul.f32 %v2076, %v2086
  %v2097 = vmul.f32 %v2077, %v2087
  %v2098 = vmul.f32 %v2078, %v2088
  %v2099 = vmul.f32 %v2079, %v2089
  %v2100 = vmul.f32 %v2080, %v2090
  %v2101 = vmul.f32 %v2081, %v2091
  %v2102 = vmul.f32 %v2082, %v2092
  %v2103 = vpack.c.bf16 %v2093, %v2093
  %v2104 = vpack.c.bf16 %v2094, %v2094
  %v2105 = vpack.c.bf16 %v2095, %v2095
  %v2106 = vpack.c.bf16 %v2096, %v2096
  %v2107 = vpack.c.bf16 %v2097, %v2097
  %v2108 = vpack.c.bf16 %v2098, %v2098
  %v2109 = vpack.c.bf16 %v2099, %v2099
  %v2110 = vpack.c.bf16 %v2100, %v2100
  %v2111 = vpack.c.bf16 %v2101, %v2101
  %v2112 = vpack.c.bf16 %v2102, %v2102
  %2113 = vst [vmem:[#allocation6 + $0x8] sm:$0xf] %v2103
  %2114 = vst [vmem:[#allocation6 + $0x18] sm:$0xf] %v2104
  %2115 = vst [vmem:[#allocation6 + $0x28] sm:$0xf] %v2105
  %2116 = vst [vmem:[#allocation6 + $0x38] sm:$0xf] %v2106
  %2117 = vst [vmem:[#allocation6 + $0x48] sm:$0xf] %v2107
  %2118 = vst [vmem:[#allocation6 + $0x58] sm:$0xf] %v2108
  %2119 = vst [vmem:[#allocation6 + $0x68] sm:$0xf] %v2109
  %2120 = vst [vmem:[#allocation6 + $0x78] sm:$0xf] %v2110
  %2121 = vst [vmem:[#allocation6 + $0x88] sm:$0xf] %v2111
  %2122 = vst [vmem:[#allocation6 + $0x98] sm:$0xf] %v2112
  %v2123 = vld [vmem:[#allocation4 + $0xa8] sm:$0xff]
  %v2124 = vld [vmem:[#allocation4 + $0xb8] sm:$0xff]
  %v2125 = vld [vmem:[#allocation4 + $0xc8] sm:$0xff]
  %v2126 = vld [vmem:[#allocation4 + $0xd8] sm:$0xff]
  %v2127 = vld [vmem:[#allocation4 + $0xe8] sm:$0xff]
  %v2128 = vld [vmem:[#allocation4 + $0xf8] sm:$0xff]
  %v2129 = vld [vmem:[#allocation4 + $0x108] sm:$0xff]
  %v2130 = vld [vmem:[#allocation4 + $0x118] sm:$0xff]
  %v2131 = vld [vmem:[#allocation4 + $0x128] sm:$0xff]
  %v2132 = vld [vmem:[#allocation4 + $0x138] sm:$0xff]
  %v2133 = vmul.f32 %v2073, %v2123
  %v2134 = vmul.f32 %v2074, %v2124
  %v2135 = vmul.f32 %v2075, %v2125
  %v2136 = vmul.f32 %v2076, %v2126
  %v2137 = vmul.f32 %v2077, %v2127
  %v2138 = vmul.f32 %v2078, %v2128
  %v2139 = vmul.f32 %v2079, %v2129
  %v2140 = vmul.f32 %v2080, %v2130
  %v2141 = vmul.f32 %v2081, %v2131
  %v2142 = vmul.f32 %v2082, %v2132
  %v2143 = vpack.c.bf16 %v2133, %v2133
  %v2144 = vpack.c.bf16 %v2134, %v2134
  %v2145 = vpack.c.bf16 %v2135, %v2135
  %v2146 = vpack.c.bf16 %v2136, %v2136
  %v2147 = vpack.c.bf16 %v2137, %v2137
  %v2148 = vpack.c.bf16 %v2138, %v2138
  %v2149 = vpack.c.bf16 %v2139, %v2139
  %v2150 = vpack.c.bf16 %v2140, %v2140
  %v2151 = vpack.c.bf16 %v2141, %v2141
  %v2152 = vpack.c.bf16 %v2142, %v2142
  %2153 = vst [vmem:[#allocation6 + $0xc] sm:$0xf] %v2143
  %2154 = vst [vmem:[#allocation6 + $0x1c] sm:$0xf] %v2144
  %2155 = vst [vmem:[#allocation6 + $0x2c] sm:$0xf] %v2145
  %2156 = vst [vmem:[#allocation6 + $0x3c] sm:$0xf] %v2146
  %2157 = vst [vmem:[#allocation6 + $0x4c] sm:$0xf] %v2147
  %2158 = vst [vmem:[#allocation6 + $0x5c] sm:$0xf] %v2148
  %2159 = vst [vmem:[#allocation6 + $0x6c] sm:$0xf] %v2149
  %2160 = vst [vmem:[#allocation6 + $0x7c] sm:$0xf] %v2150
  %2161 = vst [vmem:[#allocation6 + $0x8c] sm:$0xf] %v2151
  %2162 = vst [vmem:[#allocation6 + $0x9c] sm:$0xf] %v2152
  %v2163 = vld [vmem:[%s12] sm:$0xf]
  %v2164 = vld [vmem:[#allocation6] sm:$0xff]
  %v2165 = vld [vmem:[#allocation6 + $0x8] sm:$0xff]
  %v2166 = vld [vmem:[#allocation6 + $0x10] sm:$0xff]
  %v2167 = vld [vmem:[#allocation6 + $0x18] sm:$0xff]
  %v2168 = vld [vmem:[#allocation6 + $0x20] sm:$0xff]
  %v2169 = vld [vmem:[#allocation6 + $0x28] sm:$0xff]
  %v2170 = vld [vmem:[#allocation6 + $0x30] sm:$0xff]
  %v2171 = vld [vmem:[#allocation6 + $0x38] sm:$0xff]
  %v2172 = vld [vmem:[#allocation6 + $0x40] sm:$0xff]
  %v2173 = vld [vmem:[#allocation6 + $0x48] sm:$0xff]
  %v2174 = vld [vmem:[#allocation6 + $0x50] sm:$0xff]
  %v2175 = vld [vmem:[#allocation6 + $0x58] sm:$0xff]
  %v2176 = vld [vmem:[#allocation6 + $0x60] sm:$0xff]
  %v2177 = vld [vmem:[#allocation6 + $0x68] sm:$0xff]
  %v2178 = vld [vmem:[#allocation6 + $0x70] sm:$0xff]
  %v2179 = vld [vmem:[#allocation6 + $0x78] sm:$0xff]
  %v2180 = vld [vmem:[#allocation6 + $0x80] sm:$0xff]
  %v2181 = vld [vmem:[#allocation6 + $0x88] sm:$0xff]
  %v2182 = vld [vmem:[#allocation6 + $0x90] sm:$0xff]
  %v2183 = vld [vmem:[#allocation6 + $0x98] sm:$0xff]
  %v2204 = vunpack.c.l.b16 %v2164
  %v2205 = vunpack.c.h.b16 %v2164
  %v2206 = vunpack.c.l.b16 %v2165
  %v2207 = vunpack.c.h.b16 %v2165
  %v2208 = vunpack.c.l.b16 %v2166
  %v2209 = vunpack.c.h.b16 %v2166
  %v2210 = vunpack.c.l.b16 %v2167
  %v2211 = vunpack.c.h.b16 %v2167
  %v2212 = vunpack.c.l.b16 %v2168
  %v2213 = vunpack.c.h.b16 %v2168
  %v2214 = vunpack.c.l.b16 %v2169
  %v2215 = vunpack.c.h.b16 %v2169
  %v2216 = vunpack.c.l.b16 %v2170
  %v2217 = vunpack.c.h.b16 %v2170
  %v2218 = vunpack.c.l.b16 %v2171
  %v2219 = vunpack.c.h.b16 %v2171
  %v2220 = vunpack.c.l.b16 %v2172
  %v2221 = vunpack.c.h.b16 %v2172
  %v2222 = vunpack.c.l.b16 %v2173
  %v2223 = vunpack.c.h.b16 %v2173
  %v2224 = vunpack.c.l.b16 %v2174
  %v2225 = vunpack.c.h.b16 %v2174
  %v2226 = vunpack.c.l.b16 %v2175
  %v2227 = vunpack.c.h.b16 %v2175
  %v2228 = vunpack.c.l.b16 %v2176
  %v2229 = vunpack.c.h.b16 %v2176
  %v2230 = vunpack.c.l.b16 %v2177
  %v2231 = vunpack.c.h.b16 %v2177
  %v2232 = vunpack.c.l.b16 %v2178
  %v2233 = vunpack.c.h.b16 %v2178
  %v2234 = vunpack.c.l.b16 %v2179
  %v2235 = vunpack.c.h.b16 %v2179
  %v2236 = vunpack.c.l.b16 %v2180
  %v2237 = vunpack.c.h.b16 %v2180
  %v2238 = vunpack.c.l.b16 %v2181
  %v2239 = vunpack.c.h.b16 %v2181
  %v2240 = vunpack.c.l.b16 %v2182
  %v2241 = vunpack.c.h.b16 %v2182
  %v2242 = vunpack.c.l.b16 %v2183
  %v2243 = vunpack.c.h.b16 %v2183
  %v2244 = vpack.c.b16 %v2208, %v2204
  %v2245 = vpack.c.b16 %v2209, %v2205
  %v2246 = vpack.c.b16 %v2210, %v2206
  %v2247 = vpack.c.b16 %v2211, %v2207
  %v2248 = vpack.c.b16 %v2216, %v2212
  %v2249 = vpack.c.b16 %v2217, %v2213
  %v2250 = vpack.c.b16 %v2218, %v2214
  %v2251 = vpack.c.b16 %v2219, %v2215
  %v2252 = vpack.c.b16 %v2224, %v2220
  %v2253 = vpack.c.b16 %v2225, %v2221
  %v2254 = vpack.c.b16 %v2226, %v2222
  %v2255 = vpack.c.b16 %v2227, %v2223
  %v2256 = vpack.c.b16 %v2232, %v2228
  %v2257 = vpack.c.b16 %v2233, %v2229
  %v2258 = vpack.c.b16 %v2234, %v2230
  %v2259 = vpack.c.b16 %v2235, %v2231
  %v2260 = vpack.c.b16 %v2240, %v2236
  %v2261 = vpack.c.b16 %v2241, %v2237
  %v2262 = vpack.c.b16 %v2242, %v2238
  %v2263 = vpack.c.b16 %v2243, %v2239
  %v2285 = vsel %vm1879, %v2163, 0
  %2287 = vmatpush.bf16.msra.mxu0 0
  %2288 = vmatpush.bf16.msra.mxu0 0
  %2289 = vmatpush.bf16.msra.mxu0 0
  %2290 = vmatpush.bf16.msra.mxu0 %v2260
  %2291 = vmatpush.bf16.msra.mxu0 %v2256
  %2292 = vmatpush.bf16.msra.mxu0 %v2252
  %2293 = vmatpush.bf16.msra.mxu0 %v2248
  %2294 = vmatpush.bf16.msra.mxu0 %v2244
  %2295 = vmatmul.bf16.gmra.mxu0 %v2285
  %v2296 = vpop.f32.mrf.mxu0
  %v2297 = vadd.f32 0.0, %v2296
  %v2298 = vpop.f32.mrf.mxu0
  %2299 = vdwg.mxu0
  %2300 = vmatpush.bf16.msra.mxu0 0
  %2301 = vmatpush.bf16.msra.mxu0 0
  %2302 = vmatpush.bf16.msra.mxu0 0
  %2303 = vmatpush.bf16.msra.mxu0 %v2261
  %2304 = vmatpush.bf16.msra.mxu0 %v2257
  %2305 = vmatpush.bf16.msra.mxu0 %v2253
  %2306 = vmatpush.bf16.msra.mxu0 %v2249
  %2307 = vmatpush.bf16.msra.mxu0 %v2245
  %2308 = vmatmul.bf16.gmra.mxu0 %v2285
  %v2309 = vpop.f32.mrf.mxu0
  %v2310 = vadd.f32 0.0, %v2309
  %v2311 = vpop.f32.mrf.mxu0
  %2312 = vdwg.mxu0
  %2313 = vmatpush.bf16.msra.mxu0 0
  %2314 = vmatpush.bf16.msra.mxu0 0
  %2315 = vmatpush.bf16.msra.mxu0 0
  %2316 = vmatpush.bf16.msra.mxu0 %v2262
  %2317 = vmatpush.bf16.msra.mxu0 %v2258
  %2318 = vmatpush.bf16.msra.mxu0 %v2254
  %2319 = vmatpush.bf16.msra.mxu0 %v2250
  %2320 = vmatpush.bf16.msra.mxu0 %v2246
  %2321 = vmatmul.bf16.gmra.mxu0 %v2285
  %v2322 = vpop.f32.mrf.mxu0
  %v2323 = vadd.f32 0.0, %v2322
  %v2324 = vpop.f32.mrf.mxu0
  %2325 = vdwg.mxu0
  %2326 = vmatpush.bf16.msra.mxu0 0
  %2327 = vmatpush.bf16.msra.mxu0 0
  %2328 = vmatpush.bf16.msra.mxu0 0
  %2329 = vmatpush.bf16.msra.mxu0 %v2263
  %2330 = vmatpush.bf16.msra.mxu0 %v2259
  %2331 = vmatpush.bf16.msra.mxu0 %v2255
  %2332 = vmatpush.bf16.msra.mxu0 %v2251
  %2333 = vmatpush.bf16.msra.mxu0 %v2247
  %2334 = vmatmul.bf16.gmra.mxu0 %v2285
  %v2335 = vpop.f32.mrf.mxu0
  %v2336 = vadd.f32 0.0, %v2335
  %v2337 = vpop.f32.mrf.mxu0
  %2338 = vdwg.mxu0
  %v2339 = vmax.f32 %v2297, %v2310
  %v2340 = vsub.f32 %v2297, %v2339
  %v2341 = vmul.f32 %v2340, 1.442695
  %v2342 = vpow.pop %v2341
  %v2343 = vsub.f32 %v2310, %v2339
  %v2344 = vmul.f32 %v2343, 1.442695
  %v2345 = vpow.pop %v2344
  %v2346 = vadd.f32 %v2342, %v2345
  %v2347 = vrcp.pop %v2346
  %v2348 = vmul.f32 %v2342, %v2347
  %v2349 = vpack.c.bf16 %v2348, %v2348
  %2350 = vst [vmem:[#allocation7] sm:$0xf] %v2349
  %v2351 = vmul.f32 %v2345, %v2347
  %v2352 = vpack.c.bf16 %v2351, %v2351
  %2353 = vst [vmem:[#allocation7 + $0x4] sm:$0xf] %v2352
  %v2354 = vmax.f32 %v2323, %v2336
  %v2355 = vsub.f32 %v2323, %v2354
  %v2356 = vmul.f32 %v2355, 1.442695
  %v2357 = vpow.pop %v2356
  %v2358 = vsub.f32 %v2336, %v2354
  %v2359 = vmul.f32 %v2358, 1.442695
  %v2360 = vpow.pop %v2359
  %v2361 = vadd.f32 %v2357, %v2360
  %v2362 = vrcp.pop %v2361
  %v2363 = vmul.f32 %v2357, %v2362
  %v2364 = vpack.c.bf16 %v2363, %v2363
  %2365 = vst [vmem:[#allocation7 + $0x8] sm:$0xf] %v2364
  %v2366 = vmul.f32 %v2360, %v2362
  %v2367 = vpack.c.bf16 %v2366, %v2366
  %2368 = vst [vmem:[#allocation7 + $0xc] sm:$0xf] %v2367
  %v2369 = vld [vmem:[%s13] sm:$0xf]
  %v2370 = vld [vmem:[%s13 + $0x4] sm:$0xf]
  %v2371 = vld [vmem:[%s13 + $0x8] sm:$0xf]
  %v2372 = vld [vmem:[%s13 + $0xc] sm:$0xf]
  %v2373 = vld [vmem:[%s13 + $0x10] sm:$0xf]
  %v2374 = vld [vmem:[%s13 + $0x14] sm:$0xf]
  %v2375 = vld [vmem:[%s13 + $0x18] sm:$0xf]
  %v2376 = vld [vmem:[%s13 + $0x1c] sm:$0xf]
  %v2377 = vld [vmem:[%s13 + $0x20] sm:$0xf]
  %v2378 = vld [vmem:[%s13 + $0x24] sm:$0xf]
  %v2379 = vld [vmem:[#allocation7] sm:$0xff]
  %v2380 = vld [vmem:[#allocation7 + $0x8] sm:$0xff]
  %v2391 = vunpack.c.l.b16 %v2369
  %v2392 = vunpack.c.l.b16 %v2370
  %v2393 = vunpack.c.l.b16 %v2371
  %v2394 = vunpack.c.l.b16 %v2372
  %v2395 = vunpack.c.l.b16 %v2373
  %v2396 = vunpack.c.l.b16 %v2374
  %v2397 = vunpack.c.l.b16 %v2375
  %v2398 = vunpack.c.l.b16 %v2376
  %v2399 = vunpack.c.l.b16 %v2377
  %v2400 = vunpack.c.l.b16 %v2378
  %v2401 = vpack.c.b16 %v2392, %v2391
  %v2402 = vpack.c.b16 %v2394, %v2393
  %v2403 = vpack.c.b16 %v2396, %v2395
  %v2404 = vpack.c.b16 %v2398, %v2397
  %v2405 = vpack.c.b16 %v2400, %v2399
  %v2408 = vunpack.c.l.b16 %v2379
  %v2409 = vunpack.c.h.b16 %v2379
  %v2410 = vunpack.c.l.b16 %v2380
  %v2411 = vunpack.c.h.b16 %v2380
  %v2412 = vpack.c.b16 %v2408, %v2408
  %v2413 = vpack.c.b16 %v2409, %v2409
  %v2414 = vpack.c.b16 %v2410, %v2410
  %v2415 = vpack.c.b16 %v2411, %v2411
  %vm2416 = vcmask 64512
  %v2418 = vsel %vm2416, %v2401, 0
  %v2421 = vsel %vm2416, %v2402, 0
  %v2424 = vsel %vm2416, %v2403, 0
  %v2427 = vsel %vm2416, %v2404, 0
  %v2430 = vsel %vm2416, %v2405, 0
  %vm2432 = vcmask 1043456
  %v2434 = vsel %vm2432, %v2412, 0
  %v2437 = vsel %vm2432, %v2413, 0
  %v2440 = vsel %vm2432, %v2414, 0
  %v2443 = vsel %vm2432, %v2415, 0
  %2445 = vmatpush.bf16.msra.mxu0 0
  %2446 = vmatpush.bf16.msra.mxu0 0
  %2447 = vmatpush.bf16.msra.mxu0 0
  %2448 = vmatpush.bf16.msra.mxu0 0
  %2449 = vmatpush.bf16.msra.mxu0 0
  %2450 = vmatpush.bf16.msra.mxu0 0
  %2451 = vmatpush.bf16.msra.mxu0 0
  %2452 = vmatpush.bf16.msra.mxu0 %v2434
  %2453 = vmatmul.bf16.gmra.mxu0 %v2418
  %v2454 = vpop.f32.mrf.mxu0
  %v2455 = vadd.f32 0.0, %v2454
  %v2456 = vpop.f32.mrf.mxu0
  %v2457 = vadd.f32 0.0, %v2456
  %2458 = vmatmul.bf16.gmra.mxu0 %v2421
  %v2459 = vpop.f32.mrf.mxu0
  %v2460 = vadd.f32 0.0, %v2459
  %v2461 = vpop.f32.mrf.mxu0
  %v2462 = vadd.f32 0.0, %v2461
  %2463 = vmatmul.bf16.gmra.mxu0 %v2424
  %v2464 = vpop.f32.mrf.mxu0
  %v2465 = vadd.f32 0.0, %v2464
  %v2466 = vpop.f32.mrf.mxu0
  %v2467 = vadd.f32 0.0, %v2466
  %2468 = vmatmul.bf16.gmra.mxu0 %v2427
  %v2469 = vpop.f32.mrf.mxu0
  %v2470 = vadd.f32 0.0, %v2469
  %v2471 = vpop.f32.mrf.mxu0
  %v2472 = vadd.f32 0.0, %v2471
  %2473 = vmatmul.bf16.gmra.mxu0 %v2430
  %v2474 = vpop.f32.mrf.mxu0
  %v2475 = vadd.f32 0.0, %v2474
  %v2476 = vpop.f32.mrf.mxu0
  %v2477 = vadd.f32 0.0, %v2476
  %2478 = vdwg.mxu0
  %2479 = vmatpush.bf16.msra.mxu0 0
  %2480 = vmatpush.bf16.msra.mxu0 0
  %2481 = vmatpush.bf16.msra.mxu0 0
  %2482 = vmatpush.bf16.msra.mxu0 0
  %2483 = vmatpush.bf16.msra.mxu0 0
  %2484 = vmatpush.bf16.msra.mxu0 0
  %2485 = vmatpush.bf16.msra.mxu0 0
  %2486 = vmatpush.bf16.msra.mxu0 %v2437
  %2487 = vmatmul.bf16.gmra.mxu0 %v2418
  %v2488 = vpop.f32.mrf.mxu0
  %v2489 = vadd.f32 0.0, %v2488
  %v2490 = vpop.f32.mrf.mxu0
  %v2491 = vadd.f32 0.0, %v2490
  %2492 = vmatmul.bf16.gmra.mxu0 %v2421
  %v2493 = vpop.f32.mrf.mxu0
  %v2494 = vadd.f32 0.0, %v2493
  %v2495 = vpop.f32.mrf.mxu0
  %v2496 = vadd.f32 0.0, %v2495
  %2497 = vmatmul.bf16.gmra.mxu0 %v2424
  %v2498 = vpop.f32.mrf.mxu0
  %v2499 = vadd.f32 0.0, %v2498
  %v2500 = vpop.f32.mrf.mxu0
  %v2501 = vadd.f32 0.0, %v2500
  %2502 = vmatmul.bf16.gmra.mxu0 %v2427
  %v2503 = vpop.f32.mrf.mxu0
  %v2504 = vadd.f32 0.0, %v2503
  %v2505 = vpop.f32.mrf.mxu0
  %v2506 = vadd.f32 0.0, %v2505
  %2507 = vmatmul.bf16.gmra.mxu0 %v2430
  %v2508 = vpop.f32.mrf.mxu0
  %v2509 = vadd.f32 0.0, %v2508
  %v2510 = vpop.f32.mrf.mxu0
  %v2511 = vadd.f32 0.0, %v2510
  %2512 = vdwg.mxu0
  %2513 = vmatpush.bf16.msra.mxu0 0
  %2514 = vmatpush.bf16.msra.mxu0 0
  %2515 = vmatpush.bf16.msra.mxu0 0
  %2516 = vmatpush.bf16.msra.mxu0 0
  %2517 = vmatpush.bf16.msra.mxu0 0
  %2518 = vmatpush.bf16.msra.mxu0 0
  %2519 = vmatpush.bf16.msra.mxu0 0
  %2520 = vmatpush.bf16.msra.mxu0 %v2440
  %2521 = vmatmul.bf16.gmra.mxu0 %v2418
  %v2522 = vpop.f32.mrf.mxu0
  %v2523 = vadd.f32 0.0, %v2522
  %v2524 = vpop.f32.mrf.mxu0
  %v2525 = vadd.f32 0.0, %v2524
  %2526 = vmatmul.bf16.gmra.mxu0 %v2421
  %v2527 = vpop.f32.mrf.mxu0
  %v2528 = vadd.f32 0.0, %v2527
  %v2529 = vpop.f32.mrf.mxu0
  %v2530 = vadd.f32 0.0, %v2529
  %2531 = vmatmul.bf16.gmra.mxu0 %v2424
  %v2532 = vpop.f32.mrf.mxu0
  %v2533 = vadd.f32 0.0, %v2532
  %v2534 = vpop.f32.mrf.mxu0
  %v2535 = vadd.f32 0.0, %v2534
  %2536 = vmatmul.bf16.gmra.mxu0 %v2427
  %v2537 = vpop.f32.mrf.mxu0
  %v2538 = vadd.f32 0.0, %v2537
  %v2539 = vpop.f32.mrf.mxu0
  %v2540 = vadd.f32 0.0, %v2539
  %2541 = vmatmul.bf16.gmra.mxu0 %v2430
  %v2542 = vpop.f32.mrf.mxu0
  %v2543 = vadd.f32 0.0, %v2542
  %v2544 = vpop.f32.mrf.mxu0
  %v2545 = vadd.f32 0.0, %v2544
  %2546 = vdwg.mxu0
  %2547 = vmatpush.bf16.msra.mxu0 0
  %2548 = vmatpush.bf16.msra.mxu0 0
  %2549 = vmatpush.bf16.msra.mxu0 0
  %2550 = vmatpush.bf16.msra.mxu0 0
  %2551 = vmatpush.bf16.msra.mxu0 0
  %2552 = vmatpush.bf16.msra.mxu0 0
  %2553 = vmatpush.bf16.msra.mxu0 0
  %2554 = vmatpush.bf16.msra.mxu0 %v2443
  %2555 = vmatmul.bf16.gmra.mxu0 %v2418
  %v2556 = vpop.f32.mrf.mxu0
  %v2557 = vadd.f32 0.0, %v2556
  %v2558 = vpop.f32.mrf.mxu0
  %v2559 = vadd.f32 0.0, %v2558
  %2560 = vmatmul.bf16.gmra.mxu0 %v2421
  %v2561 = vpop.f32.mrf.mxu0
  %v2562 = vadd.f32 0.0, %v2561
  %v2563 = vpop.f32.mrf.mxu0
  %v2564 = vadd.f32 0.0, %v2563
  %2565 = vmatmul.bf16.gmra.mxu0 %v2424
  %v2566 = vpop.f32.mrf.mxu0
  %v2567 = vadd.f32 0.0, %v2566
  %v2568 = vpop.f32.mrf.mxu0
  %v2569 = vadd.f32 0.0, %v2568
  %2570 = vmatmul.bf16.gmra.mxu0 %v2427
  %v2571 = vpop.f32.mrf.mxu0
  %v2572 = vadd.f32 0.0, %v2571
  %v2573 = vpop.f32.mrf.mxu0
  %v2574 = vadd.f32 0.0, %v2573
  %2575 = vmatmul.bf16.gmra.mxu0 %v2430
  %v2576 = vpop.f32.mrf.mxu0
  %v2577 = vadd.f32 0.0, %v2576
  %v2578 = vpop.f32.mrf.mxu0
  %v2579 = vadd.f32 0.0, %v2578
  %2580 = vdwg.mxu0
  %v2581 = vpack.c.bf16 %v2489, %v2455
  %v2582 = vpack.c.bf16 %v2557, %v2523
  %v2583 = vpack.c.bf16 %v2491, %v2457
  %v2584 = vpack.c.bf16 %v2559, %v2525
  %v2585 = vpack.c.bf16 %v2494, %v2460
  %v2586 = vpack.c.bf16 %v2562, %v2528
  %v2587 = vpack.c.bf16 %v2496, %v2462
  %v2588 = vpack.c.bf16 %v2564, %v2530
  %v2589 = vpack.c.bf16 %v2499, %v2465
  %v2590 = vpack.c.bf16 %v2567, %v2533
  %v2591 = vpack.c.bf16 %v2501, %v2467
  %v2592 = vpack.c.bf16 %v2569, %v2535
  %v2593 = vpack.c.bf16 %v2504, %v2470
  %v2594 = vpack.c.bf16 %v2572, %v2538
  %v2595 = vpack.c.bf16 %v2506, %v2472
  %v2596 = vpack.c.bf16 %v2574, %v2540
  %v2597 = vpack.c.bf16 %v2509, %v2475
  %v2598 = vpack.c.bf16 %v2577, %v2543
  %v2599 = vpack.c.bf16 %v2511, %v2477
  %v2600 = vpack.c.bf16 %v2579, %v2545
  %2601 = vst [vmem:[#allocation6] sm:$0xff] %v2581
  %2602 = vst [vmem:[#allocation6 + $0x8] sm:$0xff] %v2582
  %2603 = vst [vmem:[#allocation6 + $0x10] sm:$0xff] %v2583
  %2604 = vst [vmem:[#allocation6 + $0x18] sm:$0xff] %v2584
  %2605 = vst [vmem:[#allocation6 + $0x20] sm:$0xff] %v2585
  %2606 = vst [vmem:[#allocation6 + $0x28] sm:$0xff] %v2586
  %2607 = vst [vmem:[#allocation6 + $0x30] sm:$0xff] %v2587
  %2608 = vst [vmem:[#allocation6 + $0x38] sm:$0xff] %v2588
  %2609 = vst [vmem:[#allocation6 + $0x40] sm:$0xff] %v2589
  %2610 = vst [vmem:[#allocation6 + $0x48] sm:$0xff] %v2590
  %2611 = vst [vmem:[#allocation6 + $0x50] sm:$0xff] %v2591
  %2612 = vst [vmem:[#allocation6 + $0x58] sm:$0xff] %v2592
  %2613 = vst [vmem:[#allocation6 + $0x60] sm:$0xff] %v2593
  %2614 = vst [vmem:[#allocation6 + $0x68] sm:$0xff] %v2594
  %2615 = vst [vmem:[#allocation6 + $0x70] sm:$0xff] %v2595
  %2616 = vst [vmem:[#allocation6 + $0x78] sm:$0xff] %v2596
  %2617 = vst [vmem:[#allocation6 + $0x80] sm:$0xff] %v2597
  %2618 = vst [vmem:[#allocation6 + $0x88] sm:$0xff] %v2598
  %2619 = vst [vmem:[#allocation6 + $0x90] sm:$0xff] %v2599
  %2620 = vst [vmem:[#allocation6 + $0x98] sm:$0xff] %v2600
  %v2621 = vld [vmem:[#allocation6] sm:$0xf]
  %v2622 = vld [vmem:[#allocation6 + $0x10] sm:$0xf]
  %v2623 = vld [vmem:[#allocation6 + $0x20] sm:$0xf]
  %v2624 = vld [vmem:[#allocation6 + $0x30] sm:$0xf]
  %v2625 = vld [vmem:[#allocation6 + $0x40] sm:$0xf]
  %v2626 = vld [vmem:[#allocation6 + $0x50] sm:$0xf]
  %v2627 = vld [vmem:[#allocation6 + $0x60] sm:$0xf]
  %v2628 = vld [vmem:[#allocation6 + $0x70] sm:$0xf]
  %v2629 = vld [vmem:[#allocation6 + $0x80] sm:$0xf]
  %v2630 = vld [vmem:[#allocation6 + $0x90] sm:$0xf]
  %v2631 = vunpack.c.l.bf16 %v2621
  %v2632 = vunpack.c.l.bf16 %v2622
  %v2633 = vunpack.c.l.bf16 %v2623
  %v2634 = vunpack.c.l.bf16 %v2624
  %v2635 = vunpack.c.l.bf16 %v2625
  %v2636 = vunpack.c.l.bf16 %v2626
  %v2637 = vunpack.c.l.bf16 %v2627
  %v2638 = vunpack.c.l.bf16 %v2628
  %v2639 = vunpack.c.l.bf16 %v2629
  %v2640 = vunpack.c.l.bf16 %v2630
  %v2641 = vld [vmem:[#allocation5] sm:$0xff]
  %v2642 = vld [vmem:[#allocation5 + $0x10] sm:$0xff]
  %v2643 = vld [vmem:[#allocation5 + $0x20] sm:$0xff]
  %v2644 = vld [vmem:[#allocation5 + $0x30] sm:$0xff]
  %v2645 = vld [vmem:[#allocation5 + $0x40] sm:$0xff]
  %v2646 = vld [vmem:[#allocation5 + $0x50] sm:$0xff]
  %v2647 = vld [vmem:[#allocation5 + $0x60] sm:$0xff]
  %v2648 = vld [vmem:[#allocation5 + $0x70] sm:$0xff]
  %v2649 = vld [vmem:[#allocation5 + $0x80] sm:$0xff]
  %v2650 = vld [vmem:[#allocation5 + $0x90] sm:$0xff]
  %v2651 = vmul.f32 %v2631, %v2641
  %v2652 = vmul.f32 %v2632, %v2642
  %v2653 = vmul.f32 %v2633, %v2643
  %v2654 = vmul.f32 %v2634, %v2644
  %v2655 = vmul.f32 %v2635, %v2645
  %v2656 = vmul.f32 %v2636, %v2646
  %v2657 = vmul.f32 %v2637, %v2647
  %v2658 = vmul.f32 %v2638, %v2648
  %v2659 = vmul.f32 %v2639, %v2649
  %v2660 = vmul.f32 %v2640, %v2650
  %v2661 = vld [vmem:[#allocation6 + $0x4] sm:$0xf]
  %v2662 = vld [vmem:[#allocation6 + $0x14] sm:$0xf]
  %v2663 = vld [vmem:[#allocation6 + $0x24] sm:$0xf]
  %v2664 = vld [vmem:[#allocation6 + $0x34] sm:$0xf]
  %v2665 = vld [vmem:[#allocation6 + $0x44] sm:$0xf]
  %v2666 = vld [vmem:[#allocation6 + $0x54] sm:$0xf]
  %v2667 = vld [vmem:[#allocation6 + $0x64] sm:$0xf]
  %v2668 = vld [vmem:[#allocation6 + $0x74] sm:$0xf]
  %v2669 = vld [vmem:[#allocation6 + $0x84] sm:$0xf]
  %v2670 = vld [vmem:[#allocation6 + $0x94] sm:$0xf]
  %v2671 = vunpack.c.l.bf16 %v2661
  %v2672 = vunpack.c.l.bf16 %v2662
  %v2673 = vunpack.c.l.bf16 %v2663
  %v2674 = vunpack.c.l.bf16 %v2664
  %v2675 = vunpack.c.l.bf16 %v2665
  %v2676 = vunpack.c.l.bf16 %v2666
  %v2677 = vunpack.c.l.bf16 %v2667
  %v2678 = vunpack.c.l.bf16 %v2668
  %v2679 = vunpack.c.l.bf16 %v2669
  %v2680 = vunpack.c.l.bf16 %v2670
  %v2681 = vld [vmem:[#allocation5 + $0x8] sm:$0xff]
  %v2682 = vld [vmem:[#allocation5 + $0x18] sm:$0xff]
  %v2683 = vld [vmem:[#allocation5 + $0x28] sm:$0xff]
  %v2684 = vld [vmem:[#allocation5 + $0x38] sm:$0xff]
  %v2685 = vld [vmem:[#allocation5 + $0x48] sm:$0xff]
  %v2686 = vld [vmem:[#allocation5 + $0x58] sm:$0xff]
  %v2687 = vld [vmem:[#allocation5 + $0x68] sm:$0xff]
  %v2688 = vld [vmem:[#allocation5 + $0x78] sm:$0xff]
  %v2689 = vld [vmem:[#allocation5 + $0x88] sm:$0xff]
  %v2690 = vld [vmem:[#allocation5 + $0x98] sm:$0xff]
  %v2691 = vmul.f32 %v2671, %v2681
  %v2692 = vmul.f32 %v2672, %v2682
  %v2693 = vmul.f32 %v2673, %v2683
  %v2694 = vmul.f32 %v2674, %v2684
  %v2695 = vmul.f32 %v2675, %v2685
  %v2696 = vmul.f32 %v2676, %v2686
  %v2697 = vmul.f32 %v2677, %v2687
  %v2698 = vmul.f32 %v2678, %v2688
  %v2699 = vmul.f32 %v2679, %v2689
  %v2700 = vmul.f32 %v2680, %v2690
  %v2701 = vadd.f32 %v2651, %v2691
  %v2702 = vadd.f32 %v2652, %v2692
  %v2703 = vadd.f32 %v2653, %v2693
  %v2704 = vadd.f32 %v2654, %v2694
  %v2705 = vadd.f32 %v2655, %v2695
  %v2706 = vadd.f32 %v2656, %v2696
  %v2707 = vadd.f32 %v2657, %v2697
  %v2708 = vadd.f32 %v2658, %v2698
  %v2709 = vadd.f32 %v2659, %v2699
  %v2710 = vadd.f32 %v2660, %v2700
  %v2711 = vpack.c.bf16 %v2701, %v2701
  %v2712 = vpack.c.bf16 %v2702, %v2702
  %v2713 = vpack.c.bf16 %v2703, %v2703
  %v2714 = vpack.c.bf16 %v2704, %v2704
  %v2715 = vpack.c.bf16 %v2705, %v2705
  %v2716 = vpack.c.bf16 %v2706, %v2706
  %v2717 = vpack.c.bf16 %v2707, %v2707
  %v2718 = vpack.c.bf16 %v2708, %v2708
  %v2719 = vpack.c.bf16 %v2709, %v2709
  %v2720 = vpack.c.bf16 %v2710, %v2710
  %2721 = vst [vmem:[#allocation8] sm:$0xf] %v2711
  %2722 = vst [vmem:[#allocation8 + $0x8] sm:$0xf] %v2712
  %2723 = vst [vmem:[#allocation8 + $0x10] sm:$0xf] %v2713
  %2724 = vst [vmem:[#allocation8 + $0x18] sm:$0xf] %v2714
  %2725 = vst [vmem:[#allocation8 + $0x20] sm:$0xf] %v2715
  %2726 = vst [vmem:[#allocation8 + $0x28] sm:$0xf] %v2716
  %2727 = vst [vmem:[#allocation8 + $0x30] sm:$0xf] %v2717
  %2728 = vst [vmem:[#allocation8 + $0x38] sm:$0xf] %v2718
  %2729 = vst [vmem:[#allocation8 + $0x40] sm:$0xf] %v2719
  %2730 = vst [vmem:[#allocation8 + $0x48] sm:$0xf] %v2720
  %v2731 = vld [vmem:[#allocation6 + $0x8] sm:$0xf]
  %v2732 = vld [vmem:[#allocation6 + $0x18] sm:$0xf]
  %v2733 = vld [vmem:[#allocation6 + $0x28] sm:$0xf]
  %v2734 = vld [vmem:[#allocation6 + $0x38] sm:$0xf]
  %v2735 = vld [vmem:[#allocation6 + $0x48] sm:$0xf]
  %v2736 = vld [vmem:[#allocation6 + $0x58] sm:$0xf]
  %v2737 = vld [vmem:[#allocation6 + $0x68] sm:$0xf]
  %v2738 = vld [vmem:[#allocation6 + $0x78] sm:$0xf]
  %v2739 = vld [vmem:[#allocation6 + $0x88] sm:$0xf]
  %v2740 = vld [vmem:[#allocation6 + $0x98] sm:$0xf]
  %v2741 = vunpack.c.l.bf16 %v2731
  %v2742 = vunpack.c.l.bf16 %v2732
  %v2743 = vunpack.c.l.bf16 %v2733
  %v2744 = vunpack.c.l.bf16 %v2734
  %v2745 = vunpack.c.l.bf16 %v2735
  %v2746 = vunpack.c.l.bf16 %v2736
  %v2747 = vunpack.c.l.bf16 %v2737
  %v2748 = vunpack.c.l.bf16 %v2738
  %v2749 = vunpack.c.l.bf16 %v2739
  %v2750 = vunpack.c.l.bf16 %v2740
  %v2751 = vld [vmem:[#allocation5] sm:$0xff]
  %v2752 = vld [vmem:[#allocation5 + $0x10] sm:$0xff]
  %v2753 = vld [vmem:[#allocation5 + $0x20] sm:$0xff]
  %v2754 = vld [vmem:[#allocation5 + $0x30] sm:$0xff]
  %v2755 = vld [vmem:[#allocation5 + $0x40] sm:$0xff]
  %v2756 = vld [vmem:[#allocation5 + $0x50] sm:$0xff]
  %v2757 = vld [vmem:[#allocation5 + $0x60] sm:$0xff]
  %v2758 = vld [vmem:[#allocation5 + $0x70] sm:$0xff]
  %v2759 = vld [vmem:[#allocation5 + $0x80] sm:$0xff]
  %v2760 = vld [vmem:[#allocation5 + $0x90] sm:$0xff]
  %v2761 = vmul.f32 %v2741, %v2751
  %v2762 = vmul.f32 %v2742, %v2752
  %v2763 = vmul.f32 %v2743, %v2753
  %v2764 = vmul.f32 %v2744, %v2754
  %v2765 = vmul.f32 %v2745, %v2755
  %v2766 = vmul.f32 %v2746, %v2756
  %v2767 = vmul.f32 %v2747, %v2757
  %v2768 = vmul.f32 %v2748, %v2758
  %v2769 = vmul.f32 %v2749, %v2759
  %v2770 = vmul.f32 %v2750, %v2760
  %v2771 = vld [vmem:[#allocation6 + $0xc] sm:$0xf]
  %v2772 = vld [vmem:[#allocation6 + $0x1c] sm:$0xf]
  %v2773 = vld [vmem:[#allocation6 + $0x2c] sm:$0xf]
  %v2774 = vld [vmem:[#allocation6 + $0x3c] sm:$0xf]
  %v2775 = vld [vmem:[#allocation6 + $0x4c] sm:$0xf]
  %v2776 = vld [vmem:[#allocation6 + $0x5c] sm:$0xf]
  %v2777 = vld [vmem:[#allocation6 + $0x6c] sm:$0xf]
  %v2778 = vld [vmem:[#allocation6 + $0x7c] sm:$0xf]
  %v2779 = vld [vmem:[#allocation6 + $0x8c] sm:$0xf]
  %v2780 = vld [vmem:[#allocation6 + $0x9c] sm:$0xf]
  %v2781 = vunpack.c.l.bf16 %v2771
  %v2782 = vunpack.c.l.bf16 %v2772
  %v2783 = vunpack.c.l.bf16 %v2773
  %v2784 = vunpack.c.l.bf16 %v2774
  %v2785 = vunpack.c.l.bf16 %v2775
  %v2786 = vunpack.c.l.bf16 %v2776
  %v2787 = vunpack.c.l.bf16 %v2777
  %v2788 = vunpack.c.l.bf16 %v2778
  %v2789 = vunpack.c.l.bf16 %v2779
  %v2790 = vunpack.c.l.bf16 %v2780
  %v2791 = vld [vmem:[#allocation5 + $0x8] sm:$0xff]
  %v2792 = vld [vmem:[#allocation5 + $0x18] sm:$0xff]
  %v2793 = vld [vmem:[#allocation5 + $0x28] sm:$0xff]
  %v2794 = vld [vmem:[#allocation5 + $0x38] sm:$0xff]
  %v2795 = vld [vmem:[#allocation5 + $0x48] sm:$0xff]
  %v2796 = vld [vmem:[#allocation5 + $0x58] sm:$0xff]
  %v2797 = vld [vmem:[#allocation5 + $0x68] sm:$0xff]
  %v2798 = vld [vmem:[#allocation5 + $0x78] sm:$0xff]
  %v2799 = vld [vmem:[#allocation5 + $0x88] sm:$0xff]
  %v2800 = vld [vmem:[#allocation5 + $0x98] sm:$0xff]
  %v2801 = vmul.f32 %v2781, %v2791
  %v2802 = vmul.f32 %v2782, %v2792
  %v2803 = vmul.f32 %v2783, %v2793
  %v2804 = vmul.f32 %v2784, %v2794
  %v2805 = vmul.f32 %v2785, %v2795
  %v2806 = vmul.f32 %v2786, %v2796
  %v2807 = vmul.f32 %v2787, %v2797
  %v2808 = vmul.f32 %v2788, %v2798
  %v2809 = vmul.f32 %v2789, %v2799
  %v2810 = vmul.f32 %v2790, %v2800
  %v2811 = vadd.f32 %v2761, %v2801
  %v2812 = vadd.f32 %v2762, %v2802
  %v2813 = vadd.f32 %v2763, %v2803
  %v2814 = vadd.f32 %v2764, %v2804
  %v2815 = vadd.f32 %v2765, %v2805
  %v2816 = vadd.f32 %v2766, %v2806
  %v2817 = vadd.f32 %v2767, %v2807
  %v2818 = vadd.f32 %v2768, %v2808
  %v2819 = vadd.f32 %v2769, %v2809
  %v2820 = vadd.f32 %v2770, %v2810
  %v2821 = vpack.c.bf16 %v2811, %v2811
  %v2822 = vpack.c.bf16 %v2812, %v2812
  %v2823 = vpack.c.bf16 %v2813, %v2813
  %v2824 = vpack.c.bf16 %v2814, %v2814
  %v2825 = vpack.c.bf16 %v2815, %v2815
  %v2826 = vpack.c.bf16 %v2816, %v2816
  %v2827 = vpack.c.bf16 %v2817, %v2817
  %v2828 = vpack.c.bf16 %v2818, %v2818
  %v2829 = vpack.c.bf16 %v2819, %v2819
  %v2830 = vpack.c.bf16 %v2820, %v2820
  %2831 = vst [vmem:[#allocation8 + $0x4] sm:$0xf] %v2821
  %2832 = vst [vmem:[#allocation8 + $0xc] sm:$0xf] %v2822
  %2833 = vst [vmem:[#allocation8 + $0x14] sm:$0xf] %v2823
  %2834 = vst [vmem:[#allocation8 + $0x1c] sm:$0xf] %v2824
  %2835 = vst [vmem:[#allocation8 + $0x24] sm:$0xf] %v2825
  %2836 = vst [vmem:[#allocation8 + $0x2c] sm:$0xf] %v2826
  %2837 = vst [vmem:[#allocation8 + $0x34] sm:$0xf] %v2827
  %2838 = vst [vmem:[#allocation8 + $0x3c] sm:$0xf] %v2828
  %2839 = vst [vmem:[#allocation8 + $0x44] sm:$0xf] %v2829
  %2840 = vst [vmem:[#allocation8 + $0x4c] sm:$0xf] %v2830
  %v2841 = vld [vmem:[%s8] sm:$0xf]
  %v2842 = vld [vmem:[%s8 + $0x4] sm:$0xf]
  %v2843 = vld [vmem:[%s8 + $0x8] sm:$0xf]
  %v2844 = vld [vmem:[%s8 + $0xc] sm:$0xf]
  %v2845 = vld [vmem:[%s8 + $0x10] sm:$0xf]
  %v2846 = vld [vmem:[%s8 + $0x14] sm:$0xf]
  %v2847 = vld [vmem:[%s8 + $0x18] sm:$0xf]
  %v2848 = vld [vmem:[%s8 + $0x1c] sm:$0xf]
  %v2849 = vld [vmem:[%s8 + $0x20] sm:$0xf]
  %v2850 = vld [vmem:[%s8 + $0x24] sm:$0xf]
  %v2851 = vld [vmem:[#allocation8] sm:$0xff]
  %v2852 = vld [vmem:[#allocation8 + $0x8] sm:$0xff]
  %v2853 = vld [vmem:[#allocation8 + $0x10] sm:$0xff]
  %v2854 = vld [vmem:[#allocation8 + $0x18] sm:$0xff]
  %v2855 = vld [vmem:[#allocation8 + $0x20] sm:$0xff]
  %v2856 = vld [vmem:[#allocation8 + $0x28] sm:$0xff]
  %v2857 = vld [vmem:[#allocation8 + $0x30] sm:$0xff]
  %v2858 = vld [vmem:[#allocation8 + $0x38] sm:$0xff]
  %v2859 = vld [vmem:[#allocation8 + $0x40] sm:$0xff]
  %v2860 = vld [vmem:[#allocation8 + $0x48] sm:$0xff]
  %v2861 = vld [vmem:[%s9] sm:$0xff]
  %v2862 = vld [vmem:[%s9 + $0x8] sm:$0xff]
  %v2863 = vld [vmem:[%s9 + $0x10] sm:$0xff]
  %v2864 = vld [vmem:[%s9 + $0x18] sm:$0xff]
  %v2865 = vld [vmem:[%s9 + $0x20] sm:$0xff]
  %v2866 = vld [vmem:[%s9 + $0x28] sm:$0xff]
  %v2867 = vld [vmem:[%s9 + $0x30] sm:$0xff]
  %v2868 = vld [vmem:[%s9 + $0x38] sm:$0xff]
  %v2869 = vld [vmem:[%s9 + $0x40] sm:$0xff]
  %v2870 = vld [vmem:[%s9 + $0x48] sm:$0xff]
  %2872 = vset.pattern.permute.xlu0 0
  %2873 = vperm.xlu0 %2872, %v2861
  %v2874 = vpop.permute.xlu0 %2873
  %2877 = vset.pattern.permute.xlu0 0
  %2878 = vperm.xlu0 %2877, %v2862
  %v2879 = vpop.permute.xlu0 %2878
  %2882 = vset.pattern.permute.xlu0 0
  %2883 = vperm.xlu0 %2882, %v2863
  %v2884 = vpop.permute.xlu0 %2883
  %2887 = vset.pattern.permute.xlu0 0
  %2888 = vperm.xlu0 %2887, %v2864
  %v2889 = vpop.permute.xlu0 %2888
  %2892 = vset.pattern.permute.xlu0 0
  %2893 = vperm.xlu0 %2892, %v2865
  %v2894 = vpop.permute.xlu0 %2893
  %2897 = vset.pattern.permute.xlu0 0
  %2898 = vperm.xlu0 %2897, %v2866
  %v2899 = vpop.permute.xlu0 %2898
  %2902 = vset.pattern.permute.xlu0 0
  %2903 = vperm.xlu0 %2902, %v2867
  %v2904 = vpop.permute.xlu0 %2903
  %2907 = vset.pattern.permute.xlu0 0
  %2908 = vperm.xlu0 %2907, %v2868
  %v2909 = vpop.permute.xlu0 %2908
  %2912 = vset.pattern.permute.xlu0 0
  %2913 = vperm.xlu0 %2912, %v2869
  %v2914 = vpop.permute.xlu0 %2913
  %2917 = vset.pattern.permute.xlu0 0
  %2918 = vperm.xlu0 %2917, %v2870
  %v2919 = vpop.permute.xlu0 %2918
  %v2931 = vunpack.c.l.b16 %v2841
  %v2932 = vunpack.c.l.b16 %v2842
  %v2933 = vunpack.c.l.b16 %v2843
  %v2934 = vunpack.c.l.b16 %v2844
  %v2935 = vunpack.c.l.b16 %v2845
  %v2936 = vunpack.c.l.b16 %v2846
  %v2937 = vunpack.c.l.b16 %v2847
  %v2938 = vunpack.c.l.b16 %v2848
  %v2939 = vunpack.c.l.b16 %v2849
  %v2940 = vunpack.c.l.b16 %v2850
  %v2941 = vpack.c.b16 %v2932, %v2931
  %v2942 = vpack.c.b16 %v2934, %v2933
  %v2943 = vpack.c.b16 %v2936, %v2935
  %v2944 = vpack.c.b16 %v2938, %v2937
  %v2945 = vpack.c.b16 %v2940, %v2939
  %v2956 = vunpack.c.l.b16 %v2851
  %v2957 = vunpack.c.h.b16 %v2851
  %v2958 = vunpack.c.l.b16 %v2852
  %v2959 = vunpack.c.h.b16 %v2852
  %v2960 = vunpack.c.l.b16 %v2853
  %v2961 = vunpack.c.h.b16 %v2853
  %v2962 = vunpack.c.l.b16 %v2854
  %v2963 = vunpack.c.h.b16 %v2854
  %v2964 = vunpack.c.l.b16 %v2855
  %v2965 = vunpack.c.h.b16 %v2855
  %v2966 = vunpack.c.l.b16 %v2856
  %v2967 = vunpack.c.h.b16 %v2856
  %v2968 = vunpack.c.l.b16 %v2857
  %v2969 = vunpack.c.h.b16 %v2857
  %v2970 = vunpack.c.l.b16 %v2858
  %v2971 = vunpack.c.h.b16 %v2858
  %v2972 = vunpack.c.l.b16 %v2859
  %v2973 = vunpack.c.h.b16 %v2859
  %v2974 = vunpack.c.l.b16 %v2860
  %v2975 = vunpack.c.h.b16 %v2860
  %v2976 = vpack.c.b16 %v2958, %v2956
  %v2977 = vpack.c.b16 %v2959, %v2957
  %v2978 = vpack.c.b16 %v2962, %v2960
  %v2979 = vpack.c.b16 %v2963, %v2961
  %v2980 = vpack.c.b16 %v2966, %v2964
  %v2981 = vpack.c.b16 %v2967, %v2965
  %v2982 = vpack.c.b16 %v2970, %v2968
  %v2983 = vpack.c.b16 %v2971, %v2969
  %v2984 = vpack.c.b16 %v2974, %v2972
  %v2985 = vpack.c.b16 %v2975, %v2973
  %v2997 = vsel %vm1879, %v2941, 0
  %v3000 = vsel %vm1879, %v2942, 0
  %v3003 = vsel %vm1879, %v2943, 0
  %v3006 = vsel %vm1879, %v2944, 0
  %v3009 = vsel %vm1879, %v2945, 0
  %3011 = vmatpush.bf16.msra.mxu0 0
  %3012 = vmatpush.bf16.msra.mxu0 0
  %3013 = vmatpush.bf16.msra.mxu0 0
  %3014 = vmatpush.bf16.msra.mxu0 %v2984
  %3015 = vmatpush.bf16.msra.mxu0 %v2982
  %3016 = vmatpush.bf16.msra.mxu0 %v2980
  %3017 = vmatpush.bf16.msra.mxu0 %v2978
  %3018 = vmatpush.bf16.msra.mxu0 %v2976
  %3019 = vmatmul.bf16.gmra.mxu0 %v2997
  %v3020 = vpop.f32.mrf.mxu0
  %v3021 = vadd.f32 %v2874, %v3020
  %v3022 = vpop.f32.mrf.mxu0
  %v3023 = vadd.f32 %v2879, %v3022
  %3024 = vmatmul.bf16.gmra.mxu0 %v3000
  %v3025 = vpop.f32.mrf.mxu0
  %v3026 = vadd.f32 %v2884, %v3025
  %v3027 = vpop.f32.mrf.mxu0
  %v3028 = vadd.f32 %v2889, %v3027
  %3029 = vmatmul.bf16.gmra.mxu0 %v3003
  %v3030 = vpop.f32.mrf.mxu0
  %v3031 = vadd.f32 %v2894, %v3030
  %v3032 = vpop.f32.mrf.mxu0
  %v3033 = vadd.f32 %v2899, %v3032
  %3034 = vmatmul.bf16.gmra.mxu0 %v3006
  %v3035 = vpop.f32.mrf.mxu0
  %v3036 = vadd.f32 %v2904, %v3035
  %v3037 = vpop.f32.mrf.mxu0
  %v3038 = vadd.f32 %v2909, %v3037
  %3039 = vmatmul.bf16.gmra.mxu0 %v3009
  %v3040 = vpop.f32.mrf.mxu0
  %v3041 = vadd.f32 %v2914, %v3040
  %v3042 = vpop.f32.mrf.mxu0
  %v3043 = vadd.f32 %v2919, %v3042
  %3044 = vdwg.mxu0
  %3045 = vmatpush.bf16.msra.mxu0 0
  %3046 = vmatpush.bf16.msra.mxu0 0
  %3047 = vmatpush.bf16.msra.mxu0 0
  %3048 = vmatpush.bf16.msra.mxu0 %v2985
  %3049 = vmatpush.bf16.msra.mxu0 %v2983
  %3050 = vmatpush.bf16.msra.mxu0 %v2981
  %3051 = vmatpush.bf16.msra.mxu0 %v2979
  %3052 = vmatpush.bf16.msra.mxu0 %v2977
  %3053 = vmatmul.bf16.gmra.mxu0 %v2997
  %v3054 = vpop.f32.mrf.mxu0
  %v3055 = vadd.f32 %v2874, %v3054
  %v3056 = vpop.f32.mrf.mxu0
  %v3057 = vadd.f32 %v2879, %v3056
  %3058 = vmatmul.bf16.gmra.mxu0 %v3000
  %v3059 = vpop.f32.mrf.mxu0
  %v3060 = vadd.f32 %v2884, %v3059
  %v3061 = vpop.f32.mrf.mxu0
  %v3062 = vadd.f32 %v2889, %v3061
  %3063 = vmatmul.bf16.gmra.mxu0 %v3003
  %v3064 = vpop.f32.mrf.mxu0
  %v3065 = vadd.f32 %v2894, %v3064
  %v3066 = vpop.f32.mrf.mxu0
  %v3067 = vadd.f32 %v2899, %v3066
  %3068 = vmatmul.bf16.gmra.mxu0 %v3006
  %v3069 = vpop.f32.mrf.mxu0
  %v3070 = vadd.f32 %v2904, %v3069
  %v3071 = vpop.f32.mrf.mxu0
  %v3072 = vadd.f32 %v2909, %v3071
  %3073 = vmatmul.bf16.gmra.mxu0 %v3009
  %v3074 = vpop.f32.mrf.mxu0
  %v3075 = vadd.f32 %v2914, %v3074
  %v3076 = vpop.f32.mrf.mxu0
  %v3077 = vadd.f32 %v2919, %v3076
  %3078 = vdwg.mxu0
  %v3079 = vpack.c.bf16 %v3055, %v3021
  %v3080 = vpack.c.bf16 %v3057, %v3023
  %v3081 = vpack.c.bf16 %v3060, %v3026
  %v3082 = vpack.c.bf16 %v3062, %v3028
  %v3083 = vpack.c.bf16 %v3065, %v3031
  %v3084 = vpack.c.bf16 %v3067, %v3033
  %v3085 = vpack.c.bf16 %v3070, %v3036
  %v3086 = vpack.c.bf16 %v3072, %v3038
  %v3087 = vpack.c.bf16 %v3075, %v3041
  %v3088 = vpack.c.bf16 %v3077, %v3043
  %3089 = vst [vmem:[#allocation9] sm:$0xff] %v3079
  %3090 = vst [vmem:[#allocation9 + $0x8] sm:$0xff] %v3080
  %3091 = vst [vmem:[#allocation9 + $0x10] sm:$0xff] %v3081
  %3092 = vst [vmem:[#allocation9 + $0x18] sm:$0xff] %v3082
  %3093 = vst [vmem:[#allocation9 + $0x20] sm:$0xff] %v3083
  %3094 = vst [vmem:[#allocation9 + $0x28] sm:$0xff] %v3084
  %3095 = vst [vmem:[#allocation9 + $0x30] sm:$0xff] %v3085
  %3096 = vst [vmem:[#allocation9 + $0x38] sm:$0xff] %v3086
  %3097 = vst [vmem:[#allocation9 + $0x40] sm:$0xff] %v3087
  %3098 = vst [vmem:[#allocation9 + $0x48] sm:$0xff] %v3088
  %v3099 = vld [vmem:[%s10] sm:$0xf]
  %v3100 = vld [vmem:[%s10 + $0x4] sm:$0xf]
  %v3101 = vld [vmem:[%s10 + $0x8] sm:$0xf]
  %v3102 = vld [vmem:[%s10 + $0xc] sm:$0xf]
  %v3103 = vld [vmem:[%s10 + $0x10] sm:$0xf]
  %v3104 = vld [vmem:[%s10 + $0x14] sm:$0xf]
  %v3105 = vld [vmem:[%s10 + $0x18] sm:$0xf]
  %v3106 = vld [vmem:[%s10 + $0x1c] sm:$0xf]
  %v3107 = vld [vmem:[%s10 + $0x20] sm:$0xf]
  %v3108 = vld [vmem:[%s10 + $0x24] sm:$0xf]
  %v3109 = vld [vmem:[%s10 + $0x28] sm:$0xf]
  %v3110 = vld [vmem:[%s10 + $0x2c] sm:$0xf]
  %v3111 = vld [vmem:[%s10 + $0x30] sm:$0xf]
  %v3112 = vld [vmem:[%s10 + $0x34] sm:$0xf]
  %v3113 = vld [vmem:[%s10 + $0x38] sm:$0xf]
  %v3114 = vld [vmem:[%s10 + $0x3c] sm:$0xf]
  %v3115 = vld [vmem:[#allocation9] sm:$0xff]
  %v3116 = vld [vmem:[#allocation9 + $0x8] sm:$0xff]
  %v3117 = vld [vmem:[#allocation9 + $0x10] sm:$0xff]
  %v3118 = vld [vmem:[#allocation9 + $0x18] sm:$0xff]
  %v3119 = vld [vmem:[#allocation9 + $0x20] sm:$0xff]
  %v3120 = vld [vmem:[#allocation9 + $0x28] sm:$0xff]
  %v3121 = vld [vmem:[#allocation9 + $0x30] sm:$0xff]
  %v3122 = vld [vmem:[#allocation9 + $0x38] sm:$0xff]
  %v3123 = vld [vmem:[#allocation9 + $0x40] sm:$0xff]
  %v3124 = vld [vmem:[#allocation9 + $0x48] sm:$0xff]
  %v3125 = vld [vmem:[%s11] sm:$0xff]
  %v3126 = vld [vmem:[%s11 + $0x8] sm:$0xff]
  %v3127 = vld [vmem:[%s11 + $0x10] sm:$0xff]
  %v3128 = vld [vmem:[%s11 + $0x18] sm:$0xff]
  %v3129 = vld [vmem:[%s11 + $0x20] sm:$0xff]
  %v3130 = vld [vmem:[%s11 + $0x28] sm:$0xff]
  %v3131 = vld [vmem:[%s11 + $0x30] sm:$0xff]
  %v3132 = vld [vmem:[%s11 + $0x38] sm:$0xff]
  %v3133 = vld [vmem:[%s11 + $0x40] sm:$0xff]
  %v3134 = vld [vmem:[%s11 + $0x48] sm:$0xff]
  %v3135 = vld [vmem:[%s11 + $0x50] sm:$0xff]
  %v3136 = vld [vmem:[%s11 + $0x58] sm:$0xff]
  %v3137 = vld [vmem:[%s11 + $0x60] sm:$0xff]
  %v3138 = vld [vmem:[%s11 + $0x68] sm:$0xff]
  %v3139 = vld [vmem:[%s11 + $0x70] sm:$0xff]
  %v3140 = vld [vmem:[%s11 + $0x78] sm:$0xff]
  %3142 = vset.pattern.permute.xlu0 0
  %3143 = vperm.xlu0 %3142, %v3125
  %v3144 = vpop.permute.xlu0 %3143
  %3147 = vset.pattern.permute.xlu0 0
  %3148 = vperm.xlu0 %3147, %v3126
  %v3149 = vpop.permute.xlu0 %3148
  %3152 = vset.pattern.permute.xlu0 0
  %3153 = vperm.xlu0 %3152, %v3127
  %v3154 = vpop.permute.xlu0 %3153
  %3157 = vset.pattern.permute.xlu0 0
  %3158 = vperm.xlu0 %3157, %v3128
  %v3159 = vpop.permute.xlu0 %3158
  %3162 = vset.pattern.permute.xlu0 0
  %3163 = vperm.xlu0 %3162, %v3129
  %v3164 = vpop.permute.xlu0 %3163
  %3167 = vset.pattern.permute.xlu0 0
  %3168 = vperm.xlu0 %3167, %v3130
  %v3169 = vpop.permute.xlu0 %3168
  %3172 = vset.pattern.permute.xlu0 0
  %3173 = vperm.xlu0 %3172, %v3131
  %v3174 = vpop.permute.xlu0 %3173
  %3177 = vset.pattern.permute.xlu0 0
  %3178 = vperm.xlu0 %3177, %v3132
  %v3179 = vpop.permute.xlu0 %3178
  %3182 = vset.pattern.permute.xlu0 0
  %3183 = vperm.xlu0 %3182, %v3133
  %v3184 = vpop.permute.xlu0 %3183
  %3187 = vset.pattern.permute.xlu0 0
  %3188 = vperm.xlu0 %3187, %v3134
  %v3189 = vpop.permute.xlu0 %3188
  %3192 = vset.pattern.permute.xlu0 0
  %3193 = vperm.xlu0 %3192, %v3135
  %v3194 = vpop.permute.xlu0 %3193
  %3197 = vset.pattern.permute.xlu0 0
  %3198 = vperm.xlu0 %3197, %v3136
  %v3199 = vpop.permute.xlu0 %3198
  %3202 = vset.pattern.permute.xlu0 0
  %3203 = vperm.xlu0 %3202, %v3137
  %v3204 = vpop.permute.xlu0 %3203
  %3207 = vset.pattern.permute.xlu0 0
  %3208 = vperm.xlu0 %3207, %v3138
  %v3209 = vpop.permute.xlu0 %3208
  %3212 = vset.pattern.permute.xlu0 0
  %3213 = vperm.xlu0 %3212, %v3139
  %v3214 = vpop.permute.xlu0 %3213
  %3217 = vset.pattern.permute.xlu0 0
  %3218 = vperm.xlu0 %3217, %v3140
  %v3219 = vpop.permute.xlu0 %3218
  %v3237 = vunpack.c.l.b16 %v3099
  %v3238 = vunpack.c.l.b16 %v3100
  %v3239 = vunpack.c.l.b16 %v3101
  %v3240 = vunpack.c.l.b16 %v3102
  %v3241 = vunpack.c.l.b16 %v3103
  %v3242 = vunpack.c.l.b16 %v3104
  %v3243 = vunpack.c.l.b16 %v3105
  %v3244 = vunpack.c.l.b16 %v3106
  %v3245 = vunpack.c.l.b16 %v3107
  %v3246 = vunpack.c.l.b16 %v3108
  %v3247 = vunpack.c.l.b16 %v3109
  %v3248 = vunpack.c.l.b16 %v3110
  %v3249 = vunpack.c.l.b16 %v3111
  %v3250 = vunpack.c.l.b16 %v3112
  %v3251 = vunpack.c.l.b16 %v3113
  %v3252 = vunpack.c.l.b16 %v3114
  %v3253 = vpack.c.b16 %v3238, %v3237
  %v3254 = vpack.c.b16 %v3240, %v3239
  %v3255 = vpack.c.b16 %v3242, %v3241
  %v3256 = vpack.c.b16 %v3244, %v3243
  %v3257 = vpack.c.b16 %v3246, %v3245
  %v3258 = vpack.c.b16 %v3248, %v3247
  %v3259 = vpack.c.b16 %v3250, %v3249
  %v3260 = vpack.c.b16 %v3252, %v3251
  %v3271 = vunpack.c.l.b16 %v3115
  %v3272 = vunpack.c.h.b16 %v3115
  %v3273 = vunpack.c.l.b16 %v3116
  %v3274 = vunpack.c.h.b16 %v3116
  %v3275 = vunpack.c.l.b16 %v3117
  %v3276 = vunpack.c.h.b16 %v3117
  %v3277 = vunpack.c.l.b16 %v3118
  %v3278 = vunpack.c.h.b16 %v3118
  %v3279 = vunpack.c.l.b16 %v3119
  %v3280 = vunpack.c.h.b16 %v3119
  %v3281 = vunpack.c.l.b16 %v3120
  %v3282 = vunpack.c.h.b16 %v3120
  %v3283 = vunpack.c.l.b16 %v3121
  %v3284 = vunpack.c.h.b16 %v3121
  %v3285 = vunpack.c.l.b16 %v3122
  %v3286 = vunpack.c.h.b16 %v3122
  %v3287 = vunpack.c.l.b16 %v3123
  %v3288 = vunpack.c.h.b16 %v3123
  %v3289 = vunpack.c.l.b16 %v3124
  %v3290 = vunpack.c.h.b16 %v3124
  %v3291 = vpack.c.b16 %v3273, %v3271
  %v3292 = vpack.c.b16 %v3274, %v3272
  %v3293 = vpack.c.b16 %v3277, %v3275
  %v3294 = vpack.c.b16 %v3278, %v3276
  %v3295 = vpack.c.b16 %v3281, %v3279
  %v3296 = vpack.c.b16 %v3282, %v3280
  %v3297 = vpack.c.b16 %v3285, %v3283
  %v3298 = vpack.c.b16 %v3286, %v3284
  %v3299 = vpack.c.b16 %v3289, %v3287
  %v3300 = vpack.c.b16 %v3290, %v3288
  %v3312 = vsel %vm1879, %v3253, 0
  %v3315 = vsel %vm1879, %v3254, 0
  %v3318 = vsel %vm1879, %v3255, 0
  %v3321 = vsel %vm1879, %v3256, 0
  %v3324 = vsel %vm1879, %v3257, 0
  %v3327 = vsel %vm1879, %v3258, 0
  %v3330 = vsel %vm1879, %v3259, 0
  %v3333 = vsel %vm1879, %v3260, 0
  %3335 = vmatpush.bf16.msra.mxu0 0
  %3336 = vmatpush.bf16.msra.mxu0 0
  %3337 = vmatpush.bf16.msra.mxu0 0
  %3338 = vmatpush.bf16.msra.mxu0 %v3299
  %3339 = vmatpush.bf16.msra.mxu0 %v3297
  %3340 = vmatpush.bf16.msra.mxu0 %v3295
  %3341 = vmatpush.bf16.msra.mxu0 %v3293
  %3342 = vmatpush.bf16.msra.mxu0 %v3291
  %3343 = vmatmul.bf16.gmra.mxu0 %v3312
  %v3344 = vpop.f32.mrf.mxu0
  %v3345 = vadd.f32 %v3144, %v3344
  %v3346 = vpop.f32.mrf.mxu0
  %v3347 = vadd.f32 %v3149, %v3346
  %3348 = vmatmul.bf16.gmra.mxu0 %v3315
  %v3349 = vpop.f32.mrf.mxu0
  %v3350 = vadd.f32 %v3154, %v3349
  %v3351 = vpop.f32.mrf.mxu0
  %v3352 = vadd.f32 %v3159, %v3351
  %3353 = vmatmul.bf16.gmra.mxu0 %v3318
  %v3354 = vpop.f32.mrf.mxu0
  %v3355 = vadd.f32 %v3164, %v3354
  %v3356 = vpop.f32.mrf.mxu0
  %v3357 = vadd.f32 %v3169, %v3356
  %3358 = vmatmul.bf16.gmra.mxu0 %v3321
  %v3359 = vpop.f32.mrf.mxu0
  %v3360 = vadd.f32 %v3174, %v3359
  %v3361 = vpop.f32.mrf.mxu0
  %v3362 = vadd.f32 %v3179, %v3361
  %3363 = vmatmul.bf16.gmra.mxu0 %v3324
  %v3364 = vpop.f32.mrf.mxu0
  %v3365 = vadd.f32 %v3184, %v3364
  %v3366 = vpop.f32.mrf.mxu0
  %v3367 = vadd.f32 %v3189, %v3366
  %3368 = vmatmul.bf16.gmra.mxu0 %v3327
  %v3369 = vpop.f32.mrf.mxu0
  %v3370 = vadd.f32 %v3194, %v3369
  %v3371 = vpop.f32.mrf.mxu0
  %v3372 = vadd.f32 %v3199, %v3371
  %3373 = vmatmul.bf16.gmra.mxu0 %v3330
  %v3374 = vpop.f32.mrf.mxu0
  %v3375 = vadd.f32 %v3204, %v3374
  %v3376 = vpop.f32.mrf.mxu0
  %v3377 = vadd.f32 %v3209, %v3376
  %3378 = vmatmul.bf16.gmra.mxu0 %v3333
  %v3379 = vpop.f32.mrf.mxu0
  %v3380 = vadd.f32 %v3214, %v3379
  %v3381 = vpop.f32.mrf.mxu0
  %v3382 = vadd.f32 %v3219, %v3381
  %3383 = vdwg.mxu0
  %3384 = vmatpush.bf16.msra.mxu0 0
  %3385 = vmatpush.bf16.msra.mxu0 0
  %3386 = vmatpush.bf16.msra.mxu0 0
  %3387 = vmatpush.bf16.msra.mxu0 %v3300
  %3388 = vmatpush.bf16.msra.mxu0 %v3298
  %3389 = vmatpush.bf16.msra.mxu0 %v3296
  %3390 = vmatpush.bf16.msra.mxu0 %v3294
  %3391 = vmatpush.bf16.msra.mxu0 %v3292
  %3392 = vmatmul.bf16.gmra.mxu0 %v3312
  %v3393 = vpop.f32.mrf.mxu0
  %v3394 = vadd.f32 %v3144, %v3393
  %v3395 = vpop.f32.mrf.mxu0
  %v3396 = vadd.f32 %v3149, %v3395
  %3397 = vmatmul.bf16.gmra.mxu0 %v3315
  %v3398 = vpop.f32.mrf.mxu0
  %v3399 = vadd.f32 %v3154, %v3398
  %v3400 = vpop.f32.mrf.mxu0
  %v3401 = vadd.f32 %v3159, %v3400
  %3402 = vmatmul.bf16.gmra.mxu0 %v3318
  %v3403 = vpop.f32.mrf.mxu0
  %v3404 = vadd.f32 %v3164, %v3403
  %v3405 = vpop.f32.mrf.mxu0
  %v3406 = vadd.f32 %v3169, %v3405
  %3407 = vmatmul.bf16.gmra.mxu0 %v3321
  %v3408 = vpop.f32.mrf.mxu0
  %v3409 = vadd.f32 %v3174, %v3408
  %v3410 = vpop.f32.mrf.mxu0
  %v3411 = vadd.f32 %v3179, %v3410
  %3412 = vmatmul.bf16.gmra.mxu0 %v3324
  %v3413 = vpop.f32.mrf.mxu0
  %v3414 = vadd.f32 %v3184, %v3413
  %v3415 = vpop.f32.mrf.mxu0
  %v3416 = vadd.f32 %v3189, %v3415
  %3417 = vmatmul.bf16.gmra.mxu0 %v3327
  %v3418 = vpop.f32.mrf.mxu0
  %v3419 = vadd.f32 %v3194, %v3418
  %v3420 = vpop.f32.mrf.mxu0
  %v3421 = vadd.f32 %v3199, %v3420
  %3422 = vmatmul.bf16.gmra.mxu0 %v3330
  %v3423 = vpop.f32.mrf.mxu0
  %v3424 = vadd.f32 %v3204, %v3423
  %v3425 = vpop.f32.mrf.mxu0
  %v3426 = vadd.f32 %v3209, %v3425
  %3427 = vmatmul.bf16.gmra.mxu0 %v3333
  %v3428 = vpop.f32.mrf.mxu0
  %v3429 = vadd.f32 %v3214, %v3428
  %v3430 = vpop.f32.mrf.mxu0
  %v3431 = vadd.f32 %v3219, %v3430
  %3432 = vdwg.mxu0
  %v3433 = vpack.c.bf16 %v3394, %v3345
  %v3434 = vpack.c.bf16 %v3396, %v3347
  %v3435 = vpack.c.bf16 %v3399, %v3350
  %v3436 = vpack.c.bf16 %v3401, %v3352
  %v3437 = vpack.c.bf16 %v3404, %v3355
  %v3438 = vpack.c.bf16 %v3406, %v3357
  %v3439 = vpack.c.bf16 %v3409, %v3360
  %v3440 = vpack.c.bf16 %v3411, %v3362
  %v3441 = vpack.c.bf16 %v3414, %v3365
  %v3442 = vpack.c.bf16 %v3416, %v3367
  %v3443 = vpack.c.bf16 %v3419, %v3370
  %v3444 = vpack.c.bf16 %v3421, %v3372
  %v3445 = vpack.c.bf16 %v3424, %v3375
  %v3446 = vpack.c.bf16 %v3426, %v3377
  %v3447 = vpack.c.bf16 %v3429, %v3380
  %v3448 = vpack.c.bf16 %v3431, %v3382
  %3449 = vst [vmem:[#allocation10] sm:$0xff] %v3433
  %3450 = vst [vmem:[#allocation10 + $0x8] sm:$0xff] %v3434
  %3451 = vst [vmem:[#allocation10 + $0x10] sm:$0xff] %v3435
  %3452 = vst [vmem:[#allocation10 + $0x18] sm:$0xff] %v3436
  %3453 = vst [vmem:[#allocation10 + $0x20] sm:$0xff] %v3437
  %3454 = vst [vmem:[#allocation10 + $0x28] sm:$0xff] %v3438
  %3455 = vst [vmem:[#allocation10 + $0x30] sm:$0xff] %v3439
  %3456 = vst [vmem:[#allocation10 + $0x38] sm:$0xff] %v3440
  %3457 = vst [vmem:[#allocation10 + $0x40] sm:$0xff] %v3441
  %3458 = vst [vmem:[#allocation10 + $0x48] sm:$0xff] %v3442
  %3459 = vst [vmem:[#allocation10 + $0x50] sm:$0xff] %v3443
  %3460 = vst [vmem:[#allocation10 + $0x58] sm:$0xff] %v3444
  %3461 = vst [vmem:[#allocation10 + $0x60] sm:$0xff] %v3445
  %3462 = vst [vmem:[#allocation10 + $0x68] sm:$0xff] %v3446
  %3463 = vst [vmem:[#allocation10 + $0x70] sm:$0xff] %v3447
  %3464 = vst [vmem:[#allocation10 + $0x78] sm:$0xff] %v3448
  %v3465 = vld [vmem:[#allocation10] sm:$0xf]
  %v3466 = vld [vmem:[#allocation10 + $0x8] sm:$0xf]
  %v3467 = vld [vmem:[#allocation10 + $0x10] sm:$0xf]
  %v3468 = vld [vmem:[#allocation10 + $0x18] sm:$0xf]
  %v3469 = vld [vmem:[#allocation10 + $0x20] sm:$0xf]
  %v3470 = vld [vmem:[#allocation10 + $0x28] sm:$0xf]
  %v3471 = vld [vmem:[#allocation10 + $0x30] sm:$0xf]
  %v3472 = vld [vmem:[#allocation10 + $0x38] sm:$0xf]
  %v3473 = vld [vmem:[#allocation10 + $0x40] sm:$0xf]
  %v3474 = vld [vmem:[#allocation10 + $0x48] sm:$0xf]
  %v3475 = vld [vmem:[#allocation10 + $0x50] sm:$0xf]
  %v3476 = vld [vmem:[#allocation10 + $0x58] sm:$0xf]
  %v3477 = vld [vmem:[#allocation10 + $0x60] sm:$0xf]
  %v3478 = vld [vmem:[#allocation10 + $0x68] sm:$0xf]
  %v3479 = vld [vmem:[#allocation10 + $0x70] sm:$0xf]
  %v3480 = vld [vmem:[#allocation10 + $0x78] sm:$0xf]
  %v3481 = vld [vmem:[%s14] sm:$0xff]
  %v3482 = vld [vmem:[%s14 + $0x8] sm:$0xff]
  %v3483 = vld [vmem:[%s14 + $0x10] sm:$0xff]
  %v3484 = vld [vmem:[%s14 + $0x18] sm:$0xff]
  %v3485 = vld [vmem:[%s14 + $0x20] sm:$0xff]
  %v3486 = vld [vmem:[%s14 + $0x28] sm:$0xff]
  %v3487 = vld [vmem:[%s14 + $0x30] sm:$0xff]
  %v3488 = vld [vmem:[%s14 + $0x38] sm:$0xff]
  %v3489 = vld [vmem:[%s14 + $0x40] sm:$0xff]
  %v3490 = vld [vmem:[%s14 + $0x48] sm:$0xff]
  %v3491 = vld [vmem:[%s14 + $0x50] sm:$0xff]
  %v3492 = vld [vmem:[%s14 + $0x58] sm:$0xff]
  %v3493 = vld [vmem:[%s14 + $0x60] sm:$0xff]
  %v3494 = vld [vmem:[%s14 + $0x68] sm:$0xff]
  %v3495 = vld [vmem:[%s14 + $0x70] sm:$0xff]
  %v3496 = vld [vmem:[%s14 + $0x78] sm:$0xff]
  %v3513 = vunpack.c.l.b16 %v3465
  %v3514 = vunpack.c.l.b16 %v3466
  %v3515 = vunpack.c.l.b16 %v3467
  %v3516 = vunpack.c.l.b16 %v3468
  %v3517 = vunpack.c.l.b16 %v3469
  %v3518 = vunpack.c.l.b16 %v3470
  %v3519 = vunpack.c.l.b16 %v3471
  %v3520 = vunpack.c.l.b16 %v3472
  %v3521 = vunpack.c.l.b16 %v3473
  %v3522 = vunpack.c.l.b16 %v3474
  %v3523 = vunpack.c.l.b16 %v3475
  %v3524 = vunpack.c.l.b16 %v3476
  %v3525 = vunpack.c.l.b16 %v3477
  %v3526 = vunpack.c.l.b16 %v3478
  %v3527 = vunpack.c.l.b16 %v3479
  %v3528 = vunpack.c.l.b16 %v3480
  %v3529 = vpack.c.b16 %v3514, %v3513
  %v3530 = vpack.c.b16 %v3516, %v3515
  %v3531 = vpack.c.b16 %v3518, %v3517
  %v3532 = vpack.c.b16 %v3520, %v3519
  %v3533 = vpack.c.b16 %v3522, %v3521
  %v3534 = vpack.c.b16 %v3524, %v3523
  %v3535 = vpack.c.b16 %v3526, %v3525
  %v3536 = vpack.c.b16 %v3528, %v3527
  %v3561 = vunpack.c.l.b16 %v3481
  %v3562 = vunpack.c.h.b16 %v3481
  %v3563 = vunpack.c.l.b16 %v3482
  %v3564 = vunpack.c.h.b16 %v3482
  %v3565 = vunpack.c.l.b16 %v3483
  %v3566 = vunpack.c.h.b16 %v3483
  %v3567 = vunpack.c.l.b16 %v3484
  %v3568 = vunpack.c.h.b16 %v3484
  %v3569 = vunpack.c.l.b16 %v3485
  %v3570 = vunpack.c.h.b16 %v3485
  %v3571 = vunpack.c.l.b16 %v3486
  %v3572 = vunpack.c.h.b16 %v3486
  %v3573 = vunpack.c.l.b16 %v3487
  %v3574 = vunpack.c.h.b16 %v3487
  %v3575 = vunpack.c.l.b16 %v3488
  %v3576 = vunpack.c.h.b16 %v3488
  %v3577 = vunpack.c.l.b16 %v3489
  %v3578 = vunpack.c.h.b16 %v3489
  %v3579 = vunpack.c.l.b16 %v3490
  %v3580 = vunpack.c.h.b16 %v3490
  %v3581 = vunpack.c.l.b16 %v3491
  %v3582 = vunpack.c.h.b16 %v3491
  %v3583 = vunpack.c.l.b16 %v3492
  %v3584 = vunpack.c.h.b16 %v3492
  %v3585 = vunpack.c.l.b16 %v3493
  %v3586 = vunpack.c.h.b16 %v3493
  %v3587 = vunpack.c.l.b16 %v3494
  %v3588 = vunpack.c.h.b16 %v3494
  %v3589 = vunpack.c.l.b16 %v3495
  %v3590 = vunpack.c.h.b16 %v3495
  %v3591 = vunpack.c.l.b16 %v3496
  %v3592 = vunpack.c.h.b16 %v3496
  %v3593 = vpack.c.b16 %v3563, %v3561
  %v3594 = vpack.c.b16 %v3564, %v3562
  %v3595 = vpack.c.b16 %v3567, %v3565
  %v3596 = vpack.c.b16 %v3568, %v3566
  %v3597 = vpack.c.b16 %v3571, %v3569
  %v3598 = vpack.c.b16 %v3572, %v3570
  %v3599 = vpack.c.b16 %v3575, %v3573
  %v3600 = vpack.c.b16 %v3576, %v3574
  %v3601 = vpack.c.b16 %v3579, %v3577
  %v3602 = vpack.c.b16 %v3580, %v3578
  %v3603 = vpack.c.b16 %v3583, %v3581
  %v3604 = vpack.c.b16 %v3584, %v3582
  %v3605 = vpack.c.b16 %v3587, %v3585
  %v3606 = vpack.c.b16 %v3588, %v3586
  %v3607 = vpack.c.b16 %v3591, %v3589
  %v3608 = vpack.c.b16 %v3592, %v3590
  %3625 = vmatpush.bf16.msra.mxu0 %v3607
  %3626 = vmatpush.bf16.msra.mxu0 %v3605
  %3627 = vmatpush.bf16.msra.mxu0 %v3603
  %3628 = vmatpush.bf16.msra.mxu0 %v3601
  %3629 = vmatpush.bf16.msra.mxu0 %v3599
  %3630 = vmatpush.bf16.msra.mxu0 %v3597
  %3631 = vmatpush.bf16.msra.mxu0 %v3595
  %3632 = vmatpush.bf16.msra.mxu0 %v3593
  %3633 = vmatmul.bf16.gmra.mxu0 %v3529
  %v3634 = vpop.f32.mrf.mxu0
  %v3635 = vadd.f32 0.0, %v3634
  %v3636 = vpop.f32.mrf.mxu0
  %v3637 = vadd.f32 0.0, %v3636
  %3638 = vmatmul.bf16.gmra.mxu0 %v3530
  %v3639 = vpop.f32.mrf.mxu0
  %v3640 = vadd.f32 0.0, %v3639
  %v3641 = vpop.f32.mrf.mxu0
  %v3642 = vadd.f32 0.0, %v3641
  %3643 = vmatmul.bf16.gmra.mxu0 %v3531
  %v3644 = vpop.f32.mrf.mxu0
  %v3645 = vadd.f32 0.0, %v3644
  %v3646 = vpop.f32.mrf.mxu0
  %v3647 = vadd.f32 0.0, %v3646
  %3648 = vmatmul.bf16.gmra.mxu0 %v3532
  %v3649 = vpop.f32.mrf.mxu0
  %v3650 = vadd.f32 0.0, %v3649
  %v3651 = vpop.f32.mrf.mxu0
  %v3652 = vadd.f32 0.0, %v3651
  %3653 = vmatmul.bf16.gmra.mxu0 %v3533
  %v3654 = vpop.f32.mrf.mxu0
  %v3655 = vadd.f32 0.0, %v3654
  %v3656 = vpop.f32.mrf.mxu0
  %v3657 = vadd.f32 0.0, %v3656
  %3658 = vmatmul.bf16.gmra.mxu0 %v3534
  %v3659 = vpop.f32.mrf.mxu0
  %v3660 = vadd.f32 0.0, %v3659
  %v3661 = vpop.f32.mrf.mxu0
  %v3662 = vadd.f32 0.0, %v3661
  %3663 = vmatmul.bf16.gmra.mxu0 %v3535
  %v3664 = vpop.f32.mrf.mxu0
  %v3665 = vadd.f32 0.0, %v3664
  %v3666 = vpop.f32.mrf.mxu0
  %v3667 = vadd.f32 0.0, %v3666
  %3668 = vmatmul.bf16.gmra.mxu0 %v3536
  %v3669 = vpop.f32.mrf.mxu0
  %v3670 = vadd.f32 0.0, %v3669
  %v3671 = vpop.f32.mrf.mxu0
  %v3672 = vadd.f32 0.0, %v3671
  %3673 = vdwg.mxu0
  %3674 = vmatpush.bf16.msra.mxu0 %v3608
  %3675 = vmatpush.bf16.msra.mxu0 %v3606
  %3676 = vmatpush.bf16.msra.mxu0 %v3604
  %3677 = vmatpush.bf16.msra.mxu0 %v3602
  %3678 = vmatpush.bf16.msra.mxu0 %v3600
  %3679 = vmatpush.bf16.msra.mxu0 %v3598
  %3680 = vmatpush.bf16.msra.mxu0 %v3596
  %3681 = vmatpush.bf16.msra.mxu0 %v3594
  %3682 = vmatmul.bf16.gmra.mxu0 %v3529
  %v3683 = vpop.f32.mrf.mxu0
  %v3684 = vadd.f32 0.0, %v3683
  %v3685 = vpop.f32.mrf.mxu0
  %v3686 = vadd.f32 0.0, %v3685
  %3687 = vmatmul.bf16.gmra.mxu0 %v3530
  %v3688 = vpop.f32.mrf.mxu0
  %v3689 = vadd.f32 0.0, %v3688
  %v3690 = vpop.f32.mrf.mxu0
  %v3691 = vadd.f32 0.0, %v3690
  %3692 = vmatmul.bf16.gmra.mxu0 %v3531
  %v3693 = vpop.f32.mrf.mxu0
  %v3694 = vadd.f32 0.0, %v3693
  %v3695 = vpop.f32.mrf.mxu0
  %v3696 = vadd.f32 0.0, %v3695
  %3697 = vmatmul.bf16.gmra.mxu0 %v3532
  %v3698 = vpop.f32.mrf.mxu0
  %v3699 = vadd.f32 0.0, %v3698
  %v3700 = vpop.f32.mrf.mxu0
  %v3701 = vadd.f32 0.0, %v3700
  %3702 = vmatmul.bf16.gmra.mxu0 %v3533
  %v3703 = vpop.f32.mrf.mxu0
  %v3704 = vadd.f32 0.0, %v3703
  %v3705 = vpop.f32.mrf.mxu0
  %v3706 = vadd.f32 0.0, %v3705
  %3707 = vmatmul.bf16.gmra.mxu0 %v3534
  %v3708 = vpop.f32.mrf.mxu0
  %v3709 = vadd.f32 0.0, %v3708
  %v3710 = vpop.f32.mrf.mxu0
  %v3711 = vadd.f32 0.0, %v3710
  %3712 = vmatmul.bf16.gmra.mxu0 %v3535
  %v3713 = vpop.f32.mrf.mxu0
  %v3714 = vadd.f32 0.0, %v3713
  %v3715 = vpop.f32.mrf.mxu0
  %v3716 = vadd.f32 0.0, %v3715
  %3717 = vmatmul.bf16.gmra.mxu0 %v3536
  %v3718 = vpop.f32.mrf.mxu0
  %v3719 = vadd.f32 0.0, %v3718
  %v3720 = vpop.f32.mrf.mxu0
  %v3721 = vadd.f32 0.0, %v3720
  %3722 = vdwg.mxu0
  %3723 = vst [vmem:[%s16] sm:$0xff] %v3635
  %3724 = vst.msk [vmem:[%s16 + $0x8] sm:$0xff] %vm244, %v3684
  %3725 = vst [vmem:[%s16 + $0x10] sm:$0xff] %v3637
  %3726 = vst.msk [vmem:[%s16 + $0x18] sm:$0xff] %vm244, %v3686
  %3727 = vst [vmem:[%s16 + $0x20] sm:$0xff] %v3640
  %3728 = vst.msk [vmem:[%s16 + $0x28] sm:$0xff] %vm244, %v3689
  %3729 = vst [vmem:[%s16 + $0x30] sm:$0xff] %v3642
  %3730 = vst.msk [vmem:[%s16 + $0x38] sm:$0xff] %vm244, %v3691
  %3731 = vst [vmem:[%s16 + $0x40] sm:$0xff] %v3645
  %3732 = vst.msk [vmem:[%s16 + $0x48] sm:$0xff] %vm244, %v3694
  %3733 = vst [vmem:[%s16 + $0x50] sm:$0xff] %v3647
  %3734 = vst.msk [vmem:[%s16 + $0x58] sm:$0xff] %vm244, %v3696
  %3735 = vst [vmem:[%s16 + $0x60] sm:$0xff] %v3650
  %3736 = vst.msk [vmem:[%s16 + $0x68] sm:$0xff] %vm244, %v3699
  %3737 = vst [vmem:[%s16 + $0x70] sm:$0xff] %v3652
  %3738 = vst.msk [vmem:[%s16 + $0x78] sm:$0xff] %vm244, %v3701
  %3739 = vst [vmem:[%s16 + $0x80] sm:$0xff] %v3655
  %3740 = vst.msk [vmem:[%s16 + $0x88] sm:$0xff] %vm244, %v3704
  %3741 = vst [vmem:[%s16 + $0x90] sm:$0xff] %v3657
  %3742 = vst.msk [vmem:[%s16 + $0x98] sm:$0xff] %vm244, %v3706
  %3743 = vst [vmem:[%s16 + $0xa0] sm:$0xff] %v3660
  %3744 = vst.msk [vmem:[%s16 + $0xa8] sm:$0xff] %vm244, %v3709
  %3745 = vst [vmem:[%s16 + $0xb0] sm:$0xff] %v3662
  %3746 = vst.msk [vmem:[%s16 + $0xb8] sm:$0xff] %vm244, %v3711
  %3747 = vst [vmem:[%s16 + $0xc0] sm:$0xff] %v3665
  %3748 = vst.msk [vmem:[%s16 + $0xc8] sm:$0xff] %vm244, %v3714
  %3749 = vst [vmem:[%s16 + $0xd0] sm:$0xff] %v3667
  %3750 = vst.msk [vmem:[%s16 + $0xd8] sm:$0xff] %vm244, %v3716
  %3751 = vst [vmem:[%s16 + $0xe0] sm:$0xff] %v3670
  %3752 = vst.msk [vmem:[%s16 + $0xe8] sm:$0xff] %vm244, %v3719
  %3753 = vst [vmem:[%s16 + $0xf0] sm:$0xff] %v3672
  %3754 = vst.msk [vmem:[%s16 + $0xf8] sm:$0xff] %vm244, %v3721
  %v3755 = vld [vmem:[#allocation9] sm:$0xf]
  %v3756 = vld [vmem:[#allocation9 + $0x8] sm:$0xf]
  %v3757 = vld [vmem:[#allocation9 + $0x10] sm:$0xf]
  %v3758 = vld [vmem:[#allocation9 + $0x18] sm:$0xf]
  %v3759 = vld [vmem:[#allocation9 + $0x20] sm:$0xf]
  %v3760 = vld [vmem:[#allocation9 + $0x28] sm:$0xf]
  %v3761 = vld [vmem:[#allocation9 + $0x30] sm:$0xf]
  %v3762 = vld [vmem:[#allocation9 + $0x38] sm:$0xf]
  %v3763 = vld [vmem:[#allocation9 + $0x40] sm:$0xf]
  %v3764 = vld [vmem:[#allocation9 + $0x48] sm:$0xf]
  %v3765 = vld [vmem:[%s15] sm:$0xff]
  %v3766 = vld [vmem:[%s15 + $0x8] sm:$0xff]
  %v3767 = vld [vmem:[%s15 + $0x10] sm:$0xff]
  %v3768 = vld [vmem:[%s15 + $0x18] sm:$0xff]
  %v3769 = vld [vmem:[%s15 + $0x20] sm:$0xff]
  %v3770 = vld [vmem:[%s15 + $0x28] sm:$0xff]
  %v3771 = vld [vmem:[%s15 + $0x30] sm:$0xff]
  %v3772 = vld [vmem:[%s15 + $0x38] sm:$0xff]
  %v3773 = vld [vmem:[%s15 + $0x40] sm:$0xff]
  %v3774 = vld [vmem:[%s15 + $0x48] sm:$0xff]
  %v3775 = vld [vmem:[%s15 + $0x50] sm:$0xff]
  %v3776 = vld [vmem:[%s15 + $0x58] sm:$0xff]
  %v3777 = vld [vmem:[%s15 + $0x60] sm:$0xff]
  %v3778 = vld [vmem:[%s15 + $0x68] sm:$0xff]
  %v3779 = vld [vmem:[%s15 + $0x70] sm:$0xff]
  %v3780 = vld [vmem:[%s15 + $0x78] sm:$0xff]
  %v3791 = vunpack.c.l.b16 %v3755
  %v3792 = vunpack.c.l.b16 %v3756
  %v3793 = vunpack.c.l.b16 %v3757
  %v3794 = vunpack.c.l.b16 %v3758
  %v3795 = vunpack.c.l.b16 %v3759
  %v3796 = vunpack.c.l.b16 %v3760
  %v3797 = vunpack.c.l.b16 %v3761
  %v3798 = vunpack.c.l.b16 %v3762
  %v3799 = vunpack.c.l.b16 %v3763
  %v3800 = vunpack.c.l.b16 %v3764
  %v3801 = vpack.c.b16 %v3792, %v3791
  %v3802 = vpack.c.b16 %v3794, %v3793
  %v3803 = vpack.c.b16 %v3796, %v3795
  %v3804 = vpack.c.b16 %v3798, %v3797
  %v3805 = vpack.c.b16 %v3800, %v3799
  %v3827 = vunpack.c.l.b16 %v3765
  %v3828 = vunpack.c.h.b16 %v3765
  %v3829 = vunpack.c.l.b16 %v3766
  %v3830 = vunpack.c.h.b16 %v3766
  %v3831 = vunpack.c.l.b16 %v3767
  %v3832 = vunpack.c.h.b16 %v3767
  %v3833 = vunpack.c.l.b16 %v3768
  %v3834 = vunpack.c.h.b16 %v3768
  %v3835 = vunpack.c.l.b16 %v3769
  %v3836 = vunpack.c.h.b16 %v3769
  %v3837 = vunpack.c.l.b16 %v3770
  %v3838 = vunpack.c.h.b16 %v3770
  %v3839 = vunpack.c.l.b16 %v3771
  %v3840 = vunpack.c.h.b16 %v3771
  %v3841 = vunpack.c.l.b16 %v3772
  %v3842 = vunpack.c.h.b16 %v3772
  %v3843 = vunpack.c.l.b16 %v3773
  %v3844 = vunpack.c.h.b16 %v3773
  %v3845 = vunpack.c.l.b16 %v3774
  %v3846 = vunpack.c.h.b16 %v3774
  %v3847 = vunpack.c.l.b16 %v3775
  %v3848 = vunpack.c.h.b16 %v3775
  %v3849 = vunpack.c.l.b16 %v3776
  %v3850 = vunpack.c.h.b16 %v3776
  %v3851 = vunpack.c.l.b16 %v3777
  %v3852 = vunpack.c.h.b16 %v3777
  %v3853 = vunpack.c.l.b16 %v3778
  %v3854 = vunpack.c.h.b16 %v3778
  %v3855 = vunpack.c.l.b16 %v3779
  %v3856 = vunpack.c.h.b16 %v3779
  %v3857 = vunpack.c.l.b16 %v3780
  %v3858 = vunpack.c.h.b16 %v3780
  %v3859 = vpack.c.b16 %v3829, %v3827
  %v3860 = vpack.c.b16 %v3830, %v3828
  %v3861 = vpack.c.b16 %v3833, %v3831
  %v3862 = vpack.c.b16 %v3834, %v3832
  %v3863 = vpack.c.b16 %v3837, %v3835
  %v3864 = vpack.c.b16 %v3838, %v3836
  %v3865 = vpack.c.b16 %v3841, %v3839
  %v3866 = vpack.c.b16 %v3842, %v3840
  %v3867 = vpack.c.b16 %v3845, %v3843
  %v3868 = vpack.c.b16 %v3846, %v3844
  %v3869 = vpack.c.b16 %v3849, %v3847
  %v3870 = vpack.c.b16 %v3850, %v3848
  %v3871 = vpack.c.b16 %v3853, %v3851
  %v3872 = vpack.c.b16 %v3854, %v3852
  %v3873 = vpack.c.b16 %v3857, %v3855
  %v3874 = vpack.c.b16 %v3858, %v3856
  %3891 = vmatpush.bf16.msra.mxu0 %v3873
  %3892 = vmatpush.bf16.msra.mxu0 %v3871
  %3893 = vmatpush.bf16.msra.mxu0 %v3869
  %3894 = vmatpush.bf16.msra.mxu0 %v3867
  %3895 = vmatpush.bf16.msra.mxu0 %v3865
  %3896 = vmatpush.bf16.msra.mxu0 %v3863
  %3897 = vmatpush.bf16.msra.mxu0 %v3861
  %3898 = vmatpush.bf16.msra.mxu0 %v3859
  %3899 = vmatmul.bf16.gmra.mxu0 %v3801
  %v3900 = vpop.f32.mrf.mxu0
  %v3901 = vadd.f32 0.0, %v3900
  %v3902 = vpop.f32.mrf.mxu0
  %v3903 = vadd.f32 0.0, %v3902
  %3904 = vmatmul.bf16.gmra.mxu0 %v3802
  %v3905 = vpop.f32.mrf.mxu0
  %v3906 = vadd.f32 0.0, %v3905
  %v3907 = vpop.f32.mrf.mxu0
  %v3908 = vadd.f32 0.0, %v3907
  %3909 = vmatmul.bf16.gmra.mxu0 %v3803
  %v3910 = vpop.f32.mrf.mxu0
  %v3911 = vadd.f32 0.0, %v3910
  %v3912 = vpop.f32.mrf.mxu0
  %v3913 = vadd.f32 0.0, %v3912
  %3914 = vmatmul.bf16.gmra.mxu0 %v3804
  %v3915 = vpop.f32.mrf.mxu0
  %v3916 = vadd.f32 0.0, %v3915
  %v3917 = vpop.f32.mrf.mxu0
  %v3918 = vadd.f32 0.0, %v3917
  %3919 = vmatmul.bf16.gmra.mxu0 %v3805
  %v3920 = vpop.f32.mrf.mxu0
  %v3921 = vadd.f32 0.0, %v3920
  %v3922 = vpop.f32.mrf.mxu0
  %v3923 = vadd.f32 0.0, %v3922
  %3924 = vdwg.mxu0
  %3925 = vmatpush.bf16.msra.mxu0 %v3874
  %3926 = vmatpush.bf16.msra.mxu0 %v3872
  %3927 = vmatpush.bf16.msra.mxu0 %v3870
  %3928 = vmatpush.bf16.msra.mxu0 %v3868
  %3929 = vmatpush.bf16.msra.mxu0 %v3866
  %3930 = vmatpush.bf16.msra.mxu0 %v3864
  %3931 = vmatpush.bf16.msra.mxu0 %v3862
  %3932 = vmatpush.bf16.msra.mxu0 %v3860
  %3933 = vmatmul.bf16.gmra.mxu0 %v3801
  %v3934 = vpop.f32.mrf.mxu0
  %v3935 = vadd.f32 0.0, %v3934
  %v3936 = vpop.f32.mrf.mxu0
  %v3937 = vadd.f32 0.0, %v3936
  %3938 = vmatmul.bf16.gmra.mxu0 %v3802
  %v3939 = vpop.f32.mrf.mxu0
  %v3940 = vadd.f32 0.0, %v3939
  %v3941 = vpop.f32.mrf.mxu0
  %v3942 = vadd.f32 0.0, %v3941
  %3943 = vmatmul.bf16.gmra.mxu0 %v3803
  %v3944 = vpop.f32.mrf.mxu0
  %v3945 = vadd.f32 0.0, %v3944
  %v3946 = vpop.f32.mrf.mxu0
  %v3947 = vadd.f32 0.0, %v3946
  %3948 = vmatmul.bf16.gmra.mxu0 %v3804
  %v3949 = vpop.f32.mrf.mxu0
  %v3950 = vadd.f32 0.0, %v3949
  %v3951 = vpop.f32.mrf.mxu0
  %v3952 = vadd.f32 0.0, %v3951
  %3953 = vmatmul.bf16.gmra.mxu0 %v3805
  %v3954 = vpop.f32.mrf.mxu0
  %v3955 = vadd.f32 0.0, %v3954
  %v3956 = vpop.f32.mrf.mxu0
  %v3957 = vadd.f32 0.0, %v3956
  %3958 = vdwg.mxu0
  %3959 = vst [vmem:[%s17] sm:$0xff] %v3901
  %3960 = vst.msk [vmem:[%s17 + $0x8] sm:$0xff] %vm244, %v3935
  %3961 = vst [vmem:[%s17 + $0x10] sm:$0xff] %v3903
  %3962 = vst.msk [vmem:[%s17 + $0x18] sm:$0xff] %vm244, %v3937
  %3963 = vst [vmem:[%s17 + $0x20] sm:$0xff] %v3906
  %3964 = vst.msk [vmem:[%s17 + $0x28] sm:$0xff] %vm244, %v3940
  %3965 = vst [vmem:[%s17 + $0x30] sm:$0xff] %v3908
  %3966 = vst.msk [vmem:[%s17 + $0x38] sm:$0xff] %vm244, %v3942
  %3967 = vst [vmem:[%s17 + $0x40] sm:$0xff] %v3911
  %3968 = vst.msk [vmem:[%s17 + $0x48] sm:$0xff] %vm244, %v3945
  %3969 = vst [vmem:[%s17 + $0x50] sm:$0xff] %v3913
  %3970 = vst.msk [vmem:[%s17 + $0x58] sm:$0xff] %vm244, %v3947
  %3971 = vst [vmem:[%s17 + $0x60] sm:$0xff] %v3916
  %3972 = vst.msk [vmem:[%s17 + $0x68] sm:$0xff] %vm244, %v3950
  %3973 = vst [vmem:[%s17 + $0x70] sm:$0xff] %v3918
  %3974 = vst.msk [vmem:[%s17 + $0x78] sm:$0xff] %vm244, %v3952
  %3975 = vst [vmem:[%s17 + $0x80] sm:$0xff] %v3921
  %3976 = vst.msk [vmem:[%s17 + $0x88] sm:$0xff] %vm244, %v3955
  %3977 = vst [vmem:[%s17 + $0x90] sm:$0xff] %v3923
  %3978 = vst.msk [vmem:[%s17 + $0x98] sm:$0xff] %vm244, %v3957
  %v3979 = vld [vmem:[#allocation10 + $0x4] sm:$0xf]
  %v3980 = vld [vmem:[#allocation10 + $0xc] sm:$0xf]
  %v3981 = vld [vmem:[#allocation10 + $0x14] sm:$0xf]
  %v3982 = vld [vmem:[#allocation10 + $0x1c] sm:$0xf]
  %v3983 = vld [vmem:[#allocation10 + $0x24] sm:$0xf]
  %v3984 = vld [vmem:[#allocation10 + $0x2c] sm:$0xf]
  %v3985 = vld [vmem:[#allocation10 + $0x34] sm:$0xf]
  %v3986 = vld [vmem:[#allocation10 + $0x3c] sm:$0xf]
  %v3987 = vld [vmem:[#allocation10 + $0x44] sm:$0xf]
  %v3988 = vld [vmem:[#allocation10 + $0x4c] sm:$0xf]
  %v3989 = vld [vmem:[#allocation10 + $0x54] sm:$0xf]
  %v3990 = vld [vmem:[#allocation10 + $0x5c] sm:$0xf]
  %v3991 = vld [vmem:[#allocation10 + $0x64] sm:$0xf]
  %v3992 = vld [vmem:[#allocation10 + $0x6c] sm:$0xf]
  %v3993 = vld [vmem:[#allocation10 + $0x74] sm:$0xf]
  %v3994 = vld [vmem:[#allocation10 + $0x7c] sm:$0xf]
  %v3995 = vld [vmem:[%s14] sm:$0xff]
  %v3996 = vld [vmem:[%s14 + $0x8] sm:$0xff]
  %v3997 = vld [vmem:[%s14 + $0x10] sm:$0xff]
  %v3998 = vld [vmem:[%s14 + $0x18] sm:$0xff]
  %v3999 = vld [vmem:[%s14 + $0x20] sm:$0xff]
  %v4000 = vld [vmem:[%s14 + $0x28] sm:$0xff]
  %v4001 = vld [vmem:[%s14 + $0x30] sm:$0xff]
  %v4002 = vld [vmem:[%s14 + $0x38] sm:$0xff]
  %v4003 = vld [vmem:[%s14 + $0x40] sm:$0xff]
  %v4004 = vld [vmem:[%s14 + $0x48] sm:$0xff]
  %v4005 = vld [vmem:[%s14 + $0x50] sm:$0xff]
  %v4006 = vld [vmem:[%s14 + $0x58] sm:$0xff]
  %v4007 = vld [vmem:[%s14 + $0x60] sm:$0xff]
  %v4008 = vld [vmem:[%s14 + $0x68] sm:$0xff]
  %v4009 = vld [vmem:[%s14 + $0x70] sm:$0xff]
  %v4010 = vld [vmem:[%s14 + $0x78] sm:$0xff]
  %v4027 = vunpack.c.l.b16 %v3979
  %v4028 = vunpack.c.l.b16 %v3980
  %v4029 = vunpack.c.l.b16 %v3981
  %v4030 = vunpack.c.l.b16 %v3982
  %v4031 = vunpack.c.l.b16 %v3983
  %v4032 = vunpack.c.l.b16 %v3984
  %v4033 = vunpack.c.l.b16 %v3985
  %v4034 = vunpack.c.l.b16 %v3986
  %v4035 = vunpack.c.l.b16 %v3987
  %v4036 = vunpack.c.l.b16 %v3988
  %v4037 = vunpack.c.l.b16 %v3989
  %v4038 = vunpack.c.l.b16 %v3990
  %v4039 = vunpack.c.l.b16 %v3991
  %v4040 = vunpack.c.l.b16 %v3992
  %v4041 = vunpack.c.l.b16 %v3993
  %v4042 = vunpack.c.l.b16 %v3994
  %v4043 = vpack.c.b16 %v4028, %v4027
  %v4044 = vpack.c.b16 %v4030, %v4029
  %v4045 = vpack.c.b16 %v4032, %v4031
  %v4046 = vpack.c.b16 %v4034, %v4033
  %v4047 = vpack.c.b16 %v4036, %v4035
  %v4048 = vpack.c.b16 %v4038, %v4037
  %v4049 = vpack.c.b16 %v4040, %v4039
  %v4050 = vpack.c.b16 %v4042, %v4041
  %v4075 = vunpack.c.l.b16 %v3995
  %v4076 = vunpack.c.h.b16 %v3995
  %v4077 = vunpack.c.l.b16 %v3996
  %v4078 = vunpack.c.h.b16 %v3996
  %v4079 = vunpack.c.l.b16 %v3997
  %v4080 = vunpack.c.h.b16 %v3997
  %v4081 = vunpack.c.l.b16 %v3998
  %v4082 = vunpack.c.h.b16 %v3998
  %v4083 = vunpack.c.l.b16 %v3999
  %v4084 = vunpack.c.h.b16 %v3999
  %v4085 = vunpack.c.l.b16 %v4000
  %v4086 = vunpack.c.h.b16 %v4000
  %v4087 = vunpack.c.l.b16 %v4001
  %v4088 = vunpack.c.h.b16 %v4001
  %v4089 = vunpack.c.l.b16 %v4002
  %v4090 = vunpack.c.h.b16 %v4002
  %v4091 = vunpack.c.l.b16 %v4003
  %v4092 = vunpack.c.h.b16 %v4003
  %v4093 = vunpack.c.l.b16 %v4004
  %v4094 = vunpack.c.h.b16 %v4004
  %v4095 = vunpack.c.l.b16 %v4005
  %v4096 = vunpack.c.h.b16 %v4005
  %v4097 = vunpack.c.l.b16 %v4006
  %v4098 = vunpack.c.h.b16 %v4006
  %v4099 = vunpack.c.l.b16 %v4007
  %v4100 = vunpack.c.h.b16 %v4007
  %v4101 = vunpack.c.l.b16 %v4008
  %v4102 = vunpack.c.h.b16 %v4008
  %v4103 = vunpack.c.l.b16 %v4009
  %v4104 = vunpack.c.h.b16 %v4009
  %v4105 = vunpack.c.l.b16 %v4010
  %v4106 = vunpack.c.h.b16 %v4010
  %v4107 = vpack.c.b16 %v4077, %v4075
  %v4108 = vpack.c.b16 %v4078, %v4076
  %v4109 = vpack.c.b16 %v4081, %v4079
  %v4110 = vpack.c.b16 %v4082, %v4080
  %v4111 = vpack.c.b16 %v4085, %v4083
  %v4112 = vpack.c.b16 %v4086, %v4084
  %v4113 = vpack.c.b16 %v4089, %v4087
  %v4114 = vpack.c.b16 %v4090, %v4088
  %v4115 = vpack.c.b16 %v4093, %v4091
  %v4116 = vpack.c.b16 %v4094, %v4092
  %v4117 = vpack.c.b16 %v4097, %v4095
  %v4118 = vpack.c.b16 %v4098, %v4096
  %v4119 = vpack.c.b16 %v4101, %v4099
  %v4120 = vpack.c.b16 %v4102, %v4100
  %v4121 = vpack.c.b16 %v4105, %v4103
  %v4122 = vpack.c.b16 %v4106, %v4104
  %4139 = vmatpush.bf16.msra.mxu0 %v4121
  %4140 = vmatpush.bf16.msra.mxu0 %v4119
  %4141 = vmatpush.bf16.msra.mxu0 %v4117
  %4142 = vmatpush.bf16.msra.mxu0 %v4115
  %4143 = vmatpush.bf16.msra.mxu0 %v4113
  %4144 = vmatpush.bf16.msra.mxu0 %v4111
  %4145 = vmatpush.bf16.msra.mxu0 %v4109
  %4146 = vmatpush.bf16.msra.mxu0 %v4107
  %4147 = vmatmul.bf16.gmra.mxu0 %v4043
  %v4148 = vpop.f32.mrf.mxu0
  %v4149 = vadd.f32 0.0, %v4148
  %v4150 = vpop.f32.mrf.mxu0
  %v4151 = vadd.f32 0.0, %v4150
  %4152 = vmatmul.bf16.gmra.mxu0 %v4044
  %v4153 = vpop.f32.mrf.mxu0
  %v4154 = vadd.f32 0.0, %v4153
  %v4155 = vpop.f32.mrf.mxu0
  %v4156 = vadd.f32 0.0, %v4155
  %4157 = vmatmul.bf16.gmra.mxu0 %v4045
  %v4158 = vpop.f32.mrf.mxu0
  %v4159 = vadd.f32 0.0, %v4158
  %v4160 = vpop.f32.mrf.mxu0
  %v4161 = vadd.f32 0.0, %v4160
  %4162 = vmatmul.bf16.gmra.mxu0 %v4046
  %v4163 = vpop.f32.mrf.mxu0
  %v4164 = vadd.f32 0.0, %v4163
  %v4165 = vpop.f32.mrf.mxu0
  %v4166 = vadd.f32 0.0, %v4165
  %4167 = vmatmul.bf16.gmra.mxu0 %v4047
  %v4168 = vpop.f32.mrf.mxu0
  %v4169 = vadd.f32 0.0, %v4168
  %v4170 = vpop.f32.mrf.mxu0
  %v4171 = vadd.f32 0.0, %v4170
  %4172 = vmatmul.bf16.gmra.mxu0 %v4048
  %v4173 = vpop.f32.mrf.mxu0
  %v4174 = vadd.f32 0.0, %v4173
  %v4175 = vpop.f32.mrf.mxu0
  %v4176 = vadd.f32 0.0, %v4175
  %4177 = vmatmul.bf16.gmra.mxu0 %v4049
  %v4178 = vpop.f32.mrf.mxu0
  %v4179 = vadd.f32 0.0, %v4178
  %v4180 = vpop.f32.mrf.mxu0
  %v4181 = vadd.f32 0.0, %v4180
  %4182 = vmatmul.bf16.gmra.mxu0 %v4050
  %v4183 = vpop.f32.mrf.mxu0
  %v4184 = vadd.f32 0.0, %v4183
  %v4185 = vpop.f32.mrf.mxu0
  %v4186 = vadd.f32 0.0, %v4185
  %4187 = vdwg.mxu0
  %4188 = vmatpush.bf16.msra.mxu0 %v4122
  %4189 = vmatpush.bf16.msra.mxu0 %v4120
  %4190 = vmatpush.bf16.msra.mxu0 %v4118
  %4191 = vmatpush.bf16.msra.mxu0 %v4116
  %4192 = vmatpush.bf16.msra.mxu0 %v4114
  %4193 = vmatpush.bf16.msra.mxu0 %v4112
  %4194 = vmatpush.bf16.msra.mxu0 %v4110
  %4195 = vmatpush.bf16.msra.mxu0 %v4108
  %4196 = vmatmul.bf16.gmra.mxu0 %v4043
  %v4197 = vpop.f32.mrf.mxu0
  %v4198 = vadd.f32 0.0, %v4197
  %v4199 = vpop.f32.mrf.mxu0
  %v4200 = vadd.f32 0.0, %v4199
  %4201 = vmatmul.bf16.gmra.mxu0 %v4044
  %v4202 = vpop.f32.mrf.mxu0
  %v4203 = vadd.f32 0.0, %v4202
  %v4204 = vpop.f32.mrf.mxu0
  %v4205 = vadd.f32 0.0, %v4204
  %4206 = vmatmul.bf16.gmra.mxu0 %v4045
  %v4207 = vpop.f32.mrf.mxu0
  %v4208 = vadd.f32 0.0, %v4207
  %v4209 = vpop.f32.mrf.mxu0
  %v4210 = vadd.f32 0.0, %v4209
  %4211 = vmatmul.bf16.gmra.mxu0 %v4046
  %v4212 = vpop.f32.mrf.mxu0
  %v4213 = vadd.f32 0.0, %v4212
  %v4214 = vpop.f32.mrf.mxu0
  %v4215 = vadd.f32 0.0, %v4214
  %4216 = vmatmul.bf16.gmra.mxu0 %v4047
  %v4217 = vpop.f32.mrf.mxu0
  %v4218 = vadd.f32 0.0, %v4217
  %v4219 = vpop.f32.mrf.mxu0
  %v4220 = vadd.f32 0.0, %v4219
  %4221 = vmatmul.bf16.gmra.mxu0 %v4048
  %v4222 = vpop.f32.mrf.mxu0
  %v4223 = vadd.f32 0.0, %v4222
  %v4224 = vpop.f32.mrf.mxu0
  %v4225 = vadd.f32 0.0, %v4224
  %4226 = vmatmul.bf16.gmra.mxu0 %v4049
  %v4227 = vpop.f32.mrf.mxu0
  %v4228 = vadd.f32 0.0, %v4227
  %v4229 = vpop.f32.mrf.mxu0
  %v4230 = vadd.f32 0.0, %v4229
  %4231 = vmatmul.bf16.gmra.mxu0 %v4050
  %v4232 = vpop.f32.mrf.mxu0
  %v4233 = vadd.f32 0.0, %v4232
  %v4234 = vpop.f32.mrf.mxu0
  %v4235 = vadd.f32 0.0, %v4234
  %4236 = vdwg.mxu0
  %4237 = vst [vmem:[%s16 + $0x100] sm:$0xff] %v4149
  %4238 = vst.msk [vmem:[%s16 + $0x108] sm:$0xff] %vm244, %v4198
  %4239 = vst [vmem:[%s16 + $0x110] sm:$0xff] %v4151
  %4240 = vst.msk [vmem:[%s16 + $0x118] sm:$0xff] %vm244, %v4200
  %4241 = vst [vmem:[%s16 + $0x120] sm:$0xff] %v4154
  %4242 = vst.msk [vmem:[%s16 + $0x128] sm:$0xff] %vm244, %v4203
  %4243 = vst [vmem:[%s16 + $0x130] sm:$0xff] %v4156
  %4244 = vst.msk [vmem:[%s16 + $0x138] sm:$0xff] %vm244, %v4205
  %4245 = vst [vmem:[%s16 + $0x140] sm:$0xff] %v4159
  %4246 = vst.msk [vmem:[%s16 + $0x148] sm:$0xff] %vm244, %v4208
  %4247 = vst [vmem:[%s16 + $0x150] sm:$0xff] %v4161
  %4248 = vst.msk [vmem:[%s16 + $0x158] sm:$0xff] %vm244, %v4210
  %4249 = vst [vmem:[%s16 + $0x160] sm:$0xff] %v4164
  %4250 = vst.msk [vmem:[%s16 + $0x168] sm:$0xff] %vm244, %v4213
  %4251 = vst [vmem:[%s16 + $0x170] sm:$0xff] %v4166
  %4252 = vst.msk [vmem:[%s16 + $0x178] sm:$0xff] %vm244, %v4215
  %4253 = vst [vmem:[%s16 + $0x180] sm:$0xff] %v4169
  %4254 = vst.msk [vmem:[%s16 + $0x188] sm:$0xff] %vm244, %v4218
  %4255 = vst [vmem:[%s16 + $0x190] sm:$0xff] %v4171
  %4256 = vst.msk [vmem:[%s16 + $0x198] sm:$0xff] %vm244, %v4220
  %4257 = vst [vmem:[%s16 + $0x1a0] sm:$0xff] %v4174
  %4258 = vst.msk [vmem:[%s16 + $0x1a8] sm:$0xff] %vm244, %v4223
  %4259 = vst [vmem:[%s16 + $0x1b0] sm:$0xff] %v4176
  %4260 = vst.msk [vmem:[%s16 + $0x1b8] sm:$0xff] %vm244, %v4225
  %4261 = vst [vmem:[%s16 + $0x1c0] sm:$0xff] %v4179
  %4262 = vst.msk [vmem:[%s16 + $0x1c8] sm:$0xff] %vm244, %v4228
  %4263 = vst [vmem:[%s16 + $0x1d0] sm:$0xff] %v4181
  %4264 = vst.msk [vmem:[%s16 + $0x1d8] sm:$0xff] %vm244, %v4230
  %4265 = vst [vmem:[%s16 + $0x1e0] sm:$0xff] %v4184
  %4266 = vst.msk [vmem:[%s16 + $0x1e8] sm:$0xff] %vm244, %v4233
  %4267 = vst [vmem:[%s16 + $0x1f0] sm:$0xff] %v4186
  %4268 = vst.msk [vmem:[%s16 + $0x1f8] sm:$0xff] %vm244, %v4235
  %v4269 = vld [vmem:[#allocation9 + $0x4] sm:$0xf]
  %v4270 = vld [vmem:[#allocation9 + $0xc] sm:$0xf]
  %v4271 = vld [vmem:[#allocation9 + $0x14] sm:$0xf]
  %v4272 = vld [vmem:[#allocation9 + $0x1c] sm:$0xf]
  %v4273 = vld [vmem:[#allocation9 + $0x24] sm:$0xf]
  %v4274 = vld [vmem:[#allocation9 + $0x2c] sm:$0xf]
  %v4275 = vld [vmem:[#allocation9 + $0x34] sm:$0xf]
  %v4276 = vld [vmem:[#allocation9 + $0x3c] sm:$0xf]
  %v4277 = vld [vmem:[#allocation9 + $0x44] sm:$0xf]
  %v4278 = vld [vmem:[#allocation9 + $0x4c] sm:$0xf]
  %v4279 = vld [vmem:[%s15] sm:$0xff]
  %v4280 = vld [vmem:[%s15 + $0x8] sm:$0xff]
  %v4281 = vld [vmem:[%s15 + $0x10] sm:$0xff]
  %v4282 = vld [vmem:[%s15 + $0x18] sm:$0xff]
  %v4283 = vld [vmem:[%s15 + $0x20] sm:$0xff]
  %v4284 = vld [vmem:[%s15 + $0x28] sm:$0xff]
  %v4285 = vld [vmem:[%s15 + $0x30] sm:$0xff]
  %v4286 = vld [vmem:[%s15 + $0x38] sm:$0xff]
  %v4287 = vld [vmem:[%s15 + $0x40] sm:$0xff]
  %v4288 = vld [vmem:[%s15 + $0x48] sm:$0xff]
  %v4289 = vld [vmem:[%s15 + $0x50] sm:$0xff]
  %v4290 = vld [vmem:[%s15 + $0x58] sm:$0xff]
  %v4291 = vld [vmem:[%s15 + $0x60] sm:$0xff]
  %v4292 = vld [vmem:[%s15 + $0x68] sm:$0xff]
  %v4293 = vld [vmem:[%s15 + $0x70] sm:$0xff]
  %v4294 = vld [vmem:[%s15 + $0x78] sm:$0xff]
  %v4305 = vunpack.c.l.b16 %v4269
  %v4306 = vunpack.c.l.b16 %v4270
  %v4307 = vunpack.c.l.b16 %v4271
  %v4308 = vunpack.c.l.b16 %v4272
  %v4309 = vunpack.c.l.b16 %v4273
  %v4310 = vunpack.c.l.b16 %v4274
  %v4311 = vunpack.c.l.b16 %v4275
  %v4312 = vunpack.c.l.b16 %v4276
  %v4313 = vunpack.c.l.b16 %v4277
  %v4314 = vunpack.c.l.b16 %v4278
  %v4315 = vpack.c.b16 %v4306, %v4305
  %v4316 = vpack.c.b16 %v4308, %v4307
  %v4317 = vpack.c.b16 %v4310, %v4309
  %v4318 = vpack.c.b16 %v4312, %v4311
  %v4319 = vpack.c.b16 %v4314, %v4313
  %v4341 = vunpack.c.l.b16 %v4279
  %v4342 = vunpack.c.h.b16 %v4279
  %v4343 = vunpack.c.l.b16 %v4280
  %v4344 = vunpack.c.h.b16 %v4280
  %v4345 = vunpack.c.l.b16 %v4281
  %v4346 = vunpack.c.h.b16 %v4281
  %v4347 = vunpack.c.l.b16 %v4282
  %v4348 = vunpack.c.h.b16 %v4282
  %v4349 = vunpack.c.l.b16 %v4283
  %v4350 = vunpack.c.h.b16 %v4283
  %v4351 = vunpack.c.l.b16 %v4284
  %v4352 = vunpack.c.h.b16 %v4284
  %v4353 = vunpack.c.l.b16 %v4285
  %v4354 = vunpack.c.h.b16 %v4285
  %v4355 = vunpack.c.l.b16 %v4286
  %v4356 = vunpack.c.h.b16 %v4286
  %v4357 = vunpack.c.l.b16 %v4287
  %v4358 = vunpack.c.h.b16 %v4287
  %v4359 = vunpack.c.l.b16 %v4288
  %v4360 = vunpack.c.h.b16 %v4288
  %v4361 = vunpack.c.l.b16 %v4289
  %v4362 = vunpack.c.h.b16 %v4289
  %v4363 = vunpack.c.l.b16 %v4290
  %v4364 = vunpack.c.h.b16 %v4290
  %v4365 = vunpack.c.l.b16 %v4291
  %v4366 = vunpack.c.h.b16 %v4291
  %v4367 = vunpack.c.l.b16 %v4292
  %v4368 = vunpack.c.h.b16 %v4292
  %v4369 = vunpack.c.l.b16 %v4293
  %v4370 = vunpack.c.h.b16 %v4293
  %v4371 = vunpack.c.l.b16 %v4294
  %v4372 = vunpack.c.h.b16 %v4294
  %v4373 = vpack.c.b16 %v4343, %v4341
  %v4374 = vpack.c.b16 %v4344, %v4342
  %v4375 = vpack.c.b16 %v4347, %v4345
  %v4376 = vpack.c.b16 %v4348, %v4346
  %v4377 = vpack.c.b16 %v4351, %v4349
  %v4378 = vpack.c.b16 %v4352, %v4350
  %v4379 = vpack.c.b16 %v4355, %v4353
  %v4380 = vpack.c.b16 %v4356, %v4354
  %v4381 = vpack.c.b16 %v4359, %v4357
  %v4382 = vpack.c.b16 %v4360, %v4358
  %v4383 = vpack.c.b16 %v4363, %v4361
  %v4384 = vpack.c.b16 %v4364, %v4362
  %v4385 = vpack.c.b16 %v4367, %v4365
  %v4386 = vpack.c.b16 %v4368, %v4366
  %v4387 = vpack.c.b16 %v4371, %v4369
  %v4388 = vpack.c.b16 %v4372, %v4370
  %4405 = vmatpush.bf16.msra.mxu0 %v4387
  %4406 = vmatpush.bf16.msra.mxu0 %v4385
  %4407 = vmatpush.bf16.msra.mxu0 %v4383
  %4408 = vmatpush.bf16.msra.mxu0 %v4381
  %4409 = vmatpush.bf16.msra.mxu0 %v4379
  %4410 = vmatpush.bf16.msra.mxu0 %v4377
  %4411 = vmatpush.bf16.msra.mxu0 %v4375
  %4412 = vmatpush.bf16.msra.mxu0 %v4373
  %4413 = vmatmul.bf16.gmra.mxu0 %v4315
  %v4414 = vpop.f32.mrf.mxu0
  %v4415 = vadd.f32 0.0, %v4414
  %v4416 = vpop.f32.mrf.mxu0
  %v4417 = vadd.f32 0.0, %v4416
  %4418 = vmatmul.bf16.gmra.mxu0 %v4316
  %v4419 = vpop.f32.mrf.mxu0
  %v4420 = vadd.f32 0.0, %v4419
  %v4421 = vpop.f32.mrf.mxu0
  %v4422 = vadd.f32 0.0, %v4421
  %4423 = vmatmul.bf16.gmra.mxu0 %v4317
  %v4424 = vpop.f32.mrf.mxu0
  %v4425 = vadd.f32 0.0, %v4424
  %v4426 = vpop.f32.mrf.mxu0
  %v4427 = vadd.f32 0.0, %v4426
  %4428 = vmatmul.bf16.gmra.mxu0 %v4318
  %v4429 = vpop.f32.mrf.mxu0
  %v4430 = vadd.f32 0.0, %v4429
  %v4431 = vpop.f32.mrf.mxu0
  %v4432 = vadd.f32 0.0, %v4431
  %4433 = vmatmul.bf16.gmra.mxu0 %v4319
  %v4434 = vpop.f32.mrf.mxu0
  %v4435 = vadd.f32 0.0, %v4434
  %v4436 = vpop.f32.mrf.mxu0
  %v4437 = vadd.f32 0.0, %v4436
  %4438 = vdwg.mxu0
  %4439 = vmatpush.bf16.msra.mxu0 %v4388
  %4440 = vmatpush.bf16.msra.mxu0 %v4386
  %4441 = vmatpush.bf16.msra.mxu0 %v4384
  %4442 = vmatpush.bf16.msra.mxu0 %v4382
  %4443 = vmatpush.bf16.msra.mxu0 %v4380
  %4444 = vmatpush.bf16.msra.mxu0 %v4378
  %4445 = vmatpush.bf16.msra.mxu0 %v4376
  %4446 = vmatpush.bf16.msra.mxu0 %v4374
  %4447 = vmatmul.bf16.gmra.mxu0 %v4315
  %v4448 = vpop.f32.mrf.mxu0
  %v4449 = vadd.f32 0.0, %v4448
  %v4450 = vpop.f32.mrf.mxu0
  %v4451 = vadd.f32 0.0, %v4450
  %4452 = vmatmul.bf16.gmra.mxu0 %v4316
  %v4453 = vpop.f32.mrf.mxu0
  %v4454 = vadd.f32 0.0, %v4453
  %v4455 = vpop.f32.mrf.mxu0
  %v4456 = vadd.f32 0.0, %v4455
  %4457 = vmatmul.bf16.gmra.mxu0 %v4317
  %v4458 = vpop.f32.mrf.mxu0
  %v4459 = vadd.f32 0.0, %v4458
  %v4460 = vpop.f32.mrf.mxu0
  %v4461 = vadd.f32 0.0, %v4460
  %4462 = vmatmul.bf16.gmra.mxu0 %v4318
  %v4463 = vpop.f32.mrf.mxu0
  %v4464 = vadd.f32 0.0, %v4463
  %v4465 = vpop.f32.mrf.mxu0
  %v4466 = vadd.f32 0.0, %v4465
  %4467 = vmatmul.bf16.gmra.mxu0 %v4319
  %v4468 = vpop.f32.mrf.mxu0
  %v4469 = vadd.f32 0.0, %v4468
  %v4470 = vpop.f32.mrf.mxu0
  %v4471 = vadd.f32 0.0, %v4470
  %4472 = vdwg.mxu0
  %4473 = vst [vmem:[%s17 + $0xa0] sm:$0xff] %v4415
  %4474 = vst.msk [vmem:[%s17 + $0xa8] sm:$0xff] %vm244, %v4449
  %4475 = vst [vmem:[%s17 + $0xb0] sm:$0xff] %v4417
  %4476 = vst.msk [vmem:[%s17 + $0xb8] sm:$0xff] %vm244, %v4451
  %4477 = vst [vmem:[%s17 + $0xc0] sm:$0xff] %v4420
  %4478 = vst.msk [vmem:[%s17 + $0xc8] sm:$0xff] %vm244, %v4454
  %4479 = vst [vmem:[%s17 + $0xd0] sm:$0xff] %v4422
  %4480 = vst.msk [vmem:[%s17 + $0xd8] sm:$0xff] %vm244, %v4456
  %4481 = vst [vmem:[%s17 + $0xe0] sm:$0xff] %v4425
  %4482 = vst.msk [vmem:[%s17 + $0xe8] sm:$0xff] %vm244, %v4459
  %4483 = vst [vmem:[%s17 + $0xf0] sm:$0xff] %v4427
  %4484 = vst.msk [vmem:[%s17 + $0xf8] sm:$0xff] %vm244, %v4461
  %4485 = vst [vmem:[%s17 + $0x100] sm:$0xff] %v4430
  %4486 = vst.msk [vmem:[%s17 + $0x108] sm:$0xff] %vm244, %v4464
  %4487 = vst [vmem:[%s17 + $0x110] sm:$0xff] %v4432
  %4488 = vst.msk [vmem:[%s17 + $0x118] sm:$0xff] %vm244, %v4466
  %4489 = vst [vmem:[%s17 + $0x120] sm:$0xff] %v4435
  %4490 = vst.msk [vmem:[%s17 + $0x128] sm:$0xff] %vm244, %v4469
  %4491 = vst [vmem:[%s17 + $0x130] sm:$0xff] %v4437
  %4492 = vst.msk [vmem:[%s17 + $0x138] sm:$0xff] %vm244, %v4471
  // Predicated region
  $region66: #{forward.1} parent=0 // pred_check
    _
  $region67: #{forward.1} parent=0 // pred_check_branch
    %4494 = sbr.rel (0) target = $region69
  $region68: #{forward.1} parent=0 // pred_region
    _
  $region69: #{forward.1} parent=0 // pred_fallthru
    _
  // Predicated region
  $region70: #{forward.1} parent=0 // pred_check
    _
  $region71: #{forward.1} parent=0 // pred_check_branch
    %4496 = sbr.rel (0) target = $region73
  $region72: #{forward.1} parent=0 // pred_region
    _
  $region73: #{forward.1} parent=0 // pred_fallthru
    _
  // Predicated region
  $region74: #{forward.1} parent=0 // pred_check
    _
  $region75: #{forward.1} parent=0 // pred_check_branch
    %4498 = sbr.rel (0) target = $region77
  $region76: #{forward.1} parent=0 // pred_region
    _
  $region77: #{forward.1} parent=0 // pred_fallthru
    _
  // Predicated region
  $region78: #{forward.1} parent=0 // pred_check
    _
  $region79: #{forward.1} parent=0 // pred_check_branch
    %4500 = sbr.rel (0) target = $region81
  $region80: #{forward.1} parent=0 // pred_region
    _
  $region81: #{forward.1} parent=0 // pred_fallthru
    _

</llo_original>
